<compile_context>
chip_gen: v7x
topology: tpu7x:2x2x1
jax: 0.10.0
libtpu: 0.0.40
codegen_flags: <defaults>
</compile_context>

<pallas_src>
import functools

import jax
import jax.numpy as jnp
from jax import lax
from jax.experimental import pallas as pl
from jax.experimental.pallas import tpu as pltpu

# ----- small config consistent with the module's __init__ -----
VOCAB = 32    # config.vocab_size
EMB = 16      # config.embedding_dim
HID = 32      # config.hidden_dim
SEQ = 8       # config.max_seqLen
BATCH = 2
BPAD = 8      # batch padded to the sublane tile inside the kernel

# ----- static row offsets inside the single packed weight slab (488, 6H) -----
OFF_EWF = 0            # (V, 6H)   embedding @ W_ih0_fwd  (+ fused bias)
OFF_EWB = 32           # (V, 6H)   embedding @ W_ih0_bwd
OFF_WHH0 = 64          # (2H, 6H)  layer-0 block-diagonal recurrent weight
OFF_WIH1A = 128        # (2H, 6H)  layer-1 input weights, "same-step" half
OFF_WIH1B = 192        # (2H, 6H)  layer-1 input weights, "mirrored-step" half
OFF_WHH1 = 256         # (2H, 6H)  layer-1 block-diagonal recurrent weight
OFF_WG2H = 320         # (4H, H)   gru2hidden weight (cols 0..H-1)
OFF_WH2O = 448         # (H, 2)    hidden2out weight (cols 0..1)
OFF_BIAS = 480         # row 480: bih1 (6H) | 481: bhh0n (2H) | 482: bhh1n (2H)
                       # row 483: b_g2h (H) | 484: b_h2o (2)
PACK_ROWS = 488
PACK_COLS = 6 * HID    # 192


# -------------------------------------------------------------------------
# Kernel
# -------------------------------------------------------------------------
def _fused_step(h, gi, whh, bhh_n, H):
    """One fused (fwd+bwd) GRU step.  h, gi gate layout [r_f,r_b,z_f,z_b,n_f,n_b]."""
    gh = jnp.dot(h, whh, preferred_element_type=jnp.float32)        # (BP, 6H)
    rz = jax.nn.sigmoid(gi[:, :4 * H] + gh[:, :4 * H])              # one EUP slab
    r = rz[:, :2 * H]
    z = rz[:, 2 * H:]
    n = jnp.tanh(gi[:, 4 * H:] + r * (gh[:, 4 * H:] + bhh_n))
    return (1.0 - z) * n + z * h


def discriminator_kernel(tok_ref,                      # (T*BP, 1) int32, time-major
                         w_ref,                        # (PACK_ROWS, 6H) packed weights
                         out_ref,                      # (B, 2)
                         *, T, BP, B, H, V):
    # ---- fused embedding lookup + layer-0 input projections (one-hot matmul) ----
    tok = tok_ref[...]                                                     # (T*BP, 1)
    oh = (lax.broadcasted_iota(jnp.int32, (T * BP, V), 1) == tok).astype(jnp.float32)
    p_f = jnp.dot(oh, w_ref[OFF_EWF:OFF_EWF + V, :],
                  preferred_element_type=jnp.float32)                      # bias folded in
    p_b = jnp.dot(oh, w_ref[OFF_EWB:OFF_EWB + V, :],
                  preferred_element_type=jnp.float32)
    # fused step s: forward sees x[s], backward sees x[T-1-s]; aligned 8-row slices
    gi0 = [p_f[s * BP:(s + 1) * BP] + p_b[(T - 1 - s) * BP:(T - s) * BP]
           for s in range(T)]

    whh0 = w_ref[OFF_WHH0:OFF_WHH0 + 2 * H, :]
    bhh0n = w_ref[OFF_BIAS + 1:OFF_BIAS + 2, 0:2 * H]
    wih1a = w_ref[OFF_WIH1A:OFF_WIH1A + 2 * H, :]
    wih1b = w_ref[OFF_WIH1B:OFF_WIH1B + 2 * H, :]

    # ---- layer-0 recurrence (statically unrolled); layer-1 input projections are
    # issued per step right after the h update so the MXU fills the dead latency
    # of the serial dependent chain.
    h = jnp.zeros((BP, 2 * H), jnp.float32)
    qa, qb = [], []
    for s in range(T):
        h = _fused_step(h, gi0[s], whh0, bhh0n, H)
        qa.append(jnp.dot(h, wih1a, preferred_element_type=jnp.float32))
        qb.append(jnp.dot(h, wih1b, preferred_element_type=jnp.float32))
    h0 = h
    # TODO(synk): inter-layer GRU dropout (p=0.2) is identity in eval mode; not applied.

    # ---- layer-1 recurrence ----
    bih1 = w_ref[OFF_BIAS:OFF_BIAS + 1, :]
    gi1 = [qa[s] + qb[T - 1 - s] + bih1 for s in range(T)]
    whh1 = w_ref[OFF_WHH1:OFF_WHH1 + 2 * H, :]
    bhh1n = w_ref[OFF_BIAS + 2:OFF_BIAS + 3, 0:2 * H]

    h = jnp.zeros((BP, 2 * H), jnp.float32)
    for s in range(T):
        h = _fused_step(h, gi1[s], whh1, bhh1n, H)
    h1 = h

    # hidden.permute(1,0,2).view(B, 4H): order = [l0_fwd | l0_bwd | l1_fwd | l1_bwd]
    hidden_cat = jnp.concatenate([h0, h1], axis=-1)                        # (BP, 4H)

    g = jnp.tanh(jnp.dot(hidden_cat, w_ref[OFF_WG2H:OFF_WG2H + 4 * H, 0:H],
                         preferred_element_type=jnp.float32)
                 + w_ref[OFF_BIAS + 3:OFF_BIAS + 4, 0:H])                  # (BP, H)
    # TODO(synk): dropout_linear (p=0.2) is identity in eval mode; not applied.
    logits = (jnp.dot(g, w_ref[OFF_WH2O:OFF_WH2O + H, 0:2],
                      preferred_element_type=jnp.float32)
              + w_ref[OFF_BIAS + 4:OFF_BIAS + 5, 0:2])                     # (BP, 2)

    # 2-class softmax(dim=1) == sigmoid of the logit difference (exact, no lane reduce).
    p1 = jax.nn.sigmoid(logits[:, 1:2] - logits[:, 0:1])                   # (BP, 1)
    lane = lax.broadcasted_iota(jnp.int32, (BP, 2), 1)
    res = jnp.where(lane == 0, 1.0 - p1, p1)                               # (BP, 2)
    out_ref[...] = res[:B]


# -------------------------------------------------------------------------
# Host-side parameter construction and ONE-TIME weight repacking
# -------------------------------------------------------------------------
def init_params(key):
    ks = jax.random.split(key, 13)

    def u(k, shape, bound):
        return jax.random.uniform(k, shape, jnp.float32, -bound, bound)

    b_gru = 1.0 / float(jnp.sqrt(HID))
    return dict(
        embedding=jax.random.normal(ks[0], (VOCAB, EMB), jnp.float32),
        # PyTorch layout: W_ih (3H, in), W_hh (3H, H), gate order [r, z, n],
        # leading axis = direction (0 = fwd, 1 = bwd).
        w_ih0=u(ks[1], (2, 3 * HID, EMB), b_gru),
        w_hh0=u(ks[2], (2, 3 * HID, HID), b_gru),
        b_ih0=u(ks[3], (2, 3 * HID), b_gru),
        b_hh0=u(ks[4], (2, 3 * HID), b_gru),
        w_ih1=u(ks[5], (2, 3 * HID, 2 * HID), b_gru),
        w_hh1=u(ks[6], (2, 3 * HID, HID), b_gru),
        b_ih1=u(ks[7], (2, 3 * HID), b_gru),
        b_hh1=u(ks[8], (2, 3 * HID), b_gru),
        w_g2h=u(ks[9], (HID, 4 * HID), 1.0 / float(jnp.sqrt(4 * HID))),
        b_g2h=u(ks[10], (1, HID), 1.0 / float(jnp.sqrt(4 * HID))),
        w_h2o=u(ks[11], (2, HID), 1.0 / float(jnp.sqrt(HID))),
        b_h2o=u(ks[12], (1, 2), 1.0 / float(jnp.sqrt(HID))),
    )


def prepare_params(params):
    """One-time repack of PyTorch-layout weights into a single (488, 6H) f32 slab."""
    H = HID

    # Fused gate column order: [r_f, r_b, z_f, z_b, n_f, n_b].
    def wide_in(w_dir, d):
        wide = jnp.zeros((w_dir.shape[1], 6 * H), jnp.float32)
        for g in range(3):
            wide = wide.at[:, 2 * g * H + d * H: 2 * g * H + (d + 1) * H].set(
                w_dir[g * H:(g + 1) * H, :].T)
        return wide

    def blockdiag_hh(w_hh):
        blk = jnp.zeros((2 * H, 6 * H), jnp.float32)
        for d in range(2):
            for g in range(3):
                blk = blk.at[d * H:(d + 1) * H,
                             2 * g * H + d * H: 2 * g * H + (d + 1) * H].set(
                    w_hh[d, g * H:(g + 1) * H, :].T)
        return blk

    def fused_bias(b_ih, b_hh):
        parts = []
        for g in range(3):
            for d in range(2):
                b = b_ih[d, g * H:(g + 1) * H]
                if g < 2:                    # b_hh folded into r,z (pure additive)
                    b = b + b_hh[d, g * H:(g + 1) * H]
                parts.append(b)
        return jnp.concatenate(parts)[None, :]

    def hh_n_bias(b_hh):
        return jnp.concatenate([b_hh[0, 2 * H:], b_hh[1, 2 * H:]])[None, :]

    # Layer 0: fold the embedding table (and fused bias) into the input projection.
    emb = params["embedding"].astype(jnp.float32)
    bih0 = fused_bias(params["b_ih0"], params["b_hh0"])
    ewf = emb @ wide_in(params["w_ih0"][0], 0) + bih0          # (V, 6H)
    ewb = emb @ wide_in(params["w_ih0"][1], 1)                 # (V, 6H)
    whh0 = blockdiag_hh(params["w_hh0"])
    bhh0n = hh_n_bias(params["b_hh0"])

    # Layer 1: split so gi1[s] = outs0[s] @ A + outs0[T-1-s] @ Bm + bias
    # (outs0[s] = [h0f[s] | h0b[T-1-s]] in the fused ordering).
    wf1 = wide_in(params["w_ih1"][0], 0)
    wb1 = wide_in(params["w_ih1"][1], 1)
    wih1a = jnp.concatenate([wf1[:H], wb1[H:]], axis=0)
    wih1b = jnp.concatenate([wb1[:H], wf1[H:]], axis=0)
    bih1 = fused_bias(params["b_ih1"], params["b_hh1"])
    whh1 = blockdiag_hh(params["w_hh1"])
    bhh1n = hh_n_bias(params["b_hh1"])

    packed = jnp.zeros((PACK_ROWS, PACK_COLS), jnp.float32)

    def put(p, arr, row, col=0):
        return p.at[row:row + arr.shape[0], col:col + arr.shape[1]].set(arr)

    packed = put(packed, ewf, OFF_EWF)
    packed = put(packed, ewb, OFF_EWB)
    packed = put(packed, whh0, OFF_WHH0)
    packed = put(packed, wih1a, OFF_WIH1A)
    packed = put(packed, wih1b, OFF_WIH1B)
    packed = put(packed, whh1, OFF_WHH1)
    packed = put(packed, params["w_g2h"].T, OFF_WG2H)          # (4H, H)
    packed = put(packed, params["w_h2o"].T, OFF_WH2O)          # (H, 2)
    packed = put(packed, bih1, OFF_BIAS)
    packed = put(packed, bhh0n, OFF_BIAS + 1)
    packed = put(packed, bhh1n, OFF_BIAS + 2)
    packed = put(packed, params["b_g2h"], OFF_BIAS + 3)
    packed = put(packed, params["b_h2o"], OFF_BIAS + 4)
    return packed


def discriminator_forward(tokens, packed):
    """Per-call work: tiny token prep + one Pallas kernel launch."""
    B, T = tokens.shape
    tok = jnp.pad(tokens.astype(jnp.int32), ((0, BPAD - B), (0, 0)))   # (BPAD, T)
    tok_tm = jnp.transpose(tok).reshape(T * BPAD, 1)                    # time-major ids

    kernel = functools.partial(discriminator_kernel,
                               T=T, BP=BPAD, B=B, H=HID, V=VOCAB)
    vmem = pl.BlockSpec(memory_space=pltpu.MemorySpace.VMEM)

    flops = 2 * (2 * T * BPAD * VOCAB * 6 * HID            # one-hot projections
                 + 4 * T * BPAD * 2 * HID * 6 * HID         # gh + qa + qb + layer-1 gh
                 + BPAD * 4 * HID * HID + BPAD * HID * 2)   # head
    transc = 2 * T * BPAD * 6 * HID + BPAD * (HID + 1)
    bytes_acc = PACK_ROWS * PACK_COLS * 4 + T * BPAD * 4 + B * 2 * 4

    return pl.pallas_call(
        kernel,
        out_shape=jax.ShapeDtypeStruct((B, 2), jnp.float32),
        in_specs=[vmem, vmem],
        out_specs=vmem,
        cost_estimate=pl.CostEstimate(flops=flops, transcendentals=transc,
                                      bytes_accessed=bytes_acc),
    )(tok_tm, packed)


# -------------------------------------------------------------------------
# Pure-JAX reference (PyTorch GRU semantics) for a correctness check
# -------------------------------------------------------------------------
def _gru_cell_ref(x, h, w_ih, w_hh, b_ih, b_hh, H):
    gi = x @ w_ih.T + b_ih
    gh = h @ w_hh.T + b_hh
    r = jax.nn.sigmoid(gi[:, :H] + gh[:, :H])
    z = jax.nn.sigmoid(gi[:, H:2 * H] + gh[:, H:2 * H])
    n = jnp.tanh(gi[:, 2 * H:] + r * gh[:, 2 * H:])
    return (1.0 - z) * n + z * h


def discriminator_reference(tokens, params):
    H = HID
    emb = params["embedding"][tokens]
    x = jnp.transpose(emb, (1, 0, 2))                      # (T, B, E)
    T, B, _ = x.shape

    def run_dir(seq, w_ih, w_hh, b_ih, b_hh):
        h = jnp.zeros((B, H), jnp.float32)
        outs = []
        for t in range(seq.shape[0]):
            h = _gru_cell_ref(seq[t], h, w_ih, w_hh, b_ih, b_hh, H)
            outs.append(h)
        return h, jnp.stack(outs)

    h0f, o0f = run_dir(x, params["w_ih0"][0], params["w_hh0"][0],
                       params["b_ih0"][0], params["b_hh0"][0])
    h0b, o0b = run_dir(x[::-1], params["w_ih0"][1], params["w_hh0"][1],
                       params["b_ih0"][1], params["b_hh0"][1])
    x1 = jnp.concatenate([o0f, o0b[::-1]], axis=-1)        # (T, B, 2H)
    h1f, _ = run_dir(x1, params["w_ih1"][0], params["w_hh1"][0],
                     params["b_ih1"][0], params["b_hh1"][0])
    h1b, _ = run_dir(x1[::-1], params["w_ih1"][1], params["w_hh1"][1],
                     params["b_ih1"][1], params["b_hh1"][1])
    hidden = jnp.concatenate([h0f, h0b, h1f, h1b], axis=-1)
    g = jnp.tanh(hidden @ params["w_g2h"].T + params["b_g2h"])
    logits = g @ params["w_h2o"].T + params["b_h2o"]
    return jax.nn.softmax(logits, axis=-1)


if __name__ == "__main__":
    key = jax.random.PRNGKey(0)
    k_tok, k_par = jax.random.split(key)
    tokens = jax.random.randint(k_tok, (BATCH, SEQ), 0, VOCAB, dtype=jnp.int32)
    params = init_params(k_par)

    # One-time weight repack (cached across calls); per-call graph is just the kernel.
    packed = jax.block_until_ready(prepare_params(params))

    fwd = jax.jit(discriminator_forward)
    probs = jax.block_until_ready(fwd(tokens, packed))

    ref = jax.block_until_ready(discriminator_reference(tokens, params))

    assert probs.shape == (BATCH, 2)
    assert jnp.all(jnp.isfinite(probs))
    assert jnp.allclose(jnp.sum(probs, axis=-1), 1.0, atol=1e-5)
    assert jnp.allclose(probs, ref, atol=1e-4, rtol=1e-4)
    print("KERNEL_OK")
</pallas_src>

<mosaic_0001>
module attributes {stable_mosaic.version = 11 : i64} {
  func.func @discriminator_kernel(%arg0: memref<64x1xi32, #tpu.memory_space<vmem>>, %arg1: memref<488x192xf32, #tpu.memory_space<vmem>>, %arg2: memref<2x2xf32, #tpu.memory_space<vmem>>) attributes {dimension_semantics = [], scalar_prefetch = 0 : i64, scratch_operands = 0 : i64, tpu.core_type = #tpu.core_type<tc>} {
    %c0 = arith.constant 0 : index
    %c0_0 = arith.constant 0 : index
    %0 = vector.load %arg0[%c0, %c0_0] : memref<64x1xi32, #tpu.memory_space<vmem>>, vector<64x1xi32>
    %1 = tpu.iota {dimensions = array<i32: 1>} : vector<64x32xi32>
    %2 = vector.broadcast %0 : vector<64x1xi32> to vector<64x32xi32>
    %3 = arith.cmpi eq, %1, %2 : vector<64x32xi32>
    %4 = arith.extui %3 : vector<64x32xi1> to vector<64x32xi32>
    %5 = arith.sitofp %4 : vector<64x32xi32> to vector<64x32xf32>
    %c0_1 = arith.constant 0 : index
    %c0_2 = arith.constant 0 : index
    %6 = vector.load %arg1[%c0_1, %c0_2] : memref<488x192xf32, #tpu.memory_space<vmem>>, vector<32x192xf32>
    %cst = arith.constant dense<0.000000e+00> : vector<64x192xf32>
    %7 = tpu.matmul %5, %6, %cst {dimension_numbers = #tpu.dot_dimension_numbers<[1], [0], [0], [1], [0, 0, 1, 1], [], []>} : vector<64x32xf32>, vector<32x192xf32>, vector<64x192xf32> -> vector<64x192xf32>
    %c32 = arith.constant 32 : index
    %c0_3 = arith.constant 0 : index
    %8 = vector.load %arg1[%c32, %c0_3] : memref<488x192xf32, #tpu.memory_space<vmem>>, vector<32x192xf32>
    %cst_4 = arith.constant dense<0.000000e+00> : vector<64x192xf32>
    %9 = tpu.matmul %5, %8, %cst_4 {dimension_numbers = #tpu.dot_dimension_numbers<[1], [0], [0], [1], [0, 0, 1, 1], [], []>} : vector<64x32xf32>, vector<32x192xf32>, vector<64x192xf32> -> vector<64x192xf32>
    %10 = vector.extract_strided_slice %7 {offsets = [0, 0], sizes = [8, 192], strides = [1, 1]} : vector<64x192xf32> to vector<8x192xf32>
    %11 = vector.extract_strided_slice %9 {offsets = [56, 0], sizes = [8, 192], strides = [1, 1]} : vector<64x192xf32> to vector<8x192xf32>
    %12 = arith.addf %10, %11 : vector<8x192xf32>
    %13 = vector.extract_strided_slice %7 {offsets = [8, 0], sizes = [8, 192], strides = [1, 1]} : vector<64x192xf32> to vector<8x192xf32>
    %14 = vector.extract_strided_slice %9 {offsets = [48, 0], sizes = [8, 192], strides = [1, 1]} : vector<64x192xf32> to vector<8x192xf32>
    %15 = arith.addf %13, %14 : vector<8x192xf32>
    %16 = vector.extract_strided_slice %7 {offsets = [16, 0], sizes = [8, 192], strides = [1, 1]} : vector<64x192xf32> to vector<8x192xf32>
    %17 = vector.extract_strided_slice %9 {offsets = [40, 0], sizes = [8, 192], strides = [1, 1]} : vector<64x192xf32> to vector<8x192xf32>
    %18 = arith.addf %16, %17 : vector<8x192xf32>
    %19 = vector.extract_strided_slice %7 {offsets = [24, 0], sizes = [8, 192], strides = [1, 1]} : vector<64x192xf32> to vector<8x192xf32>
    %20 = vector.extract_strided_slice %9 {offsets = [32, 0], sizes = [8, 192], strides = [1, 1]} : vector<64x192xf32> to vector<8x192xf32>
    %21 = arith.addf %19, %20 : vector<8x192xf32>
    %22 = vector.extract_strided_slice %7 {offsets = [32, 0], sizes = [8, 192], strides = [1, 1]} : vector<64x192xf32> to vector<8x192xf32>
    %23 = vector.extract_strided_slice %9 {offsets = [24, 0], sizes = [8, 192], strides = [1, 1]} : vector<64x192xf32> to vector<8x192xf32>
    %24 = arith.addf %22, %23 : vector<8x192xf32>
    %25 = vector.extract_strided_slice %7 {offsets = [40, 0], sizes = [8, 192], strides = [1, 1]} : vector<64x192xf32> to vector<8x192xf32>
    %26 = vector.extract_strided_slice %9 {offsets = [16, 0], sizes = [8, 192], strides = [1, 1]} : vector<64x192xf32> to vector<8x192xf32>
    %27 = arith.addf %25, %26 : vector<8x192xf32>
    %28 = vector.extract_strided_slice %7 {offsets = [48, 0], sizes = [8, 192], strides = [1, 1]} : vector<64x192xf32> to vector<8x192xf32>
    %29 = vector.extract_strided_slice %9 {offsets = [8, 0], sizes = [8, 192], strides = [1, 1]} : vector<64x192xf32> to vector<8x192xf32>
    %30 = arith.addf %28, %29 : vector<8x192xf32>
    %31 = vector.extract_strided_slice %7 {offsets = [56, 0], sizes = [8, 192], strides = [1, 1]} : vector<64x192xf32> to vector<8x192xf32>
    %32 = vector.extract_strided_slice %9 {offsets = [0, 0], sizes = [8, 192], strides = [1, 1]} : vector<64x192xf32> to vector<8x192xf32>
    %33 = arith.addf %31, %32 : vector<8x192xf32>
    %c64 = arith.constant 64 : index
    %c0_5 = arith.constant 0 : index
    %34 = vector.load %arg1[%c64, %c0_5] : memref<488x192xf32, #tpu.memory_space<vmem>>, vector<64x192xf32>
    %c481 = arith.constant 481 : index
    %c0_6 = arith.constant 0 : index
    %35 = vector.load %arg1[%c481, %c0_6] : memref<488x192xf32, #tpu.memory_space<vmem>>, vector<1x64xf32>
    %c128 = arith.constant 128 : index
    %c0_7 = arith.constant 0 : index
    %36 = vector.load %arg1[%c128, %c0_7] : memref<488x192xf32, #tpu.memory_space<vmem>>, vector<64x192xf32>
    %c192 = arith.constant 192 : index
    %c0_8 = arith.constant 0 : index
    %37 = vector.load %arg1[%c192, %c0_8] : memref<488x192xf32, #tpu.memory_space<vmem>>, vector<64x192xf32>
    %cst_9 = arith.constant 0.000000e+00 : f32
    %38 = vector.broadcast %cst_9 : f32 to vector<8x64xf32>
    %cst_10 = arith.constant dense<0.000000e+00> : vector<8x192xf32>
    %39 = tpu.matmul %38, %34, %cst_10 {dimension_numbers = #tpu.dot_dimension_numbers<[1], [0], [0], [1], [0, 0, 1, 1], [], []>} : vector<8x64xf32>, vector<64x192xf32>, vector<8x192xf32> -> vector<8x192xf32>
    %40 = vector.extract_strided_slice %12 {offsets = [0, 0], sizes = [8, 128], strides = [1, 1]} : vector<8x192xf32> to vector<8x128xf32>
    %41 = vector.extract_strided_slice %39 {offsets = [0, 0], sizes = [8, 128], strides = [1, 1]} : vector<8x192xf32> to vector<8x128xf32>
    %42 = arith.addf %40, %41 : vector<8x128xf32>
    %43 = arith.negf %42 : vector<8x128xf32>
    %44 = math.exp %43 : vector<8x128xf32>
    %cst_11 = arith.constant 1.000000e+00 : f32
    %45 = vector.broadcast %cst_11 : f32 to vector<8x128xf32>
    %46 = arith.addf %45, %44 : vector<8x128xf32>
    %47 = arith.divf %45, %46 : vector<8x128xf32>
    %48 = vector.extract_strided_slice %47 {offsets = [0, 0], sizes = [8, 64], strides = [1, 1]} : vector<8x128xf32> to vector<8x64xf32>
    %49 = vector.extract_strided_slice %47 {offsets = [0, 64], sizes = [8, 64], strides = [1, 1]} : vector<8x128xf32> to vector<8x64xf32>
    %50 = vector.extract_strided_slice %12 {offsets = [0, 128], sizes = [8, 64], strides = [1, 1]} : vector<8x192xf32> to vector<8x64xf32>
    %51 = vector.extract_strided_slice %39 {offsets = [0, 128], sizes = [8, 64], strides = [1, 1]} : vector<8x192xf32> to vector<8x64xf32>
    %52 = vector.broadcast %35 : vector<1x64xf32> to vector<8x64xf32>
    %53 = arith.addf %51, %52 : vector<8x64xf32>
    %54 = arith.mulf %48, %53 : vector<8x64xf32>
    %55 = arith.addf %50, %54 : vector<8x64xf32>
    %56 = math.tanh %55 : vector<8x64xf32>
    %cst_12 = arith.constant 1.000000e+00 : f32
    %57 = vector.broadcast %cst_12 : f32 to vector<8x64xf32>
    %58 = arith.subf %57, %49 : vector<8x64xf32>
    %59 = arith.mulf %58, %56 : vector<8x64xf32>
    %60 = arith.mulf %49, %38 : vector<8x64xf32>
    %61 = arith.addf %59, %60 : vector<8x64xf32>
    %cst_13 = arith.constant dense<0.000000e+00> : vector<8x192xf32>
    %62 = tpu.matmul %61, %36, %cst_13 {dimension_numbers = #tpu.dot_dimension_numbers<[1], [0], [0], [1], [0, 0, 1, 1], [], []>} : vector<8x64xf32>, vector<64x192xf32>, vector<8x192xf32> -> vector<8x192xf32>
    %cst_14 = arith.constant dense<0.000000e+00> : vector<8x192xf32>
    %63 = tpu.matmul %61, %37, %cst_14 {dimension_numbers = #tpu.dot_dimension_numbers<[1], [0], [0], [1], [0, 0, 1, 1], [], []>} : vector<8x64xf32>, vector<64x192xf32>, vector<8x192xf32> -> vector<8x192xf32>
    %cst_15 = arith.constant dense<0.000000e+00> : vector<8x192xf32>
    %64 = tpu.matmul %61, %34, %cst_15 {dimension_numbers = #tpu.dot_dimension_numbers<[1], [0], [0], [1], [0, 0, 1, 1], [], []>} : vector<8x64xf32>, vector<64x192xf32>, vector<8x192xf32> -> vector<8x192xf32>
    %65 = vector.extract_strided_slice %15 {offsets = [0, 0], sizes = [8, 128], strides = [1, 1]} : vector<8x192xf32> to vector<8x128xf32>
    %66 = vector.extract_strided_slice %64 {offsets = [0, 0], sizes = [8, 128], strides = [1, 1]} : vector<8x192xf32> to vector<8x128xf32>
    %67 = arith.addf %65, %66 : vector<8x128xf32>
    %68 = arith.negf %67 : vector<8x128xf32>
    %69 = math.exp %68 : vector<8x128xf32>
    %cst_16 = arith.constant 1.000000e+00 : f32
    %70 = vector.broadcast %cst_16 : f32 to vector<8x128xf32>
    %71 = arith.addf %70, %69 : vector<8x128xf32>
    %72 = arith.divf %70, %71 : vector<8x128xf32>
    %73 = vector.extract_strided_slice %72 {offsets = [0, 0], sizes = [8, 64], strides = [1, 1]} : vector<8x128xf32> to vector<8x64xf32>
    %74 = vector.extract_strided_slice %72 {offsets = [0, 64], sizes = [8, 64], strides = [1, 1]} : vector<8x128xf32> to vector<8x64xf32>
    %75 = vector.extract_strided_slice %15 {offsets = [0, 128], sizes = [8, 64], strides = [1, 1]} : vector<8x192xf32> to vector<8x64xf32>
    %76 = vector.extract_strided_slice %64 {offsets = [0, 128], sizes = [8, 64], strides = [1, 1]} : vector<8x192xf32> to vector<8x64xf32>
    %77 = vector.broadcast %35 : vector<1x64xf32> to vector<8x64xf32>
    %78 = arith.addf %76, %77 : vector<8x64xf32>
    %79 = arith.mulf %73, %78 : vector<8x64xf32>
    %80 = arith.addf %75, %79 : vector<8x64xf32>
    %81 = math.tanh %80 : vector<8x64xf32>
    %cst_17 = arith.constant 1.000000e+00 : f32
    %82 = vector.broadcast %cst_17 : f32 to vector<8x64xf32>
    %83 = arith.subf %82, %74 : vector<8x64xf32>
    %84 = arith.mulf %83, %81 : vector<8x64xf32>
    %85 = arith.mulf %74, %61 : vector<8x64xf32>
    %86 = arith.addf %84, %85 : vector<8x64xf32>
    %cst_18 = arith.constant dense<0.000000e+00> : vector<8x192xf32>
    %87 = tpu.matmul %86, %36, %cst_18 {dimension_numbers = #tpu.dot_dimension_numbers<[1], [0], [0], [1], [0, 0, 1, 1], [], []>} : vector<8x64xf32>, vector<64x192xf32>, vector<8x192xf32> -> vector<8x192xf32>
    %cst_19 = arith.constant dense<0.000000e+00> : vector<8x192xf32>
    %88 = tpu.matmul %86, %37, %cst_19 {dimension_numbers = #tpu.dot_dimension_numbers<[1], [0], [0], [1], [0, 0, 1, 1], [], []>} : vector<8x64xf32>, vector<64x192xf32>, vector<8x192xf32> -> vector<8x192xf32>
    %cst_20 = arith.constant dense<0.000000e+00> : vector<8x192xf32>
    %89 = tpu.matmul %86, %34, %cst_20 {dimension_numbers = #tpu.dot_dimension_numbers<[1], [0], [0], [1], [0, 0, 1, 1], [], []>} : vector<8x64xf32>, vector<64x192xf32>, vector<8x192xf32> -> vector<8x192xf32>
    %90 = vector.extract_strided_slice %18 {offsets = [0, 0], sizes = [8, 128], strides = [1, 1]} : vector<8x192xf32> to vector<8x128xf32>
    %91 = vector.extract_strided_slice %89 {offsets = [0, 0], sizes = [8, 128], strides = [1, 1]} : vector<8x192xf32> to vector<8x128xf32>
    %92 = arith.addf %90, %91 : vector<8x128xf32>
    %93 = arith.negf %92 : vector<8x128xf32>
    %94 = math.exp %93 : vector<8x128xf32>
    %cst_21 = arith.constant 1.000000e+00 : f32
    %95 = vector.broadcast %cst_21 : f32 to vector<8x128xf32>
    %96 = arith.addf %95, %94 : vector<8x128xf32>
    %97 = arith.divf %95, %96 : vector<8x128xf32>
    %98 = vector.extract_strided_slice %97 {offsets = [0, 0], sizes = [8, 64], strides = [1, 1]} : vector<8x128xf32> to vector<8x64xf32>
    %99 = vector.extract_strided_slice %97 {offsets = [0, 64], sizes = [8, 64], strides = [1, 1]} : vector<8x128xf32> to vector<8x64xf32>
    %100 = vector.extract_strided_slice %18 {offsets = [0, 128], sizes = [8, 64], strides = [1, 1]} : vector<8x192xf32> to vector<8x64xf32>
    %101 = vector.extract_strided_slice %89 {offsets = [0, 128], sizes = [8, 64], strides = [1, 1]} : vector<8x192xf32> to vector<8x64xf32>
    %102 = vector.broadcast %35 : vector<1x64xf32> to vector<8x64xf32>
    %103 = arith.addf %101, %102 : vector<8x64xf32>
    %104 = arith.mulf %98, %103 : vector<8x64xf32>
    %105 = arith.addf %100, %104 : vector<8x64xf32>
    %106 = math.tanh %105 : vector<8x64xf32>
    %cst_22 = arith.constant 1.000000e+00 : f32
    %107 = vector.broadcast %cst_22 : f32 to vector<8x64xf32>
    %108 = arith.subf %107, %99 : vector<8x64xf32>
    %109 = arith.mulf %108, %106 : vector<8x64xf32>
    %110 = arith.mulf %99, %86 : vector<8x64xf32>
    %111 = arith.addf %109, %110 : vector<8x64xf32>
    %cst_23 = arith.constant dense<0.000000e+00> : vector<8x192xf32>
    %112 = tpu.matmul %111, %36, %cst_23 {dimension_numbers = #tpu.dot_dimension_numbers<[1], [0], [0], [1], [0, 0, 1, 1], [], []>} : vector<8x64xf32>, vector<64x192xf32>, vector<8x192xf32> -> vector<8x192xf32>
    %cst_24 = arith.constant dense<0.000000e+00> : vector<8x192xf32>
    %113 = tpu.matmul %111, %37, %cst_24 {dimension_numbers = #tpu.dot_dimension_numbers<[1], [0], [0], [1], [0, 0, 1, 1], [], []>} : vector<8x64xf32>, vector<64x192xf32>, vector<8x192xf32> -> vector<8x192xf32>
    %cst_25 = arith.constant dense<0.000000e+00> : vector<8x192xf32>
    %114 = tpu.matmul %111, %34, %cst_25 {dimension_numbers = #tpu.dot_dimension_numbers<[1], [0], [0], [1], [0, 0, 1, 1], [], []>} : vector<8x64xf32>, vector<64x192xf32>, vector<8x192xf32> -> vector<8x192xf32>
    %115 = vector.extract_strided_slice %21 {offsets = [0, 0], sizes = [8, 128], strides = [1, 1]} : vector<8x192xf32> to vector<8x128xf32>
    %116 = vector.extract_strided_slice %114 {offsets = [0, 0], sizes = [8, 128], strides = [1, 1]} : vector<8x192xf32> to vector<8x128xf32>
    %117 = arith.addf %115, %116 : vector<8x128xf32>
    %118 = arith.negf %117 : vector<8x128xf32>
    %119 = math.exp %118 : vector<8x128xf32>
    %cst_26 = arith.constant 1.000000e+00 : f32
    %120 = vector.broadcast %cst_26 : f32 to vector<8x128xf32>
    %121 = arith.addf %120, %119 : vector<8x128xf32>
    %122 = arith.divf %120, %121 : vector<8x128xf32>
    %123 = vector.extract_strided_slice %122 {offsets = [0, 0], sizes = [8, 64], strides = [1, 1]} : vector<8x128xf32> to vector<8x64xf32>
    %124 = vector.extract_strided_slice %122 {offsets = [0, 64], sizes = [8, 64], strides = [1, 1]} : vector<8x128xf32> to vector<8x64xf32>
    %125 = vector.extract_strided_slice %21 {offsets = [0, 128], sizes = [8, 64], strides = [1, 1]} : vector<8x192xf32> to vector<8x64xf32>
    %126 = vector.extract_strided_slice %114 {offsets = [0, 128], sizes = [8, 64], strides = [1, 1]} : vector<8x192xf32> to vector<8x64xf32>
    %127 = vector.broadcast %35 : vector<1x64xf32> to vector<8x64xf32>
    %128 = arith.addf %126, %127 : vector<8x64xf32>
    %129 = arith.mulf %123, %128 : vector<8x64xf32>
    %130 = arith.addf %125, %129 : vector<8x64xf32>
    %131 = math.tanh %130 : vector<8x64xf32>
    %cst_27 = arith.constant 1.000000e+00 : f32
    %132 = vector.broadcast %cst_27 : f32 to vector<8x64xf32>
    %133 = arith.subf %132, %124 : vector<8x64xf32>
    %134 = arith.mulf %133, %131 : vector<8x64xf32>
    %135 = arith.mulf %124, %111 : vector<8x64xf32>
    %136 = arith.addf %134, %135 : vector<8x64xf32>
    %cst_28 = arith.constant dense<0.000000e+00> : vector<8x192xf32>
    %137 = tpu.matmul %136, %36, %cst_28 {dimension_numbers = #tpu.dot_dimension_numbers<[1], [0], [0], [1], [0, 0, 1, 1], [], []>} : vector<8x64xf32>, vector<64x192xf32>, vector<8x192xf32> -> vector<8x192xf32>
    %cst_29 = arith.constant dense<0.000000e+00> : vector<8x192xf32>
    %138 = tpu.matmul %136, %37, %cst_29 {dimension_numbers = #tpu.dot_dimension_numbers<[1], [0], [0], [1], [0, 0, 1, 1], [], []>} : vector<8x64xf32>, vector<64x192xf32>, vector<8x192xf32> -> vector<8x192xf32>
    %cst_30 = arith.constant dense<0.000000e+00> : vector<8x192xf32>
    %139 = tpu.matmul %136, %34, %cst_30 {dimension_numbers = #tpu.dot_dimension_numbers<[1], [0], [0], [1], [0, 0, 1, 1], [], []>} : vector<8x64xf32>, vector<64x192xf32>, vector<8x192xf32> -> vector<8x192xf32>
    %140 = vector.extract_strided_slice %24 {offsets = [0, 0], sizes = [8, 128], strides = [1, 1]} : vector<8x192xf32> to vector<8x128xf32>
    %141 = vector.extract_strided_slice %139 {offsets = [0, 0], sizes = [8, 128], strides = [1, 1]} : vector<8x192xf32> to vector<8x128xf32>
    %142 = arith.addf %140, %141 : vector<8x128xf32>
    %143 = arith.negf %142 : vector<8x128xf32>
    %144 = math.exp %143 : vector<8x128xf32>
    %cst_31 = arith.constant 1.000000e+00 : f32
    %145 = vector.broadcast %cst_31 : f32 to vector<8x128xf32>
    %146 = arith.addf %145, %144 : vector<8x128xf32>
    %147 = arith.divf %145, %146 : vector<8x128xf32>
    %148 = vector.extract_strided_slice %147 {offsets = [0, 0], sizes = [8, 64], strides = [1, 1]} : vector<8x128xf32> to vector<8x64xf32>
    %149 = vector.extract_strided_slice %147 {offsets = [0, 64], sizes = [8, 64], strides = [1, 1]} : vector<8x128xf32> to vector<8x64xf32>
    %150 = vector.extract_strided_slice %24 {offsets = [0, 128], sizes = [8, 64], strides = [1, 1]} : vector<8x192xf32> to vector<8x64xf32>
    %151 = vector.extract_strided_slice %139 {offsets = [0, 128], sizes = [8, 64], strides = [1, 1]} : vector<8x192xf32> to vector<8x64xf32>
    %152 = vector.broadcast %35 : vector<1x64xf32> to vector<8x64xf32>
    %153 = arith.addf %151, %152 : vector<8x64xf32>
    %154 = arith.mulf %148, %153 : vector<8x64xf32>
    %155 = arith.addf %150, %154 : vector<8x64xf32>
    %156 = math.tanh %155 : vector<8x64xf32>
    %cst_32 = arith.constant 1.000000e+00 : f32
    %157 = vector.broadcast %cst_32 : f32 to vector<8x64xf32>
    %158 = arith.subf %157, %149 : vector<8x64xf32>
    %159 = arith.mulf %158, %156 : vector<8x64xf32>
    %160 = arith.mulf %149, %136 : vector<8x64xf32>
    %161 = arith.addf %159, %160 : vector<8x64xf32>
    %cst_33 = arith.constant dense<0.000000e+00> : vector<8x192xf32>
    %162 = tpu.matmul %161, %36, %cst_33 {dimension_numbers = #tpu.dot_dimension_numbers<[1], [0], [0], [1], [0, 0, 1, 1], [], []>} : vector<8x64xf32>, vector<64x192xf32>, vector<8x192xf32> -> vector<8x192xf32>
    %cst_34 = arith.constant dense<0.000000e+00> : vector<8x192xf32>
    %163 = tpu.matmul %161, %37, %cst_34 {dimension_numbers = #tpu.dot_dimension_numbers<[1], [0], [0], [1], [0, 0, 1, 1], [], []>} : vector<8x64xf32>, vector<64x192xf32>, vector<8x192xf32> -> vector<8x192xf32>
    %cst_35 = arith.constant dense<0.000000e+00> : vector<8x192xf32>
    %164 = tpu.matmul %161, %34, %cst_35 {dimension_numbers = #tpu.dot_dimension_numbers<[1], [0], [0], [1], [0, 0, 1, 1], [], []>} : vector<8x64xf32>, vector<64x192xf32>, vector<8x192xf32> -> vector<8x192xf32>
    %165 = vector.extract_strided_slice %27 {offsets = [0, 0], sizes = [8, 128], strides = [1, 1]} : vector<8x192xf32> to vector<8x128xf32>
    %166 = vector.extract_strided_slice %164 {offsets = [0, 0], sizes = [8, 128], strides = [1, 1]} : vector<8x192xf32> to vector<8x128xf32>
    %167 = arith.addf %165, %166 : vector<8x128xf32>
    %168 = arith.negf %167 : vector<8x128xf32>
    %169 = math.exp %168 : vector<8x128xf32>
    %cst_36 = arith.constant 1.000000e+00 : f32
    %170 = vector.broadcast %cst_36 : f32 to vector<8x128xf32>
    %171 = arith.addf %170, %169 : vector<8x128xf32>
    %172 = arith.divf %170, %171 : vector<8x128xf32>
    %173 = vector.extract_strided_slice %172 {offsets = [0, 0], sizes = [8, 64], strides = [1, 1]} : vector<8x128xf32> to vector<8x64xf32>
    %174 = vector.extract_strided_slice %172 {offsets = [0, 64], sizes = [8, 64], strides = [1, 1]} : vector<8x128xf32> to vector<8x64xf32>
    %175 = vector.extract_strided_slice %27 {offsets = [0, 128], sizes = [8, 64], strides = [1, 1]} : vector<8x192xf32> to vector<8x64xf32>
    %176 = vector.extract_strided_slice %164 {offsets = [0, 128], sizes = [8, 64], strides = [1, 1]} : vector<8x192xf32> to vector<8x64xf32>
    %177 = vector.broadcast %35 : vector<1x64xf32> to vector<8x64xf32>
    %178 = arith.addf %176, %177 : vector<8x64xf32>
    %179 = arith.mulf %173, %178 : vector<8x64xf32>
    %180 = arith.addf %175, %179 : vector<8x64xf32>
    %181 = math.tanh %180 : vector<8x64xf32>
    %cst_37 = arith.constant 1.000000e+00 : f32
    %182 = vector.broadcast %cst_37 : f32 to vector<8x64xf32>
    %183 = arith.subf %182, %174 : vector<8x64xf32>
    %184 = arith.mulf %183, %181 : vector<8x64xf32>
    %185 = arith.mulf %174, %161 : vector<8x64xf32>
    %186 = arith.addf %184, %185 : vector<8x64xf32>
    %cst_38 = arith.constant dense<0.000000e+00> : vector<8x192xf32>
    %187 = tpu.matmul %186, %36, %cst_38 {dimension_numbers = #tpu.dot_dimension_numbers<[1], [0], [0], [1], [0, 0, 1, 1], [], []>} : vector<8x64xf32>, vector<64x192xf32>, vector<8x192xf32> -> vector<8x192xf32>
    %cst_39 = arith.constant dense<0.000000e+00> : vector<8x192xf32>
    %188 = tpu.matmul %186, %37, %cst_39 {dimension_numbers = #tpu.dot_dimension_numbers<[1], [0], [0], [1], [0, 0, 1, 1], [], []>} : vector<8x64xf32>, vector<64x192xf32>, vector<8x192xf32> -> vector<8x192xf32>
    %cst_40 = arith.constant dense<0.000000e+00> : vector<8x192xf32>
    %189 = tpu.matmul %186, %34, %cst_40 {dimension_numbers = #tpu.dot_dimension_numbers<[1], [0], [0], [1], [0, 0, 1, 1], [], []>} : vector<8x64xf32>, vector<64x192xf32>, vector<8x192xf32> -> vector<8x192xf32>
    %190 = vector.extract_strided_slice %30 {offsets = [0, 0], sizes = [8, 128], strides = [1, 1]} : vector<8x192xf32> to vector<8x128xf32>
    %191 = vector.extract_strided_slice %189 {offsets = [0, 0], sizes = [8, 128], strides = [1, 1]} : vector<8x192xf32> to vector<8x128xf32>
    %192 = arith.addf %190, %191 : vector<8x128xf32>
    %193 = arith.negf %192 : vector<8x128xf32>
    %194 = math.exp %193 : vector<8x128xf32>
    %cst_41 = arith.constant 1.000000e+00 : f32
    %195 = vector.broadcast %cst_41 : f32 to vector<8x128xf32>
    %196 = arith.addf %195, %194 : vector<8x128xf32>
    %197 = arith.divf %195, %196 : vector<8x128xf32>
    %198 = vector.extract_strided_slice %197 {offsets = [0, 0], sizes = [8, 64], strides = [1, 1]} : vector<8x128xf32> to vector<8x64xf32>
    %199 = vector.extract_strided_slice %197 {offsets = [0, 64], sizes = [8, 64], strides = [1, 1]} : vector<8x128xf32> to vector<8x64xf32>
    %200 = vector.extract_strided_slice %30 {offsets = [0, 128], sizes = [8, 64], strides = [1, 1]} : vector<8x192xf32> to vector<8x64xf32>
    %201 = vector.extract_strided_slice %189 {offsets = [0, 128], sizes = [8, 64], strides = [1, 1]} : vector<8x192xf32> to vector<8x64xf32>
    %202 = vector.broadcast %35 : vector<1x64xf32> to vector<8x64xf32>
    %203 = arith.addf %201, %202 : vector<8x64xf32>
    %204 = arith.mulf %198, %203 : vector<8x64xf32>
    %205 = arith.addf %200, %204 : vector<8x64xf32>
    %206 = math.tanh %205 : vector<8x64xf32>
    %cst_42 = arith.constant 1.000000e+00 : f32
    %207 = vector.broadcast %cst_42 : f32 to vector<8x64xf32>
    %208 = arith.subf %207, %199 : vector<8x64xf32>
    %209 = arith.mulf %208, %206 : vector<8x64xf32>
    %210 = arith.mulf %199, %186 : vector<8x64xf32>
    %211 = arith.addf %209, %210 : vector<8x64xf32>
    %cst_43 = arith.constant dense<0.000000e+00> : vector<8x192xf32>
    %212 = tpu.matmul %211, %36, %cst_43 {dimension_numbers = #tpu.dot_dimension_numbers<[1], [0], [0], [1], [0, 0, 1, 1], [], []>} : vector<8x64xf32>, vector<64x192xf32>, vector<8x192xf32> -> vector<8x192xf32>
    %cst_44 = arith.constant dense<0.000000e+00> : vector<8x192xf32>
    %213 = tpu.matmul %211, %37, %cst_44 {dimension_numbers = #tpu.dot_dimension_numbers<[1], [0], [0], [1], [0, 0, 1, 1], [], []>} : vector<8x64xf32>, vector<64x192xf32>, vector<8x192xf32> -> vector<8x192xf32>
    %cst_45 = arith.constant dense<0.000000e+00> : vector<8x192xf32>
    %214 = tpu.matmul %211, %34, %cst_45 {dimension_numbers = #tpu.dot_dimension_numbers<[1], [0], [0], [1], [0, 0, 1, 1], [], []>} : vector<8x64xf32>, vector<64x192xf32>, vector<8x192xf32> -> vector<8x192xf32>
    %215 = vector.extract_strided_slice %33 {offsets = [0, 0], sizes = [8, 128], strides = [1, 1]} : vector<8x192xf32> to vector<8x128xf32>
    %216 = vector.extract_strided_slice %214 {offsets = [0, 0], sizes = [8, 128], strides = [1, 1]} : vector<8x192xf32> to vector<8x128xf32>
    %217 = arith.addf %215, %216 : vector<8x128xf32>
    %218 = arith.negf %217 : vector<8x128xf32>
    %219 = math.exp %218 : vector<8x128xf32>
    %cst_46 = arith.constant 1.000000e+00 : f32
    %220 = vector.broadcast %cst_46 : f32 to vector<8x128xf32>
    %221 = arith.addf %220, %219 : vector<8x128xf32>
    %222 = arith.divf %220, %221 : vector<8x128xf32>
    %223 = vector.extract_strided_slice %222 {offsets = [0, 0], sizes = [8, 64], strides = [1, 1]} : vector<8x128xf32> to vector<8x64xf32>
    %224 = vector.extract_strided_slice %222 {offsets = [0, 64], sizes = [8, 64], strides = [1, 1]} : vector<8x128xf32> to vector<8x64xf32>
    %225 = vector.extract_strided_slice %33 {offsets = [0, 128], sizes = [8, 64], strides = [1, 1]} : vector<8x192xf32> to vector<8x64xf32>
    %226 = vector.extract_strided_slice %214 {offsets = [0, 128], sizes = [8, 64], strides = [1, 1]} : vector<8x192xf32> to vector<8x64xf32>
    %227 = vector.broadcast %35 : vector<1x64xf32> to vector<8x64xf32>
    %228 = arith.addf %226, %227 : vector<8x64xf32>
    %229 = arith.mulf %223, %228 : vector<8x64xf32>
    %230 = arith.addf %225, %229 : vector<8x64xf32>
    %231 = math.tanh %230 : vector<8x64xf32>
    %cst_47 = arith.constant 1.000000e+00 : f32
    %232 = vector.broadcast %cst_47 : f32 to vector<8x64xf32>
    %233 = arith.subf %232, %224 : vector<8x64xf32>
    %234 = arith.mulf %233, %231 : vector<8x64xf32>
    %235 = arith.mulf %224, %211 : vector<8x64xf32>
    %236 = arith.addf %234, %235 : vector<8x64xf32>
    %cst_48 = arith.constant dense<0.000000e+00> : vector<8x192xf32>
    %237 = tpu.matmul %236, %36, %cst_48 {dimension_numbers = #tpu.dot_dimension_numbers<[1], [0], [0], [1], [0, 0, 1, 1], [], []>} : vector<8x64xf32>, vector<64x192xf32>, vector<8x192xf32> -> vector<8x192xf32>
    %cst_49 = arith.constant dense<0.000000e+00> : vector<8x192xf32>
    %238 = tpu.matmul %236, %37, %cst_49 {dimension_numbers = #tpu.dot_dimension_numbers<[1], [0], [0], [1], [0, 0, 1, 1], [], []>} : vector<8x64xf32>, vector<64x192xf32>, vector<8x192xf32> -> vector<8x192xf32>
    %c480 = arith.constant 480 : index
    %c0_50 = arith.constant 0 : index
    %239 = vector.load %arg1[%c480, %c0_50] : memref<488x192xf32, #tpu.memory_space<vmem>>, vector<1x192xf32>
    %240 = arith.addf %62, %238 : vector<8x192xf32>
    %241 = vector.broadcast %239 : vector<1x192xf32> to vector<8x192xf32>
    %242 = arith.addf %240, %241 : vector<8x192xf32>
    %243 = arith.addf %87, %213 : vector<8x192xf32>
    %244 = vector.broadcast %239 : vector<1x192xf32> to vector<8x192xf32>
    %245 = arith.addf %243, %244 : vector<8x192xf32>
    %246 = arith.addf %112, %188 : vector<8x192xf32>
    %247 = vector.broadcast %239 : vector<1x192xf32> to vector<8x192xf32>
    %248 = arith.addf %246, %247 : vector<8x192xf32>
    %249 = arith.addf %137, %163 : vector<8x192xf32>
    %250 = vector.broadcast %239 : vector<1x192xf32> to vector<8x192xf32>
    %251 = arith.addf %249, %250 : vector<8x192xf32>
    %252 = arith.addf %162, %138 : vector<8x192xf32>
    %253 = vector.broadcast %239 : vector<1x192xf32> to vector<8x192xf32>
    %254 = arith.addf %252, %253 : vector<8x192xf32>
    %255 = arith.addf %187, %113 : vector<8x192xf32>
    %256 = vector.broadcast %239 : vector<1x192xf32> to vector<8x192xf32>
    %257 = arith.addf %255, %256 : vector<8x192xf32>
    %258 = arith.addf %212, %88 : vector<8x192xf32>
    %259 = vector.broadcast %239 : vector<1x192xf32> to vector<8x192xf32>
    %260 = arith.addf %258, %259 : vector<8x192xf32>
    %261 = arith.addf %237, %63 : vector<8x192xf32>
    %262 = vector.broadcast %239 : vector<1x192xf32> to vector<8x192xf32>
    %263 = arith.addf %261, %262 : vector<8x192xf32>
    %c256 = arith.constant 256 : index
    %c0_51 = arith.constant 0 : index
    %264 = vector.load %arg1[%c256, %c0_51] : memref<488x192xf32, #tpu.memory_space<vmem>>, vector<64x192xf32>
    %c482 = arith.constant 482 : index
    %c0_52 = arith.constant 0 : index
    %265 = vector.load %arg1[%c482, %c0_52] : memref<488x192xf32, #tpu.memory_space<vmem>>, vector<1x64xf32>
    %cst_53 = arith.constant 0.000000e+00 : f32
    %266 = vector.broadcast %cst_53 : f32 to vector<8x64xf32>
    %cst_54 = arith.constant dense<0.000000e+00> : vector<8x192xf32>
    %267 = tpu.matmul %266, %264, %cst_54 {dimension_numbers = #tpu.dot_dimension_numbers<[1], [0], [0], [1], [0, 0, 1, 1], [], []>} : vector<8x64xf32>, vector<64x192xf32>, vector<8x192xf32> -> vector<8x192xf32>
    %268 = vector.extract_strided_slice %242 {offsets = [0, 0], sizes = [8, 128], strides = [1, 1]} : vector<8x192xf32> to vector<8x128xf32>
    %269 = vector.extract_strided_slice %267 {offsets = [0, 0], sizes = [8, 128], strides = [1, 1]} : vector<8x192xf32> to vector<8x128xf32>
    %270 = arith.addf %268, %269 : vector<8x128xf32>
    %271 = arith.negf %270 : vector<8x128xf32>
    %272 = math.exp %271 : vector<8x128xf32>
    %cst_55 = arith.constant 1.000000e+00 : f32
    %273 = vector.broadcast %cst_55 : f32 to vector<8x128xf32>
    %274 = arith.addf %273, %272 : vector<8x128xf32>
    %275 = arith.divf %273, %274 : vector<8x128xf32>
    %276 = vector.extract_strided_slice %275 {offsets = [0, 0], sizes = [8, 64], strides = [1, 1]} : vector<8x128xf32> to vector<8x64xf32>
    %277 = vector.extract_strided_slice %275 {offsets = [0, 64], sizes = [8, 64], strides = [1, 1]} : vector<8x128xf32> to vector<8x64xf32>
    %278 = vector.extract_strided_slice %242 {offsets = [0, 128], sizes = [8, 64], strides = [1, 1]} : vector<8x192xf32> to vector<8x64xf32>
    %279 = vector.extract_strided_slice %267 {offsets = [0, 128], sizes = [8, 64], strides = [1, 1]} : vector<8x192xf32> to vector<8x64xf32>
    %280 = vector.broadcast %265 : vector<1x64xf32> to vector<8x64xf32>
    %281 = arith.addf %279, %280 : vector<8x64xf32>
    %282 = arith.mulf %276, %281 : vector<8x64xf32>
    %283 = arith.addf %278, %282 : vector<8x64xf32>
    %284 = math.tanh %283 : vector<8x64xf32>
    %cst_56 = arith.constant 1.000000e+00 : f32
    %285 = vector.broadcast %cst_56 : f32 to vector<8x64xf32>
    %286 = arith.subf %285, %277 : vector<8x64xf32>
    %287 = arith.mulf %286, %284 : vector<8x64xf32>
    %288 = arith.mulf %277, %266 : vector<8x64xf32>
    %289 = arith.addf %287, %288 : vector<8x64xf32>
    %cst_57 = arith.constant dense<0.000000e+00> : vector<8x192xf32>
    %290 = tpu.matmul %289, %264, %cst_57 {dimension_numbers = #tpu.dot_dimension_numbers<[1], [0], [0], [1], [0, 0, 1, 1], [], []>} : vector<8x64xf32>, vector<64x192xf32>, vector<8x192xf32> -> vector<8x192xf32>
    %291 = vector.extract_strided_slice %245 {offsets = [0, 0], sizes = [8, 128], strides = [1, 1]} : vector<8x192xf32> to vector<8x128xf32>
    %292 = vector.extract_strided_slice %290 {offsets = [0, 0], sizes = [8, 128], strides = [1, 1]} : vector<8x192xf32> to vector<8x128xf32>
    %293 = arith.addf %291, %292 : vector<8x128xf32>
    %294 = arith.negf %293 : vector<8x128xf32>
    %295 = math.exp %294 : vector<8x128xf32>
    %cst_58 = arith.constant 1.000000e+00 : f32
    %296 = vector.broadcast %cst_58 : f32 to vector<8x128xf32>
    %297 = arith.addf %296, %295 : vector<8x128xf32>
    %298 = arith.divf %296, %297 : vector<8x128xf32>
    %299 = vector.extract_strided_slice %298 {offsets = [0, 0], sizes = [8, 64], strides = [1, 1]} : vector<8x128xf32> to vector<8x64xf32>
    %300 = vector.extract_strided_slice %298 {offsets = [0, 64], sizes = [8, 64], strides = [1, 1]} : vector<8x128xf32> to vector<8x64xf32>
    %301 = vector.extract_strided_slice %245 {offsets = [0, 128], sizes = [8, 64], strides = [1, 1]} : vector<8x192xf32> to vector<8x64xf32>
    %302 = vector.extract_strided_slice %290 {offsets = [0, 128], sizes = [8, 64], strides = [1, 1]} : vector<8x192xf32> to vector<8x64xf32>
    %303 = vector.broadcast %265 : vector<1x64xf32> to vector<8x64xf32>
    %304 = arith.addf %302, %303 : vector<8x64xf32>
    %305 = arith.mulf %299, %304 : vector<8x64xf32>
    %306 = arith.addf %301, %305 : vector<8x64xf32>
    %307 = math.tanh %306 : vector<8x64xf32>
    %cst_59 = arith.constant 1.000000e+00 : f32
    %308 = vector.broadcast %cst_59 : f32 to vector<8x64xf32>
    %309 = arith.subf %308, %300 : vector<8x64xf32>
    %310 = arith.mulf %309, %307 : vector<8x64xf32>
    %311 = arith.mulf %300, %289 : vector<8x64xf32>
    %312 = arith.addf %310, %311 : vector<8x64xf32>
    %cst_60 = arith.constant dense<0.000000e+00> : vector<8x192xf32>
    %313 = tpu.matmul %312, %264, %cst_60 {dimension_numbers = #tpu.dot_dimension_numbers<[1], [0], [0], [1], [0, 0, 1, 1], [], []>} : vector<8x64xf32>, vector<64x192xf32>, vector<8x192xf32> -> vector<8x192xf32>
    %314 = vector.extract_strided_slice %248 {offsets = [0, 0], sizes = [8, 128], strides = [1, 1]} : vector<8x192xf32> to vector<8x128xf32>
    %315 = vector.extract_strided_slice %313 {offsets = [0, 0], sizes = [8, 128], strides = [1, 1]} : vector<8x192xf32> to vector<8x128xf32>
    %316 = arith.addf %314, %315 : vector<8x128xf32>
    %317 = arith.negf %316 : vector<8x128xf32>
    %318 = math.exp %317 : vector<8x128xf32>
    %cst_61 = arith.constant 1.000000e+00 : f32
    %319 = vector.broadcast %cst_61 : f32 to vector<8x128xf32>
    %320 = arith.addf %319, %318 : vector<8x128xf32>
    %321 = arith.divf %319, %320 : vector<8x128xf32>
    %322 = vector.extract_strided_slice %321 {offsets = [0, 0], sizes = [8, 64], strides = [1, 1]} : vector<8x128xf32> to vector<8x64xf32>
    %323 = vector.extract_strided_slice %321 {offsets = [0, 64], sizes = [8, 64], strides = [1, 1]} : vector<8x128xf32> to vector<8x64xf32>
    %324 = vector.extract_strided_slice %248 {offsets = [0, 128], sizes = [8, 64], strides = [1, 1]} : vector<8x192xf32> to vector<8x64xf32>
    %325 = vector.extract_strided_slice %313 {offsets = [0, 128], sizes = [8, 64], strides = [1, 1]} : vector<8x192xf32> to vector<8x64xf32>
    %326 = vector.broadcast %265 : vector<1x64xf32> to vector<8x64xf32>
    %327 = arith.addf %325, %326 : vector<8x64xf32>
    %328 = arith.mulf %322, %327 : vector<8x64xf32>
    %329 = arith.addf %324, %328 : vector<8x64xf32>
    %330 = math.tanh %329 : vector<8x64xf32>
    %cst_62 = arith.constant 1.000000e+00 : f32
    %331 = vector.broadcast %cst_62 : f32 to vector<8x64xf32>
    %332 = arith.subf %331, %323 : vector<8x64xf32>
    %333 = arith.mulf %332, %330 : vector<8x64xf32>
    %334 = arith.mulf %323, %312 : vector<8x64xf32>
    %335 = arith.addf %333, %334 : vector<8x64xf32>
    %cst_63 = arith.constant dense<0.000000e+00> : vector<8x192xf32>
    %336 = tpu.matmul %335, %264, %cst_63 {dimension_numbers = #tpu.dot_dimension_numbers<[1], [0], [0], [1], [0, 0, 1, 1], [], []>} : vector<8x64xf32>, vector<64x192xf32>, vector<8x192xf32> -> vector<8x192xf32>
    %337 = vector.extract_strided_slice %251 {offsets = [0, 0], sizes = [8, 128], strides = [1, 1]} : vector<8x192xf32> to vector<8x128xf32>
    %338 = vector.extract_strided_slice %336 {offsets = [0, 0], sizes = [8, 128], strides = [1, 1]} : vector<8x192xf32> to vector<8x128xf32>
    %339 = arith.addf %337, %338 : vector<8x128xf32>
    %340 = arith.negf %339 : vector<8x128xf32>
    %341 = math.exp %340 : vector<8x128xf32>
    %cst_64 = arith.constant 1.000000e+00 : f32
    %342 = vector.broadcast %cst_64 : f32 to vector<8x128xf32>
    %343 = arith.addf %342, %341 : vector<8x128xf32>
    %344 = arith.divf %342, %343 : vector<8x128xf32>
    %345 = vector.extract_strided_slice %344 {offsets = [0, 0], sizes = [8, 64], strides = [1, 1]} : vector<8x128xf32> to vector<8x64xf32>
    %346 = vector.extract_strided_slice %344 {offsets = [0, 64], sizes = [8, 64], strides = [1, 1]} : vector<8x128xf32> to vector<8x64xf32>
    %347 = vector.extract_strided_slice %251 {offsets = [0, 128], sizes = [8, 64], strides = [1, 1]} : vector<8x192xf32> to vector<8x64xf32>
    %348 = vector.extract_strided_slice %336 {offsets = [0, 128], sizes = [8, 64], strides = [1, 1]} : vector<8x192xf32> to vector<8x64xf32>
    %349 = vector.broadcast %265 : vector<1x64xf32> to vector<8x64xf32>
    %350 = arith.addf %348, %349 : vector<8x64xf32>
    %351 = arith.mulf %345, %350 : vector<8x64xf32>
    %352 = arith.addf %347, %351 : vector<8x64xf32>
    %353 = math.tanh %352 : vector<8x64xf32>
    %cst_65 = arith.constant 1.000000e+00 : f32
    %354 = vector.broadcast %cst_65 : f32 to vector<8x64xf32>
    %355 = arith.subf %354, %346 : vector<8x64xf32>
    %356 = arith.mulf %355, %353 : vector<8x64xf32>
    %357 = arith.mulf %346, %335 : vector<8x64xf32>
    %358 = arith.addf %356, %357 : vector<8x64xf32>
    %cst_66 = arith.constant dense<0.000000e+00> : vector<8x192xf32>
    %359 = tpu.matmul %358, %264, %cst_66 {dimension_numbers = #tpu.dot_dimension_numbers<[1], [0], [0], [1], [0, 0, 1, 1], [], []>} : vector<8x64xf32>, vector<64x192xf32>, vector<8x192xf32> -> vector<8x192xf32>
    %360 = vector.extract_strided_slice %254 {offsets = [0, 0], sizes = [8, 128], strides = [1, 1]} : vector<8x192xf32> to vector<8x128xf32>
    %361 = vector.extract_strided_slice %359 {offsets = [0, 0], sizes = [8, 128], strides = [1, 1]} : vector<8x192xf32> to vector<8x128xf32>
    %362 = arith.addf %360, %361 : vector<8x128xf32>
    %363 = arith.negf %362 : vector<8x128xf32>
    %364 = math.exp %363 : vector<8x128xf32>
    %cst_67 = arith.constant 1.000000e+00 : f32
    %365 = vector.broadcast %cst_67 : f32 to vector<8x128xf32>
    %366 = arith.addf %365, %364 : vector<8x128xf32>
    %367 = arith.divf %365, %366 : vector<8x128xf32>
    %368 = vector.extract_strided_slice %367 {offsets = [0, 0], sizes = [8, 64], strides = [1, 1]} : vector<8x128xf32> to vector<8x64xf32>
    %369 = vector.extract_strided_slice %367 {offsets = [0, 64], sizes = [8, 64], strides = [1, 1]} : vector<8x128xf32> to vector<8x64xf32>
    %370 = vector.extract_strided_slice %254 {offsets = [0, 128], sizes = [8, 64], strides = [1, 1]} : vector<8x192xf32> to vector<8x64xf32>
    %371 = vector.extract_strided_slice %359 {offsets = [0, 128], sizes = [8, 64], strides = [1, 1]} : vector<8x192xf32> to vector<8x64xf32>
    %372 = vector.broadcast %265 : vector<1x64xf32> to vector<8x64xf32>
    %373 = arith.addf %371, %372 : vector<8x64xf32>
    %374 = arith.mulf %368, %373 : vector<8x64xf32>
    %375 = arith.addf %370, %374 : vector<8x64xf32>
    %376 = math.tanh %375 : vector<8x64xf32>
    %cst_68 = arith.constant 1.000000e+00 : f32
    %377 = vector.broadcast %cst_68 : f32 to vector<8x64xf32>
    %378 = arith.subf %377, %369 : vector<8x64xf32>
    %379 = arith.mulf %378, %376 : vector<8x64xf32>
    %380 = arith.mulf %369, %358 : vector<8x64xf32>
    %381 = arith.addf %379, %380 : vector<8x64xf32>
    %cst_69 = arith.constant dense<0.000000e+00> : vector<8x192xf32>
    %382 = tpu.matmul %381, %264, %cst_69 {dimension_numbers = #tpu.dot_dimension_numbers<[1], [0], [0], [1], [0, 0, 1, 1], [], []>} : vector<8x64xf32>, vector<64x192xf32>, vector<8x192xf32> -> vector<8x192xf32>
    %383 = vector.extract_strided_slice %257 {offsets = [0, 0], sizes = [8, 128], strides = [1, 1]} : vector<8x192xf32> to vector<8x128xf32>
    %384 = vector.extract_strided_slice %382 {offsets = [0, 0], sizes = [8, 128], strides = [1, 1]} : vector<8x192xf32> to vector<8x128xf32>
    %385 = arith.addf %383, %384 : vector<8x128xf32>
    %386 = arith.negf %385 : vector<8x128xf32>
    %387 = math.exp %386 : vector<8x128xf32>
    %cst_70 = arith.constant 1.000000e+00 : f32
    %388 = vector.broadcast %cst_70 : f32 to vector<8x128xf32>
    %389 = arith.addf %388, %387 : vector<8x128xf32>
    %390 = arith.divf %388, %389 : vector<8x128xf32>
    %391 = vector.extract_strided_slice %390 {offsets = [0, 0], sizes = [8, 64], strides = [1, 1]} : vector<8x128xf32> to vector<8x64xf32>
    %392 = vector.extract_strided_slice %390 {offsets = [0, 64], sizes = [8, 64], strides = [1, 1]} : vector<8x128xf32> to vector<8x64xf32>
    %393 = vector.extract_strided_slice %257 {offsets = [0, 128], sizes = [8, 64], strides = [1, 1]} : vector<8x192xf32> to vector<8x64xf32>
    %394 = vector.extract_strided_slice %382 {offsets = [0, 128], sizes = [8, 64], strides = [1, 1]} : vector<8x192xf32> to vector<8x64xf32>
    %395 = vector.broadcast %265 : vector<1x64xf32> to vector<8x64xf32>
    %396 = arith.addf %394, %395 : vector<8x64xf32>
    %397 = arith.mulf %391, %396 : vector<8x64xf32>
    %398 = arith.addf %393, %397 : vector<8x64xf32>
    %399 = math.tanh %398 : vector<8x64xf32>
    %cst_71 = arith.constant 1.000000e+00 : f32
    %400 = vector.broadcast %cst_71 : f32 to vector<8x64xf32>
    %401 = arith.subf %400, %392 : vector<8x64xf32>
    %402 = arith.mulf %401, %399 : vector<8x64xf32>
    %403 = arith.mulf %392, %381 : vector<8x64xf32>
    %404 = arith.addf %402, %403 : vector<8x64xf32>
    %cst_72 = arith.constant dense<0.000000e+00> : vector<8x192xf32>
    %405 = tpu.matmul %404, %264, %cst_72 {dimension_numbers = #tpu.dot_dimension_numbers<[1], [0], [0], [1], [0, 0, 1, 1], [], []>} : vector<8x64xf32>, vector<64x192xf32>, vector<8x192xf32> -> vector<8x192xf32>
    %406 = vector.extract_strided_slice %260 {offsets = [0, 0], sizes = [8, 128], strides = [1, 1]} : vector<8x192xf32> to vector<8x128xf32>
    %407 = vector.extract_strided_slice %405 {offsets = [0, 0], sizes = [8, 128], strides = [1, 1]} : vector<8x192xf32> to vector<8x128xf32>
    %408 = arith.addf %406, %407 : vector<8x128xf32>
    %409 = arith.negf %408 : vector<8x128xf32>
    %410 = math.exp %409 : vector<8x128xf32>
    %cst_73 = arith.constant 1.000000e+00 : f32
    %411 = vector.broadcast %cst_73 : f32 to vector<8x128xf32>
    %412 = arith.addf %411, %410 : vector<8x128xf32>
    %413 = arith.divf %411, %412 : vector<8x128xf32>
    %414 = vector.extract_strided_slice %413 {offsets = [0, 0], sizes = [8, 64], strides = [1, 1]} : vector<8x128xf32> to vector<8x64xf32>
    %415 = vector.extract_strided_slice %413 {offsets = [0, 64], sizes = [8, 64], strides = [1, 1]} : vector<8x128xf32> to vector<8x64xf32>
    %416 = vector.extract_strided_slice %260 {offsets = [0, 128], sizes = [8, 64], strides = [1, 1]} : vector<8x192xf32> to vector<8x64xf32>
    %417 = vector.extract_strided_slice %405 {offsets = [0, 128], sizes = [8, 64], strides = [1, 1]} : vector<8x192xf32> to vector<8x64xf32>
    %418 = vector.broadcast %265 : vector<1x64xf32> to vector<8x64xf32>
    %419 = arith.addf %417, %418 : vector<8x64xf32>
    %420 = arith.mulf %414, %419 : vector<8x64xf32>
    %421 = arith.addf %416, %420 : vector<8x64xf32>
    %422 = math.tanh %421 : vector<8x64xf32>
    %cst_74 = arith.constant 1.000000e+00 : f32
    %423 = vector.broadcast %cst_74 : f32 to vector<8x64xf32>
    %424 = arith.subf %423, %415 : vector<8x64xf32>
    %425 = arith.mulf %424, %422 : vector<8x64xf32>
    %426 = arith.mulf %415, %404 : vector<8x64xf32>
    %427 = arith.addf %425, %426 : vector<8x64xf32>
    %cst_75 = arith.constant dense<0.000000e+00> : vector<8x192xf32>
    %428 = tpu.matmul %427, %264, %cst_75 {dimension_numbers = #tpu.dot_dimension_numbers<[1], [0], [0], [1], [0, 0, 1, 1], [], []>} : vector<8x64xf32>, vector<64x192xf32>, vector<8x192xf32> -> vector<8x192xf32>
    %429 = vector.extract_strided_slice %263 {offsets = [0, 0], sizes = [8, 128], strides = [1, 1]} : vector<8x192xf32> to vector<8x128xf32>
    %430 = vector.extract_strided_slice %428 {offsets = [0, 0], sizes = [8, 128], strides = [1, 1]} : vector<8x192xf32> to vector<8x128xf32>
    %431 = arith.addf %429, %430 : vector<8x128xf32>
    %432 = arith.negf %431 : vector<8x128xf32>
    %433 = math.exp %432 : vector<8x128xf32>
    %cst_76 = arith.constant 1.000000e+00 : f32
    %434 = vector.broadcast %cst_76 : f32 to vector<8x128xf32>
    %435 = arith.addf %434, %433 : vector<8x128xf32>
    %436 = arith.divf %434, %435 : vector<8x128xf32>
    %437 = vector.extract_strided_slice %436 {offsets = [0, 0], sizes = [8, 64], strides = [1, 1]} : vector<8x128xf32> to vector<8x64xf32>
    %438 = vector.extract_strided_slice %436 {offsets = [0, 64], sizes = [8, 64], strides = [1, 1]} : vector<8x128xf32> to vector<8x64xf32>
    %439 = vector.extract_strided_slice %263 {offsets = [0, 128], sizes = [8, 64], strides = [1, 1]} : vector<8x192xf32> to vector<8x64xf32>
    %440 = vector.extract_strided_slice %428 {offsets = [0, 128], sizes = [8, 64], strides = [1, 1]} : vector<8x192xf32> to vector<8x64xf32>
    %441 = vector.broadcast %265 : vector<1x64xf32> to vector<8x64xf32>
    %442 = arith.addf %440, %441 : vector<8x64xf32>
    %443 = arith.mulf %437, %442 : vector<8x64xf32>
    %444 = arith.addf %439, %443 : vector<8x64xf32>
    %445 = math.tanh %444 : vector<8x64xf32>
    %cst_77 = arith.constant 1.000000e+00 : f32
    %446 = vector.broadcast %cst_77 : f32 to vector<8x64xf32>
    %447 = arith.subf %446, %438 : vector<8x64xf32>
    %448 = arith.mulf %447, %445 : vector<8x64xf32>
    %449 = arith.mulf %438, %427 : vector<8x64xf32>
    %450 = arith.addf %448, %449 : vector<8x64xf32>
    %451 = tpu.concatenate %236, %450 in 1 : vector<8x64xf32>, vector<8x64xf32> -> vector<8x128xf32>
    %c320 = arith.constant 320 : index
    %c0_78 = arith.constant 0 : index
    %452 = vector.load %arg1[%c320, %c0_78] : memref<488x192xf32, #tpu.memory_space<vmem>>, vector<128x32xf32>
    %cst_79 = arith.constant dense<0.000000e+00> : vector<8x32xf32>
    %453 = tpu.matmul %451, %452, %cst_79 {dimension_numbers = #tpu.dot_dimension_numbers<[1], [0], [0], [1], [0, 0, 1, 1], [], []>} : vector<8x128xf32>, vector<128x32xf32>, vector<8x32xf32> -> vector<8x32xf32>
    %c483 = arith.constant 483 : index
    %c0_80 = arith.constant 0 : index
    %454 = vector.load %arg1[%c483, %c0_80] : memref<488x192xf32, #tpu.memory_space<vmem>>, vector<1x32xf32>
    %455 = vector.broadcast %454 : vector<1x32xf32> to vector<8x32xf32>
    %456 = arith.addf %453, %455 : vector<8x32xf32>
    %457 = math.tanh %456 : vector<8x32xf32>
    %c448 = arith.constant 448 : index
    %c0_81 = arith.constant 0 : index
    %458 = vector.load %arg1[%c448, %c0_81] : memref<488x192xf32, #tpu.memory_space<vmem>>, vector<32x2xf32>
    %cst_82 = arith.constant dense<0.000000e+00> : vector<8x2xf32>
    %459 = tpu.matmul %457, %458, %cst_82 {dimension_numbers = #tpu.dot_dimension_numbers<[1], [0], [0], [1], [0, 0, 1, 1], [], []>} : vector<8x32xf32>, vector<32x2xf32>, vector<8x2xf32> -> vector<8x2xf32>
    %c484 = arith.constant 484 : index
    %c0_83 = arith.constant 0 : index
    %460 = vector.load %arg1[%c484, %c0_83] : memref<488x192xf32, #tpu.memory_space<vmem>>, vector<1x2xf32>
    %461 = vector.broadcast %460 : vector<1x2xf32> to vector<8x2xf32>
    %462 = arith.addf %459, %461 : vector<8x2xf32>
    %463 = vector.extract_strided_slice %462 {offsets = [0, 1], sizes = [8, 1], strides = [1, 1]} : vector<8x2xf32> to vector<8x1xf32>
    %464 = vector.extract_strided_slice %462 {offsets = [0, 0], sizes = [8, 1], strides = [1, 1]} : vector<8x2xf32> to vector<8x1xf32>
    %465 = arith.subf %463, %464 : vector<8x1xf32>
    %466 = arith.negf %465 : vector<8x1xf32>
    %467 = math.exp %466 : vector<8x1xf32>
    %cst_84 = arith.constant 1.000000e+00 : f32
    %468 = vector.broadcast %cst_84 : f32 to vector<8x1xf32>
    %469 = arith.addf %468, %467 : vector<8x1xf32>
    %470 = arith.divf %468, %469 : vector<8x1xf32>
    %471 = tpu.iota {dimensions = array<i32: 1>} : vector<8x2xi32>
    %c0_i32 = arith.constant 0 : i32
    %472 = vector.broadcast %c0_i32 : i32 to vector<8x2xi32>
    %473 = arith.cmpi eq, %471, %472 : vector<8x2xi32>
    %cst_85 = arith.constant 1.000000e+00 : f32
    %474 = vector.broadcast %cst_85 : f32 to vector<8x1xf32>
    %475 = arith.subf %474, %470 : vector<8x1xf32>
    %476 = vector.shape_cast %475 : vector<8x1xf32> to vector<8x1xf32>
    %477 = vector.broadcast %476 : vector<8x1xf32> to vector<8x2xf32>
    %478 = vector.shape_cast %470 : vector<8x1xf32> to vector<8x1xf32>
    %479 = vector.broadcast %478 : vector<8x1xf32> to vector<8x2xf32>
    %480 = arith.select %473, %477, %479 : vector<8x2xi1>, vector<8x2xf32>
    %481 = vector.extract_strided_slice %480 {offsets = [0, 0], sizes = [2, 2], strides = [1, 1]} : vector<8x2xf32> to vector<2x2xf32>
    %c0_86 = arith.constant 0 : index
    %c0_87 = arith.constant 0 : index
    %482 = vector.load %arg2[%c0_86, %c0_87] : memref<2x2xf32, #tpu.memory_space<vmem>>, vector<2x2xf32>
    tpu.vector_store %arg2[%c0_86, %c0_87], %481 {strides = array<i32>} : memref<2x2xf32, #tpu.memory_space<vmem>>, vector<2x2xf32>,
    return
  }
}

</mosaic_0001>

<llo_original>
// kernel: discriminator_forward.1
$region0: #{discriminator_forward.1}
  #allocation0 [shape = 'u32[]', space=smem, size = 0x4, offset = 0x4, fixed_abs, tag = 'smem constant byte address 0x4 - core index']
  #allocation1 [shape = 'u32[144,128]{1,0:T(1,128)}', space=vmem, size = 0x12000, scoped, tag = 'internal scratch']
  %s0 = inlined_call_operand.vmem [shape: s32[64,1], index: 0, kind: input, shape index: {}]
  %s1 = inlined_call_operand.vmem [shape: f32[488,192], index: 1, kind: input, shape index: {}]
  %s2 = inlined_call_operand.hbm [shape: f32[2,2], index: 2, kind: output, shape index: {}]
  %s3 = sld [smem:[#allocation0]]
  $region18: #{discriminator_forward.1} parent=0
    _
  %s5 = ssub.s32 1, %s3
  %s6 = scalar_select 0, %s5, %s3
  $region1: #{discriminator_forward.1} parent=0
    #allocation2 [shape = 'u8[1024]{0}', space=vmem, size = 0x400, scoped, tag = 'output window, operand 0, single buffered']
    #allocation3 [shape = 's32[1]{0}', space=sflag, size = 0x4, scoped, tag = 'scoped memory for discriminator_forward.1']
    %7 = vsyncpa [#allocation3], 0
    // Predicated region
    $region2: #{discriminator_forward.1} parent=1 // pred_check
      _
    $region3: #{discriminator_forward.1} parent=1 // pred_check_branch
      %9 = sbr.rel (0) target = $region5
    $region4: #{discriminator_forward.1} parent=1 // pred_region
      _
    $region5: #{discriminator_forward.1} parent=1 // pred_fallthru
      _
    // Predicated region
    $region6: #{discriminator_forward.1} parent=1 // pred_check
      _
    $region7: #{discriminator_forward.1} parent=1 // pred_check_branch
      %11 = sbr.rel (0) target = $region9
    $region8: #{discriminator_forward.1} parent=1 // pred_region
      _
    $region9: #{discriminator_forward.1} parent=1 // pred_fallthru
      _
    %v12 = vld [vmem:[%s0] sm:$0xff]
    %v13 = vld [vmem:[%s0 + $0x8] sm:$0xff]
    %v14 = vld [vmem:[%s0 + $0x10] sm:$0xff]
    %v15 = vld [vmem:[%s0 + $0x18] sm:$0xff]
    %v16 = vld [vmem:[%s0 + $0x20] sm:$0xff]
    %v17 = vld [vmem:[%s0 + $0x28] sm:$0xff]
    %v18 = vld [vmem:[%s0 + $0x30] sm:$0xff]
    %v19 = vld [vmem:[%s0 + $0x38] sm:$0xff]
    %v20 = vlaneseq
    %v21 = vand.u32 %v20, 127
    %22 = vset.pattern.permute.xlu0 0
    %23 = vperm.xlu0 %22, %v12
    %v24 = vpop.permute.xlu0 %23
    %25 = vset.pattern.permute.xlu0 0
    %26 = vperm.xlu0 %25, %v13
    %v27 = vpop.permute.xlu0 %26
    %28 = vset.pattern.permute.xlu0 0
    %29 = vperm.xlu0 %28, %v14
    %v30 = vpop.permute.xlu0 %29
    %31 = vset.pattern.permute.xlu0 0
    %32 = vperm.xlu0 %31, %v15
    %v33 = vpop.permute.xlu0 %32
    %34 = vset.pattern.permute.xlu0 0
    %35 = vperm.xlu0 %34, %v16
    %v36 = vpop.permute.xlu0 %35
    %37 = vset.pattern.permute.xlu0 0
    %38 = vperm.xlu0 %37, %v17
    %v39 = vpop.permute.xlu0 %38
    %40 = vset.pattern.permute.xlu0 0
    %41 = vperm.xlu0 %40, %v18
    %v42 = vpop.permute.xlu0 %41
    %43 = vset.pattern.permute.xlu0 0
    %44 = vperm.xlu0 %43, %v19
    %v45 = vpop.permute.xlu0 %44
    %vm46 = vcmp.eq.s32.totalorder %v21, %v24
    %vm47 = vcmp.eq.s32.totalorder %v21, %v27
    %vm48 = vcmp.eq.s32.totalorder %v21, %v30
    %vm49 = vcmp.eq.s32.totalorder %v21, %v33
    %vm50 = vcmp.eq.s32.totalorder %v21, %v36
    %vm51 = vcmp.eq.s32.totalorder %v21, %v39
    %vm52 = vcmp.eq.s32.totalorder %v21, %v42
    %vm53 = vcmp.eq.s32.totalorder %v21, %v45
    %v54 = vsel %vm46, 1, 0
    %v55 = vsel %vm47, 1, 0
    %v56 = vsel %vm48, 1, 0
    %v57 = vsel %vm49, 1, 0
    %v58 = vsel %vm50, 1, 0
    %v59 = vsel %vm51, 1, 0
    %v60 = vsel %vm52, 1, 0
    %v61 = vsel %vm53, 1, 0
    %v62 = vcvt.s32.f32 %v54
    %v63 = vcvt.s32.f32 %v55
    %v64 = vcvt.s32.f32 %v56
    %v65 = vcvt.s32.f32 %v57
    %v66 = vcvt.s32.f32 %v58
    %v67 = vcvt.s32.f32 %v59
    %v68 = vcvt.s32.f32 %v60
    %v69 = vcvt.s32.f32 %v61
    %v70 = vld [vmem:[%s1] sm:$0xff]
    %v71 = vld [vmem:[%s1 + $0x8] sm:$0xff]
    %v72 = vld [vmem:[%s1 + $0x10] sm:$0xff]
    %v73 = vld [vmem:[%s1 + $0x18] sm:$0xff]
    %v74 = vld [vmem:[%s1 + $0x20] sm:$0xff]
    %v75 = vld [vmem:[%s1 + $0x28] sm:$0xff]
    %v76 = vld [vmem:[%s1 + $0x30] sm:$0xff]
    %v77 = vld [vmem:[%s1 + $0x38] sm:$0xff]
    %vm78 = vcmask 261120
    %v80 = vsel %vm78, %v62, 0
    %v83 = vsel %vm78, %v63, 0
    %v86 = vsel %vm78, %v64, 0
    %v89 = vsel %vm78, %v65, 0
    %v92 = vsel %vm78, %v66, 0
    %v95 = vsel %vm78, %v67, 0
    %v98 = vsel %vm78, %v68, 0
    %v101 = vsel %vm78, %v69, 0
    %103 = vmatprep.subr.mxu0 %v71
    %104 = vmatpush1.msra.mxu0 %v70
    %105 = vmatprep.subr.mxu0 %v73
    %106 = vmatpush1.msra.mxu0 %v72
    %107 = vmatprep.subr.mxu0 %v75
    %108 = vmatpush1.msra.mxu0 %v74
    %109 = vmatprep.subr.mxu0 %v77
    %110 = vmatpush1.msra.mxu0 %v76
    %111 = vmatprep.subr.mxu0 0.0
    %112 = vmatpush1.msra.mxu0 0.0
    %113 = vmatprep.subr.mxu0 0.0
    %114 = vmatpush1.msra.mxu0 0.0
    %115 = vmatprep.subr.mxu0 0.0
    %116 = vmatpush1.msra.mxu0 0.0
    %117 = vmatprep.subr.mxu0 0.0
    %118 = vmatpush1.msra.mxu0 0.0
    %119 = vmatprep.subr.mxu0 0.0
    %120 = vmatpush1.msra.mxu0 0.0
    %121 = vmatprep.subr.mxu0 0.0
    %122 = vmatpush1.msra.mxu0 0.0
    %123 = vmatprep.subr.mxu0 0.0
    %124 = vmatpush1.msra.mxu0 0.0
    %125 = vmatprep.subr.mxu0 0.0
    %126 = vmatpush1.msra.mxu0 0.0
    %127 = vmatprep.subr.mxu0 0.0
    %128 = vmatpush1.msra.mxu0 0.0
    %129 = vmatprep.subr.mxu0 0.0
    %130 = vmatpush1.msra.mxu0 0.0
    %131 = vmatprep.subr.mxu0 0.0
    %132 = vmatpush1.msra.mxu0 0.0
    %133 = vmatprep.subr.mxu0 0.0
    %134 = vmatpush1.msra.mxu0 0.0
    %135 = vmatprep.subr.mxu0 0.0
    %136 = vmatpush1.msra.mxu0 0.0
    %137 = vmatprep.subr.mxu0 0.0
    %138 = vmatpush1.msra.mxu0 0.0
    %139 = vmatprep.subr.mxu0 0.0
    %140 = vmatpush1.msra.mxu0 0.0
    %141 = vmatprep.subr.mxu0 0.0
    %142 = vmatpush1.msra.mxu0 0.0
    %143 = vmatprep.subr.mxu0 0.0
    %144 = vmatpush1.msra.mxu0 0.0
    %145 = vmatprep.subr.mxu0 0.0
    %146 = vmatpush1.msra.mxu0 0.0
    %147 = vmatprep.subr.mxu0 0.0
    %148 = vmatpush1.msra.mxu0 0.0
    %149 = vmatprep.subr.mxu0 0.0
    %150 = vmatpush1.msra.mxu0 0.0
    %151 = vmatprep.subr.mxu0 0.0
    %152 = vmatpush1.msra.mxu0 0.0
    %153 = vmatprep.subr.mxu0 0.0
    %154 = vmatpush1.msra.mxu0 0.0
    %155 = vmatprep.subr.mxu0 0.0
    %156 = vmatpush1.msra.mxu0 0.0
    %157 = vmatprep.subr.mxu0 0.0
    %158 = vmatpush1.msra.mxu0 0.0
    %159 = vmatprep.subr.mxu0 0.0
    %160 = vmatpush1.msra.mxu0 0.0
    %161 = vmatprep.subr.mxu0 0.0
    %162 = vmatpush1.msra.mxu0 0.0
    %163 = vmatprep.subr.mxu0 0.0
    %164 = vmatpush1.msra.mxu0 0.0
    %165 = vmatprep.subr.mxu0 0.0
    %166 = vmatpush1.msra.mxu0 0.0
    %167 = vmatprep.mubr.f32.mxu0 0.0
    %168 = vmatmul.mubr.f32.gmra.mrb[0].mxu0 %v80
    %v169 = vpop.f32.mrb[0].mxu0
    %v170 = vadd.f32 0.0, %v169
    %v171 = vpop.f32.mrb[0].mxu0
    %v172 = vadd.f32 0.0, %v171
    %173 = vmatprep.mubr.f32.mxu0 0.0
    %174 = vmatmul.mubr.f32.gmra.mrb[0].mxu0 %v83
    %v175 = vpop.f32.mrb[0].mxu0
    %v176 = vadd.f32 0.0, %v175
    %v177 = vpop.f32.mrb[0].mxu0
    %v178 = vadd.f32 0.0, %v177
    %179 = vmatprep.mubr.f32.mxu0 0.0
    %180 = vmatmul.mubr.f32.gmra.mrb[0].mxu0 %v86
    %v181 = vpop.f32.mrb[0].mxu0
    %v182 = vadd.f32 0.0, %v181
    %v183 = vpop.f32.mrb[0].mxu0
    %v184 = vadd.f32 0.0, %v183
    %185 = vmatprep.mubr.f32.mxu0 0.0
    %186 = vmatmul.mubr.f32.gmra.mrb[0].mxu0 %v89
    %v187 = vpop.f32.mrb[0].mxu0
    %v188 = vadd.f32 0.0, %v187
    %v189 = vpop.f32.mrb[0].mxu0
    %v190 = vadd.f32 0.0, %v189
    %191 = vmatprep.mubr.f32.mxu0 0.0
    %192 = vmatmul.mubr.f32.gmra.mrb[0].mxu0 %v92
    %v193 = vpop.f32.mrb[0].mxu0
    %v194 = vadd.f32 0.0, %v193
    %v195 = vpop.f32.mrb[0].mxu0
    %v196 = vadd.f32 0.0, %v195
    %197 = vmatprep.mubr.f32.mxu0 0.0
    %198 = vmatmul.mubr.f32.gmra.mrb[0].mxu0 %v95
    %v199 = vpop.f32.mrb[0].mxu0
    %v200 = vadd.f32 0.0, %v199
    %v201 = vpop.f32.mrb[0].mxu0
    %v202 = vadd.f32 0.0, %v201
    %203 = vmatprep.mubr.f32.mxu0 0.0
    %204 = vmatmul.mubr.f32.gmra.mrb[0].mxu0 %v98
    %v205 = vpop.f32.mrb[0].mxu0
    %v206 = vadd.f32 0.0, %v205
    %v207 = vpop.f32.mrb[0].mxu0
    %v208 = vadd.f32 0.0, %v207
    %209 = vmatprep.mubr.f32.mxu0 0.0
    %210 = vmatmul.mubr.f32.gmra.mrb[0].mxu0 %v101
    %v211 = vpop.f32.mrb[0].mxu0
    %v212 = vadd.f32 0.0, %v211
    %v213 = vpop.f32.mrb[0].mxu0
    %v214 = vadd.f32 0.0, %v213
    %215 = vdwg.mxu0
    %v216 = vld [vmem:[%s1 + $0x40] sm:$0xff]
    %v217 = vld [vmem:[%s1 + $0x48] sm:$0xff]
    %v218 = vld [vmem:[%s1 + $0x50] sm:$0xff]
    %v219 = vld [vmem:[%s1 + $0x58] sm:$0xff]
    %v220 = vld [vmem:[%s1 + $0x60] sm:$0xff]
    %v221 = vld [vmem:[%s1 + $0x68] sm:$0xff]
    %v222 = vld [vmem:[%s1 + $0x70] sm:$0xff]
    %v223 = vld [vmem:[%s1 + $0x78] sm:$0xff]
    %224 = vmatprep.subr.mxu0 %v217
    %225 = vmatpush1.msra.mxu0 %v216
    %226 = vmatprep.subr.mxu0 %v219
    %227 = vmatpush1.msra.mxu0 %v218
    %228 = vmatprep.subr.mxu0 %v221
    %229 = vmatpush1.msra.mxu0 %v220
    %230 = vmatprep.subr.mxu0 %v223
    %231 = vmatpush1.msra.mxu0 %v222
    %232 = vmatprep.subr.mxu0 0.0
    %233 = vmatpush1.msra.mxu0 0.0
    %234 = vmatprep.subr.mxu0 0.0
    %235 = vmatpush1.msra.mxu0 0.0
    %236 = vmatprep.subr.mxu0 0.0
    %237 = vmatpush1.msra.mxu0 0.0
    %238 = vmatprep.subr.mxu0 0.0
    %239 = vmatpush1.msra.mxu0 0.0
    %240 = vmatprep.subr.mxu0 0.0
    %241 = vmatpush1.msra.mxu0 0.0
    %242 = vmatprep.subr.mxu0 0.0
    %243 = vmatpush1.msra.mxu0 0.0
    %244 = vmatprep.subr.mxu0 0.0
    %245 = vmatpush1.msra.mxu0 0.0
    %246 = vmatprep.subr.mxu0 0.0
    %247 = vmatpush1.msra.mxu0 0.0
    %248 = vmatprep.subr.mxu0 0.0
    %249 = vmatpush1.msra.mxu0 0.0
    %250 = vmatprep.subr.mxu0 0.0
    %251 = vmatpush1.msra.mxu0 0.0
    %252 = vmatprep.subr.mxu0 0.0
    %253 = vmatpush1.msra.mxu0 0.0
    %254 = vmatprep.subr.mxu0 0.0
    %255 = vmatpush1.msra.mxu0 0.0
    %256 = vmatprep.subr.mxu0 0.0
    %257 = vmatpush1.msra.mxu0 0.0
    %258 = vmatprep.subr.mxu0 0.0
    %259 = vmatpush1.msra.mxu0 0.0
    %260 = vmatprep.subr.mxu0 0.0
    %261 = vmatpush1.msra.mxu0 0.0
    %262 = vmatprep.subr.mxu0 0.0
    %263 = vmatpush1.msra.mxu0 0.0
    %264 = vmatprep.subr.mxu0 0.0
    %265 = vmatpush1.msra.mxu0 0.0
    %266 = vmatprep.subr.mxu0 0.0
    %267 = vmatpush1.msra.mxu0 0.0
    %268 = vmatprep.subr.mxu0 0.0
    %269 = vmatpush1.msra.mxu0 0.0
    %270 = vmatprep.subr.mxu0 0.0
    %271 = vmatpush1.msra.mxu0 0.0
    %272 = vmatprep.subr.mxu0 0.0
    %273 = vmatpush1.msra.mxu0 0.0
    %274 = vmatprep.subr.mxu0 0.0
    %275 = vmatpush1.msra.mxu0 0.0
    %276 = vmatprep.subr.mxu0 0.0
    %277 = vmatpush1.msra.mxu0 0.0
    %278 = vmatprep.subr.mxu0 0.0
    %279 = vmatpush1.msra.mxu0 0.0
    %280 = vmatprep.subr.mxu0 0.0
    %281 = vmatpush1.msra.mxu0 0.0
    %282 = vmatprep.subr.mxu0 0.0
    %283 = vmatpush1.msra.mxu0 0.0
    %284 = vmatprep.subr.mxu0 0.0
    %285 = vmatpush1.msra.mxu0 0.0
    %286 = vmatprep.subr.mxu0 0.0
    %287 = vmatpush1.msra.mxu0 0.0
    %288 = vmatprep.mubr.f32.mxu0 0.0
    %289 = vmatmul.mubr.f32.gmra.mrb[0].mxu0 %v80
    %v290 = vpop.f32.mrb[0].mxu0
    %v291 = vadd.f32 0.0, %v290
    %v292 = vpop.f32.mrb[0].mxu0
    %v293 = vadd.f32 0.0, %v292
    %294 = vmatprep.mubr.f32.mxu0 0.0
    %295 = vmatmul.mubr.f32.gmra.mrb[0].mxu0 %v83
    %v296 = vpop.f32.mrb[0].mxu0
    %v297 = vadd.f32 0.0, %v296
    %v298 = vpop.f32.mrb[0].mxu0
    %v299 = vadd.f32 0.0, %v298
    %300 = vmatprep.mubr.f32.mxu0 0.0
    %301 = vmatmul.mubr.f32.gmra.mrb[0].mxu0 %v86
    %v302 = vpop.f32.mrb[0].mxu0
    %v303 = vadd.f32 0.0, %v302
    %v304 = vpop.f32.mrb[0].mxu0
    %v305 = vadd.f32 0.0, %v304
    %306 = vmatprep.mubr.f32.mxu0 0.0
    %307 = vmatmul.mubr.f32.gmra.mrb[0].mxu0 %v89
    %v308 = vpop.f32.mrb[0].mxu0
    %v309 = vadd.f32 0.0, %v308
    %v310 = vpop.f32.mrb[0].mxu0
    %v311 = vadd.f32 0.0, %v310
    %312 = vmatprep.mubr.f32.mxu0 0.0
    %313 = vmatmul.mubr.f32.gmra.mrb[0].mxu0 %v92
    %v314 = vpop.f32.mrb[0].mxu0
    %v315 = vadd.f32 0.0, %v314
    %v316 = vpop.f32.mrb[0].mxu0
    %v317 = vadd.f32 0.0, %v316
    %318 = vmatprep.mubr.f32.mxu0 0.0
    %319 = vmatmul.mubr.f32.gmra.mrb[0].mxu0 %v95
    %v320 = vpop.f32.mrb[0].mxu0
    %v321 = vadd.f32 0.0, %v320
    %v322 = vpop.f32.mrb[0].mxu0
    %v323 = vadd.f32 0.0, %v322
    %324 = vmatprep.mubr.f32.mxu0 0.0
    %325 = vmatmul.mubr.f32.gmra.mrb[0].mxu0 %v98
    %v326 = vpop.f32.mrb[0].mxu0
    %v327 = vadd.f32 0.0, %v326
    %v328 = vpop.f32.mrb[0].mxu0
    %v329 = vadd.f32 0.0, %v328
    %330 = vmatprep.mubr.f32.mxu0 0.0
    %331 = vmatmul.mubr.f32.gmra.mrb[0].mxu0 %v101
    %v332 = vpop.f32.mrb[0].mxu0
    %v333 = vadd.f32 0.0, %v332
    %v334 = vpop.f32.mrb[0].mxu0
    %v335 = vadd.f32 0.0, %v334
    %336 = vdwg.mxu0
    %v337 = vadd.f32 %v170, %v333
    %v338 = vadd.f32 %v172, %v335
    %v339 = vadd.f32 %v176, %v327
    %v340 = vadd.f32 %v178, %v329
    %v341 = vadd.f32 %v182, %v321
    %v342 = vadd.f32 %v184, %v323
    %v343 = vadd.f32 %v188, %v315
    %v344 = vadd.f32 %v190, %v317
    %v345 = vadd.f32 %v194, %v309
    %v346 = vadd.f32 %v196, %v311
    %v347 = vadd.f32 %v200, %v303
    %v348 = vadd.f32 %v202, %v305
    %v349 = vadd.f32 %v206, %v297
    %v350 = vadd.f32 %v208, %v299
    %v351 = vadd.f32 %v212, %v291
    %v352 = vadd.f32 %v214, %v293
    %v353 = vld [vmem:[%s1 + $0x80] sm:$0xff]
    %v354 = vld [vmem:[%s1 + $0x88] sm:$0xff]
    %v355 = vld [vmem:[%s1 + $0x90] sm:$0xff]
    %v356 = vld [vmem:[%s1 + $0x98] sm:$0xff]
    %v357 = vld [vmem:[%s1 + $0xa0] sm:$0xff]
    %v358 = vld [vmem:[%s1 + $0xa8] sm:$0xff]
    %v359 = vld [vmem:[%s1 + $0xb0] sm:$0xff]
    %v360 = vld [vmem:[%s1 + $0xb8] sm:$0xff]
    %v361 = vld [vmem:[%s1 + $0xc0] sm:$0xff]
    %v362 = vld [vmem:[%s1 + $0xc8] sm:$0xff]
    %v363 = vld [vmem:[%s1 + $0xd0] sm:$0xff]
    %v364 = vld [vmem:[%s1 + $0xd8] sm:$0xff]
    %v365 = vld [vmem:[%s1 + $0xe0] sm:$0xff]
    %v366 = vld [vmem:[%s1 + $0xe8] sm:$0xff]
    %v367 = vld [vmem:[%s1 + $0xf0] sm:$0xff]
    %v368 = vld [vmem:[%s1 + $0xf8] sm:$0xff]
    %v369 = vld [vmem:[%s1 + $0x3c1] ss:$0 sm:$0xff]
    %v370 = vld [vmem:[%s1 + $0x100] sm:$0xff]
    %v371 = vld [vmem:[%s1 + $0x108] sm:$0xff]
    %v372 = vld [vmem:[%s1 + $0x110] sm:$0xff]
    %v373 = vld [vmem:[%s1 + $0x118] sm:$0xff]
    %v374 = vld [vmem:[%s1 + $0x120] sm:$0xff]
    %v375 = vld [vmem:[%s1 + $0x128] sm:$0xff]
    %v376 = vld [vmem:[%s1 + $0x130] sm:$0xff]
    %v377 = vld [vmem:[%s1 + $0x138] sm:$0xff]
    %v378 = vld [vmem:[%s1 + $0x140] sm:$0xff]
    %v379 = vld [vmem:[%s1 + $0x148] sm:$0xff]
    %v380 = vld [vmem:[%s1 + $0x150] sm:$0xff]
    %v381 = vld [vmem:[%s1 + $0x158] sm:$0xff]
    %v382 = vld [vmem:[%s1 + $0x160] sm:$0xff]
    %v383 = vld [vmem:[%s1 + $0x168] sm:$0xff]
    %v384 = vld [vmem:[%s1 + $0x170] sm:$0xff]
    %v385 = vld [vmem:[%s1 + $0x178] sm:$0xff]
    %v386 = vld [vmem:[%s1 + $0x180] sm:$0xff]
    %v387 = vld [vmem:[%s1 + $0x188] sm:$0xff]
    %v388 = vld [vmem:[%s1 + $0x190] sm:$0xff]
    %v389 = vld [vmem:[%s1 + $0x198] sm:$0xff]
    %v390 = vld [vmem:[%s1 + $0x1a0] sm:$0xff]
    %v391 = vld [vmem:[%s1 + $0x1a8] sm:$0xff]
    %v392 = vld [vmem:[%s1 + $0x1b0] sm:$0xff]
    %v393 = vld [vmem:[%s1 + $0x1b8] sm:$0xff]
    %v394 = vld [vmem:[%s1 + $0x1c0] sm:$0xff]
    %v395 = vld [vmem:[%s1 + $0x1c8] sm:$0xff]
    %v396 = vld [vmem:[%s1 + $0x1d0] sm:$0xff]
    %v397 = vld [vmem:[%s1 + $0x1d8] sm:$0xff]
    %v398 = vld [vmem:[%s1 + $0x1e0] sm:$0xff]
    %v399 = vld [vmem:[%s1 + $0x1e8] sm:$0xff]
    %v400 = vld [vmem:[%s1 + $0x1f0] sm:$0xff]
    %v401 = vld [vmem:[%s1 + $0x1f8] sm:$0xff]
    %vm402 = vcmask 523264
    %v404 = vsel %vm402, 0.0, 0
    %406 = vmatprep.subr.mxu0 %v354
    %407 = vmatpush1.msra.mxu0 %v353
    %408 = vmatprep.subr.mxu0 %v356
    %409 = vmatpush1.msra.mxu0 %v355
    %410 = vmatprep.subr.mxu0 %v358
    %411 = vmatpush1.msra.mxu0 %v357
    %412 = vmatprep.subr.mxu0 %v360
    %413 = vmatpush1.msra.mxu0 %v359
    %414 = vmatprep.subr.mxu0 %v362
    %415 = vmatpush1.msra.mxu0 %v361
    %416 = vmatprep.subr.mxu0 %v364
    %417 = vmatpush1.msra.mxu0 %v363
    %418 = vmatprep.subr.mxu0 %v366
    %419 = vmatpush1.msra.mxu0 %v365
    %420 = vmatprep.subr.mxu0 %v368
    %421 = vmatpush1.msra.mxu0 %v367
    %422 = vmatprep.subr.mxu0 0.0
    %423 = vmatpush1.msra.mxu0 0.0
    %424 = vmatprep.subr.mxu0 0.0
    %425 = vmatpush1.msra.mxu0 0.0
    %426 = vmatprep.subr.mxu0 0.0
    %427 = vmatpush1.msra.mxu0 0.0
    %428 = vmatprep.subr.mxu0 0.0
    %429 = vmatpush1.msra.mxu0 0.0
    %430 = vmatprep.subr.mxu0 0.0
    %431 = vmatpush1.msra.mxu0 0.0
    %432 = vmatprep.subr.mxu0 0.0
    %433 = vmatpush1.msra.mxu0 0.0
    %434 = vmatprep.subr.mxu0 0.0
    %435 = vmatpush1.msra.mxu0 0.0
    %436 = vmatprep.subr.mxu0 0.0
    %437 = vmatpush1.msra.mxu0 0.0
    %438 = vmatprep.subr.mxu0 0.0
    %439 = vmatpush1.msra.mxu0 0.0
    %440 = vmatprep.subr.mxu0 0.0
    %441 = vmatpush1.msra.mxu0 0.0
    %442 = vmatprep.subr.mxu0 0.0
    %443 = vmatpush1.msra.mxu0 0.0
    %444 = vmatprep.subr.mxu0 0.0
    %445 = vmatpush1.msra.mxu0 0.0
    %446 = vmatprep.subr.mxu0 0.0
    %447 = vmatpush1.msra.mxu0 0.0
    %448 = vmatprep.subr.mxu0 0.0
    %449 = vmatpush1.msra.mxu0 0.0
    %450 = vmatprep.subr.mxu0 0.0
    %451 = vmatpush1.msra.mxu0 0.0
    %452 = vmatprep.subr.mxu0 0.0
    %453 = vmatpush1.msra.mxu0 0.0
    %454 = vmatprep.subr.mxu0 0.0
    %455 = vmatpush1.msra.mxu0 0.0
    %456 = vmatprep.subr.mxu0 0.0
    %457 = vmatpush1.msra.mxu0 0.0
    %458 = vmatprep.subr.mxu0 0.0
    %459 = vmatpush1.msra.mxu0 0.0
    %460 = vmatprep.subr.mxu0 0.0
    %461 = vmatpush1.msra.mxu0 0.0
    %462 = vmatprep.subr.mxu0 0.0
    %463 = vmatpush1.msra.mxu0 0.0
    %464 = vmatprep.subr.mxu0 0.0
    %465 = vmatpush1.msra.mxu0 0.0
    %466 = vmatprep.subr.mxu0 0.0
    %467 = vmatpush1.msra.mxu0 0.0
    %468 = vmatprep.subr.mxu0 0.0
    %469 = vmatpush1.msra.mxu0 0.0
    %470 = vmatprep.mubr.f32.mxu0 0.0
    %471 = vmatmul.mubr.f32.gmra.mrb[0].mxu0 %v404
    %v472 = vpop.f32.mrb[0].mxu0
    %v473 = vadd.f32 0.0, %v472
    %v474 = vpop.f32.mrb[0].mxu0
    %v475 = vadd.f32 0.0, %v474
    %476 = vdwg.mxu0
    %v477 = vadd.f32 %v337, %v473
    %v478 = vxor.u32 %v477, 2147483648
    %v479 = vmul.f32 %v478, 1.442695
    %v480 = vpow.pop %v479
    %v481 = vadd.f32 %v480, 1.0
    %v482 = vrcp.pop %v481
    %v483 = vmul.f32 1.0, %v482
    %v484 = vadd.f32 %v475, %v369
    %v485 = vmul.f32 %v483, %v484
    %v486 = vadd.f32 %v338, %v485
    %v487 = vtanh.pop %v486
    %v488 = vsub.f32 1.0, %v483
    %490 = vrot.lane.b32.xlu0 %v487, 64
    %v491 = vpop.permute.xlu0 %490
    %v493 = vmul.f32 %v488, %v491
    %v494 = vmul.f32 %v483, 0.0
    %v495 = vadd.f32 %v493, %v494
    %497 = vrot.lane.b32.xlu0 %v495, 64
    %v498 = vpop.permute.xlu0 %497
    %v499 = vsel %vm402, %v498, 0
    %501 = vmatprep.subr.mxu0 %v387
    %502 = vmatpush1.msra.mxu0 %v386
    %503 = vmatprep.subr.mxu0 %v389
    %504 = vmatpush1.msra.mxu0 %v388
    %505 = vmatprep.subr.mxu0 %v391
    %506 = vmatpush1.msra.mxu0 %v390
    %507 = vmatprep.subr.mxu0 %v393
    %508 = vmatpush1.msra.mxu0 %v392
    %509 = vmatprep.subr.mxu0 %v395
    %510 = vmatpush1.msra.mxu0 %v394
    %511 = vmatprep.subr.mxu0 %v397
    %512 = vmatpush1.msra.mxu0 %v396
    %513 = vmatprep.subr.mxu0 %v399
    %514 = vmatpush1.msra.mxu0 %v398
    %515 = vmatprep.subr.mxu0 %v401
    %516 = vmatpush1.msra.mxu0 %v400
    %517 = vmatprep.subr.mxu0 0.0
    %518 = vmatpush1.msra.mxu0 0.0
    %519 = vmatprep.subr.mxu0 0.0
    %520 = vmatpush1.msra.mxu0 0.0
    %521 = vmatprep.subr.mxu0 0.0
    %522 = vmatpush1.msra.mxu0 0.0
    %523 = vmatprep.subr.mxu0 0.0
    %524 = vmatpush1.msra.mxu0 0.0
    %525 = vmatprep.subr.mxu0 0.0
    %526 = vmatpush1.msra.mxu0 0.0
    %527 = vmatprep.subr.mxu0 0.0
    %528 = vmatpush1.msra.mxu0 0.0
    %529 = vmatprep.subr.mxu0 0.0
    %530 = vmatpush1.msra.mxu0 0.0
    %531 = vmatprep.subr.mxu0 0.0
    %532 = vmatpush1.msra.mxu0 0.0
    %533 = vmatprep.subr.mxu0 0.0
    %534 = vmatpush1.msra.mxu0 0.0
    %535 = vmatprep.subr.mxu0 0.0
    %536 = vmatpush1.msra.mxu0 0.0
    %537 = vmatprep.subr.mxu0 0.0
    %538 = vmatpush1.msra.mxu0 0.0
    %539 = vmatprep.subr.mxu0 0.0
    %540 = vmatpush1.msra.mxu0 0.0
    %541 = vmatprep.subr.mxu0 0.0
    %542 = vmatpush1.msra.mxu0 0.0
    %543 = vmatprep.subr.mxu0 0.0
    %544 = vmatpush1.msra.mxu0 0.0
    %545 = vmatprep.subr.mxu0 0.0
    %546 = vmatpush1.msra.mxu0 0.0
    %547 = vmatprep.subr.mxu0 0.0
    %548 = vmatpush1.msra.mxu0 0.0
    %549 = vmatprep.subr.mxu0 0.0
    %550 = vmatpush1.msra.mxu0 0.0
    %551 = vmatprep.subr.mxu0 0.0
    %552 = vmatpush1.msra.mxu0 0.0
    %553 = vmatprep.subr.mxu0 0.0
    %554 = vmatpush1.msra.mxu0 0.0
    %555 = vmatprep.subr.mxu0 0.0
    %556 = vmatpush1.msra.mxu0 0.0
    %557 = vmatprep.subr.mxu0 0.0
    %558 = vmatpush1.msra.mxu0 0.0
    %559 = vmatprep.subr.mxu0 0.0
    %560 = vmatpush1.msra.mxu0 0.0
    %561 = vmatprep.subr.mxu0 0.0
    %562 = vmatpush1.msra.mxu0 0.0
    %563 = vmatprep.subr.mxu0 0.0
    %564 = vmatpush1.msra.mxu0 0.0
    %565 = vmatprep.mubr.f32.mxu0 0.0
    %566 = vmatmul.mubr.f32.gmra.mrb[0].mxu0 %v499
    %v567 = vpop.f32.mrb[0].mxu0
    %v568 = vadd.f32 0.0, %v567
    %v569 = vpop.f32.mrb[0].mxu0
    %v570 = vadd.f32 0.0, %v569
    %571 = vdwg.mxu0
    %572 = vmatprep.subr.mxu0 %v354
    %573 = vmatpush1.msra.mxu0 %v353
    %574 = vmatprep.subr.mxu0 %v356
    %575 = vmatpush1.msra.mxu0 %v355
    %576 = vmatprep.subr.mxu0 %v358
    %577 = vmatpush1.msra.mxu0 %v357
    %578 = vmatprep.subr.mxu0 %v360
    %579 = vmatpush1.msra.mxu0 %v359
    %580 = vmatprep.subr.mxu0 %v362
    %581 = vmatpush1.msra.mxu0 %v361
    %582 = vmatprep.subr.mxu0 %v364
    %583 = vmatpush1.msra.mxu0 %v363
    %584 = vmatprep.subr.mxu0 %v366
    %585 = vmatpush1.msra.mxu0 %v365
    %586 = vmatprep.subr.mxu0 %v368
    %587 = vmatpush1.msra.mxu0 %v367
    %588 = vmatprep.subr.mxu0 0.0
    %589 = vmatpush1.msra.mxu0 0.0
    %590 = vmatprep.subr.mxu0 0.0
    %591 = vmatpush1.msra.mxu0 0.0
    %592 = vmatprep.subr.mxu0 0.0
    %593 = vmatpush1.msra.mxu0 0.0
    %594 = vmatprep.subr.mxu0 0.0
    %595 = vmatpush1.msra.mxu0 0.0
    %596 = vmatprep.subr.mxu0 0.0
    %597 = vmatpush1.msra.mxu0 0.0
    %598 = vmatprep.subr.mxu0 0.0
    %599 = vmatpush1.msra.mxu0 0.0
    %600 = vmatprep.subr.mxu0 0.0
    %601 = vmatpush1.msra.mxu0 0.0
    %602 = vmatprep.subr.mxu0 0.0
    %603 = vmatpush1.msra.mxu0 0.0
    %604 = vmatprep.subr.mxu0 0.0
    %605 = vmatpush1.msra.mxu0 0.0
    %606 = vmatprep.subr.mxu0 0.0
    %607 = vmatpush1.msra.mxu0 0.0
    %608 = vmatprep.subr.mxu0 0.0
    %609 = vmatpush1.msra.mxu0 0.0
    %610 = vmatprep.subr.mxu0 0.0
    %611 = vmatpush1.msra.mxu0 0.0
    %612 = vmatprep.subr.mxu0 0.0
    %613 = vmatpush1.msra.mxu0 0.0
    %614 = vmatprep.subr.mxu0 0.0
    %615 = vmatpush1.msra.mxu0 0.0
    %616 = vmatprep.subr.mxu0 0.0
    %617 = vmatpush1.msra.mxu0 0.0
    %618 = vmatprep.subr.mxu0 0.0
    %619 = vmatpush1.msra.mxu0 0.0
    %620 = vmatprep.subr.mxu0 0.0
    %621 = vmatpush1.msra.mxu0 0.0
    %622 = vmatprep.subr.mxu0 0.0
    %623 = vmatpush1.msra.mxu0 0.0
    %624 = vmatprep.subr.mxu0 0.0
    %625 = vmatpush1.msra.mxu0 0.0
    %626 = vmatprep.subr.mxu0 0.0
    %627 = vmatpush1.msra.mxu0 0.0
    %628 = vmatprep.subr.mxu0 0.0
    %629 = vmatpush1.msra.mxu0 0.0
    %630 = vmatprep.subr.mxu0 0.0
    %631 = vmatpush1.msra.mxu0 0.0
    %632 = vmatprep.subr.mxu0 0.0
    %633 = vmatpush1.msra.mxu0 0.0
    %634 = vmatprep.subr.mxu0 0.0
    %635 = vmatpush1.msra.mxu0 0.0
    %636 = vmatprep.mubr.f32.mxu0 0.0
    %637 = vmatmul.mubr.f32.gmra.mrb[0].mxu0 %v499
    %v638 = vpop.f32.mrb[0].mxu0
    %v639 = vadd.f32 0.0, %v638
    %v640 = vpop.f32.mrb[0].mxu0
    %v641 = vadd.f32 0.0, %v640
    %642 = vdwg.mxu0
    %v643 = vadd.f32 %v339, %v639
    %v644 = vxor.u32 %v643, 2147483648
    %v645 = vmul.f32 %v644, 1.442695
    %v646 = vpow.pop %v645
    %v647 = vadd.f32 %v646, 1.0
    %v648 = vrcp.pop %v647
    %v649 = vmul.f32 1.0, %v648
    %v650 = vadd.f32 %v641, %v369
    %v651 = vmul.f32 %v649, %v650
    %v652 = vadd.f32 %v340, %v651
    %v653 = vtanh.pop %v652
    %v654 = vsub.f32 1.0, %v649
    %656 = vrot.lane.b32.xlu0 %v653, 64
    %v657 = vpop.permute.xlu0 %656
    %v659 = vmul.f32 %v654, %v657
    %v660 = vmul.f32 %v649, %v495
    %v661 = vadd.f32 %v659, %v660
    %663 = vrot.lane.b32.xlu0 %v661, 64
    %v664 = vpop.permute.xlu0 %663
    %v665 = vsel %vm402, %v664, 0
    %667 = vmatprep.subr.mxu0 %v387
    %668 = vmatpush1.msra.mxu0 %v386
    %669 = vmatprep.subr.mxu0 %v389
    %670 = vmatpush1.msra.mxu0 %v388
    %671 = vmatprep.subr.mxu0 %v391
    %672 = vmatpush1.msra.mxu0 %v390
    %673 = vmatprep.subr.mxu0 %v393
    %674 = vmatpush1.msra.mxu0 %v392
    %675 = vmatprep.subr.mxu0 %v395
    %676 = vmatpush1.msra.mxu0 %v394
    %677 = vmatprep.subr.mxu0 %v397
    %678 = vmatpush1.msra.mxu0 %v396
    %679 = vmatprep.subr.mxu0 %v399
    %680 = vmatpush1.msra.mxu0 %v398
    %681 = vmatprep.subr.mxu0 %v401
    %682 = vmatpush1.msra.mxu0 %v400
    %683 = vmatprep.subr.mxu0 0.0
    %684 = vmatpush1.msra.mxu0 0.0
    %685 = vmatprep.subr.mxu0 0.0
    %686 = vmatpush1.msra.mxu0 0.0
    %687 = vmatprep.subr.mxu0 0.0
    %688 = vmatpush1.msra.mxu0 0.0
    %689 = vmatprep.subr.mxu0 0.0
    %690 = vmatpush1.msra.mxu0 0.0
    %691 = vmatprep.subr.mxu0 0.0
    %692 = vmatpush1.msra.mxu0 0.0
    %693 = vmatprep.subr.mxu0 0.0
    %694 = vmatpush1.msra.mxu0 0.0
    %695 = vmatprep.subr.mxu0 0.0
    %696 = vmatpush1.msra.mxu0 0.0
    %697 = vmatprep.subr.mxu0 0.0
    %698 = vmatpush1.msra.mxu0 0.0
    %699 = vmatprep.subr.mxu0 0.0
    %700 = vmatpush1.msra.mxu0 0.0
    %701 = vmatprep.subr.mxu0 0.0
    %702 = vmatpush1.msra.mxu0 0.0
    %703 = vmatprep.subr.mxu0 0.0
    %704 = vmatpush1.msra.mxu0 0.0
    %705 = vmatprep.subr.mxu0 0.0
    %706 = vmatpush1.msra.mxu0 0.0
    %707 = vmatprep.subr.mxu0 0.0
    %708 = vmatpush1.msra.mxu0 0.0
    %709 = vmatprep.subr.mxu0 0.0
    %710 = vmatpush1.msra.mxu0 0.0
    %711 = vmatprep.subr.mxu0 0.0
    %712 = vmatpush1.msra.mxu0 0.0
    %713 = vmatprep.subr.mxu0 0.0
    %714 = vmatpush1.msra.mxu0 0.0
    %715 = vmatprep.subr.mxu0 0.0
    %716 = vmatpush1.msra.mxu0 0.0
    %717 = vmatprep.subr.mxu0 0.0
    %718 = vmatpush1.msra.mxu0 0.0
    %719 = vmatprep.subr.mxu0 0.0
    %720 = vmatpush1.msra.mxu0 0.0
    %721 = vmatprep.subr.mxu0 0.0
    %722 = vmatpush1.msra.mxu0 0.0
    %723 = vmatprep.subr.mxu0 0.0
    %724 = vmatpush1.msra.mxu0 0.0
    %725 = vmatprep.subr.mxu0 0.0
    %726 = vmatpush1.msra.mxu0 0.0
    %727 = vmatprep.subr.mxu0 0.0
    %728 = vmatpush1.msra.mxu0 0.0
    %729 = vmatprep.subr.mxu0 0.0
    %730 = vmatpush1.msra.mxu0 0.0
    %731 = vmatprep.mubr.f32.mxu0 0.0
    %732 = vmatmul.mubr.f32.gmra.mrb[0].mxu0 %v665
    %v733 = vpop.f32.mrb[0].mxu0
    %v734 = vadd.f32 0.0, %v733
    %v735 = vpop.f32.mrb[0].mxu0
    %v736 = vadd.f32 0.0, %v735
    %737 = vdwg.mxu0
    %738 = vmatprep.subr.mxu0 %v354
    %739 = vmatpush1.msra.mxu0 %v353
    %740 = vmatprep.subr.mxu0 %v356
    %741 = vmatpush1.msra.mxu0 %v355
    %742 = vmatprep.subr.mxu0 %v358
    %743 = vmatpush1.msra.mxu0 %v357
    %744 = vmatprep.subr.mxu0 %v360
    %745 = vmatpush1.msra.mxu0 %v359
    %746 = vmatprep.subr.mxu0 %v362
    %747 = vmatpush1.msra.mxu0 %v361
    %748 = vmatprep.subr.mxu0 %v364
    %749 = vmatpush1.msra.mxu0 %v363
    %750 = vmatprep.subr.mxu0 %v366
    %751 = vmatpush1.msra.mxu0 %v365
    %752 = vmatprep.subr.mxu0 %v368
    %753 = vmatpush1.msra.mxu0 %v367
    %754 = vmatprep.subr.mxu0 0.0
    %755 = vmatpush1.msra.mxu0 0.0
    %756 = vmatprep.subr.mxu0 0.0
    %757 = vmatpush1.msra.mxu0 0.0
    %758 = vmatprep.subr.mxu0 0.0
    %759 = vmatpush1.msra.mxu0 0.0
    %760 = vmatprep.subr.mxu0 0.0
    %761 = vmatpush1.msra.mxu0 0.0
    %762 = vmatprep.subr.mxu0 0.0
    %763 = vmatpush1.msra.mxu0 0.0
    %764 = vmatprep.subr.mxu0 0.0
    %765 = vmatpush1.msra.mxu0 0.0
    %766 = vmatprep.subr.mxu0 0.0
    %767 = vmatpush1.msra.mxu0 0.0
    %768 = vmatprep.subr.mxu0 0.0
    %769 = vmatpush1.msra.mxu0 0.0
    %770 = vmatprep.subr.mxu0 0.0
    %771 = vmatpush1.msra.mxu0 0.0
    %772 = vmatprep.subr.mxu0 0.0
    %773 = vmatpush1.msra.mxu0 0.0
    %774 = vmatprep.subr.mxu0 0.0
    %775 = vmatpush1.msra.mxu0 0.0
    %776 = vmatprep.subr.mxu0 0.0
    %777 = vmatpush1.msra.mxu0 0.0
    %778 = vmatprep.subr.mxu0 0.0
    %779 = vmatpush1.msra.mxu0 0.0
    %780 = vmatprep.subr.mxu0 0.0
    %781 = vmatpush1.msra.mxu0 0.0
    %782 = vmatprep.subr.mxu0 0.0
    %783 = vmatpush1.msra.mxu0 0.0
    %784 = vmatprep.subr.mxu0 0.0
    %785 = vmatpush1.msra.mxu0 0.0
    %786 = vmatprep.subr.mxu0 0.0
    %787 = vmatpush1.msra.mxu0 0.0
    %788 = vmatprep.subr.mxu0 0.0
    %789 = vmatpush1.msra.mxu0 0.0
    %790 = vmatprep.subr.mxu0 0.0
    %791 = vmatpush1.msra.mxu0 0.0
    %792 = vmatprep.subr.mxu0 0.0
    %793 = vmatpush1.msra.mxu0 0.0
    %794 = vmatprep.subr.mxu0 0.0
    %795 = vmatpush1.msra.mxu0 0.0
    %796 = vmatprep.subr.mxu0 0.0
    %797 = vmatpush1.msra.mxu0 0.0
    %798 = vmatprep.subr.mxu0 0.0
    %799 = vmatpush1.msra.mxu0 0.0
    %800 = vmatprep.subr.mxu0 0.0
    %801 = vmatpush1.msra.mxu0 0.0
    %802 = vmatprep.mubr.f32.mxu0 0.0
    %803 = vmatmul.mubr.f32.gmra.mrb[0].mxu0 %v665
    %v804 = vpop.f32.mrb[0].mxu0
    %v805 = vadd.f32 0.0, %v804
    %v806 = vpop.f32.mrb[0].mxu0
    %v807 = vadd.f32 0.0, %v806
    %808 = vdwg.mxu0
    %v809 = vadd.f32 %v341, %v805
    %v810 = vxor.u32 %v809, 2147483648
    %v811 = vmul.f32 %v810, 1.442695
    %v812 = vpow.pop %v811
    %v813 = vadd.f32 %v812, 1.0
    %v814 = vrcp.pop %v813
    %v815 = vmul.f32 1.0, %v814
    %v816 = vadd.f32 %v807, %v369
    %v817 = vmul.f32 %v815, %v816
    %v818 = vadd.f32 %v342, %v817
    %v819 = vtanh.pop %v818
    %v820 = vsub.f32 1.0, %v815
    %822 = vrot.lane.b32.xlu0 %v819, 64
    %v823 = vpop.permute.xlu0 %822
    %v825 = vmul.f32 %v820, %v823
    %v826 = vmul.f32 %v815, %v661
    %v827 = vadd.f32 %v825, %v826
    %829 = vrot.lane.b32.xlu0 %v827, 64
    %v830 = vpop.permute.xlu0 %829
    %v831 = vsel %vm402, %v830, 0
    %833 = vmatprep.subr.mxu0 %v387
    %834 = vmatpush1.msra.mxu0 %v386
    %835 = vmatprep.subr.mxu0 %v389
    %836 = vmatpush1.msra.mxu0 %v388
    %837 = vmatprep.subr.mxu0 %v391
    %838 = vmatpush1.msra.mxu0 %v390
    %839 = vmatprep.subr.mxu0 %v393
    %840 = vmatpush1.msra.mxu0 %v392
    %841 = vmatprep.subr.mxu0 %v395
    %842 = vmatpush1.msra.mxu0 %v394
    %843 = vmatprep.subr.mxu0 %v397
    %844 = vmatpush1.msra.mxu0 %v396
    %845 = vmatprep.subr.mxu0 %v399
    %846 = vmatpush1.msra.mxu0 %v398
    %847 = vmatprep.subr.mxu0 %v401
    %848 = vmatpush1.msra.mxu0 %v400
    %849 = vmatprep.subr.mxu0 0.0
    %850 = vmatpush1.msra.mxu0 0.0
    %851 = vmatprep.subr.mxu0 0.0
    %852 = vmatpush1.msra.mxu0 0.0
    %853 = vmatprep.subr.mxu0 0.0
    %854 = vmatpush1.msra.mxu0 0.0
    %855 = vmatprep.subr.mxu0 0.0
    %856 = vmatpush1.msra.mxu0 0.0
    %857 = vmatprep.subr.mxu0 0.0
    %858 = vmatpush1.msra.mxu0 0.0
    %859 = vmatprep.subr.mxu0 0.0
    %860 = vmatpush1.msra.mxu0 0.0
    %861 = vmatprep.subr.mxu0 0.0
    %862 = vmatpush1.msra.mxu0 0.0
    %863 = vmatprep.subr.mxu0 0.0
    %864 = vmatpush1.msra.mxu0 0.0
    %865 = vmatprep.subr.mxu0 0.0
    %866 = vmatpush1.msra.mxu0 0.0
    %867 = vmatprep.subr.mxu0 0.0
    %868 = vmatpush1.msra.mxu0 0.0
    %869 = vmatprep.subr.mxu0 0.0
    %870 = vmatpush1.msra.mxu0 0.0
    %871 = vmatprep.subr.mxu0 0.0
    %872 = vmatpush1.msra.mxu0 0.0
    %873 = vmatprep.subr.mxu0 0.0
    %874 = vmatpush1.msra.mxu0 0.0
    %875 = vmatprep.subr.mxu0 0.0
    %876 = vmatpush1.msra.mxu0 0.0
    %877 = vmatprep.subr.mxu0 0.0
    %878 = vmatpush1.msra.mxu0 0.0
    %879 = vmatprep.subr.mxu0 0.0
    %880 = vmatpush1.msra.mxu0 0.0
    %881 = vmatprep.subr.mxu0 0.0
    %882 = vmatpush1.msra.mxu0 0.0
    %883 = vmatprep.subr.mxu0 0.0
    %884 = vmatpush1.msra.mxu0 0.0
    %885 = vmatprep.subr.mxu0 0.0
    %886 = vmatpush1.msra.mxu0 0.0
    %887 = vmatprep.subr.mxu0 0.0
    %888 = vmatpush1.msra.mxu0 0.0
    %889 = vmatprep.subr.mxu0 0.0
    %890 = vmatpush1.msra.mxu0 0.0
    %891 = vmatprep.subr.mxu0 0.0
    %892 = vmatpush1.msra.mxu0 0.0
    %893 = vmatprep.subr.mxu0 0.0
    %894 = vmatpush1.msra.mxu0 0.0
    %895 = vmatprep.subr.mxu0 0.0
    %896 = vmatpush1.msra.mxu0 0.0
    %897 = vmatprep.mubr.f32.mxu0 0.0
    %898 = vmatmul.mubr.f32.gmra.mrb[0].mxu0 %v831
    %v899 = vpop.f32.mrb[0].mxu0
    %v900 = vadd.f32 0.0, %v899
    %v901 = vpop.f32.mrb[0].mxu0
    %v902 = vadd.f32 0.0, %v901
    %903 = vdwg.mxu0
    %904 = vmatprep.subr.mxu0 %v354
    %905 = vmatpush1.msra.mxu0 %v353
    %906 = vmatprep.subr.mxu0 %v356
    %907 = vmatpush1.msra.mxu0 %v355
    %908 = vmatprep.subr.mxu0 %v358
    %909 = vmatpush1.msra.mxu0 %v357
    %910 = vmatprep.subr.mxu0 %v360
    %911 = vmatpush1.msra.mxu0 %v359
    %912 = vmatprep.subr.mxu0 %v362
    %913 = vmatpush1.msra.mxu0 %v361
    %914 = vmatprep.subr.mxu0 %v364
    %915 = vmatpush1.msra.mxu0 %v363
    %916 = vmatprep.subr.mxu0 %v366
    %917 = vmatpush1.msra.mxu0 %v365
    %918 = vmatprep.subr.mxu0 %v368
    %919 = vmatpush1.msra.mxu0 %v367
    %920 = vmatprep.subr.mxu0 0.0
    %921 = vmatpush1.msra.mxu0 0.0
    %922 = vmatprep.subr.mxu0 0.0
    %923 = vmatpush1.msra.mxu0 0.0
    %924 = vmatprep.subr.mxu0 0.0
    %925 = vmatpush1.msra.mxu0 0.0
    %926 = vmatprep.subr.mxu0 0.0
    %927 = vmatpush1.msra.mxu0 0.0
    %928 = vmatprep.subr.mxu0 0.0
    %929 = vmatpush1.msra.mxu0 0.0
    %930 = vmatprep.subr.mxu0 0.0
    %931 = vmatpush1.msra.mxu0 0.0
    %932 = vmatprep.subr.mxu0 0.0
    %933 = vmatpush1.msra.mxu0 0.0
    %934 = vmatprep.subr.mxu0 0.0
    %935 = vmatpush1.msra.mxu0 0.0
    %936 = vmatprep.subr.mxu0 0.0
    %937 = vmatpush1.msra.mxu0 0.0
    %938 = vmatprep.subr.mxu0 0.0
    %939 = vmatpush1.msra.mxu0 0.0
    %940 = vmatprep.subr.mxu0 0.0
    %941 = vmatpush1.msra.mxu0 0.0
    %942 = vmatprep.subr.mxu0 0.0
    %943 = vmatpush1.msra.mxu0 0.0
    %944 = vmatprep.subr.mxu0 0.0
    %945 = vmatpush1.msra.mxu0 0.0
    %946 = vmatprep.subr.mxu0 0.0
    %947 = vmatpush1.msra.mxu0 0.0
    %948 = vmatprep.subr.mxu0 0.0
    %949 = vmatpush1.msra.mxu0 0.0
    %950 = vmatprep.subr.mxu0 0.0
    %951 = vmatpush1.msra.mxu0 0.0
    %952 = vmatprep.subr.mxu0 0.0
    %953 = vmatpush1.msra.mxu0 0.0
    %954 = vmatprep.subr.mxu0 0.0
    %955 = vmatpush1.msra.mxu0 0.0
    %956 = vmatprep.subr.mxu0 0.0
    %957 = vmatpush1.msra.mxu0 0.0
    %958 = vmatprep.subr.mxu0 0.0
    %959 = vmatpush1.msra.mxu0 0.0
    %960 = vmatprep.subr.mxu0 0.0
    %961 = vmatpush1.msra.mxu0 0.0
    %962 = vmatprep.subr.mxu0 0.0
    %963 = vmatpush1.msra.mxu0 0.0
    %964 = vmatprep.subr.mxu0 0.0
    %965 = vmatpush1.msra.mxu0 0.0
    %966 = vmatprep.subr.mxu0 0.0
    %967 = vmatpush1.msra.mxu0 0.0
    %968 = vmatprep.mubr.f32.mxu0 0.0
    %969 = vmatmul.mubr.f32.gmra.mrb[0].mxu0 %v831
    %v970 = vpop.f32.mrb[0].mxu0
    %v971 = vadd.f32 0.0, %v970
    %v972 = vpop.f32.mrb[0].mxu0
    %v973 = vadd.f32 0.0, %v972
    %974 = vdwg.mxu0
    %v975 = vadd.f32 %v343, %v971
    %v976 = vxor.u32 %v975, 2147483648
    %v977 = vmul.f32 %v976, 1.442695
    %v978 = vpow.pop %v977
    %v979 = vadd.f32 %v978, 1.0
    %v980 = vrcp.pop %v979
    %v981 = vmul.f32 1.0, %v980
    %v982 = vadd.f32 %v973, %v369
    %v983 = vmul.f32 %v981, %v982
    %v984 = vadd.f32 %v344, %v983
    %v985 = vtanh.pop %v984
    %v986 = vsub.f32 1.0, %v981
    %988 = vrot.lane.b32.xlu0 %v985, 64
    %v989 = vpop.permute.xlu0 %988
    %v991 = vmul.f32 %v986, %v989
    %v992 = vmul.f32 %v981, %v827
    %v993 = vadd.f32 %v991, %v992
    %995 = vrot.lane.b32.xlu0 %v993, 64
    %v996 = vpop.permute.xlu0 %995
    %v997 = vsel %vm402, %v996, 0
    %999 = vmatprep.subr.mxu0 %v387
    %1000 = vmatpush1.msra.mxu0 %v386
    %1001 = vmatprep.subr.mxu0 %v389
    %1002 = vmatpush1.msra.mxu0 %v388
    %1003 = vmatprep.subr.mxu0 %v391
    %1004 = vmatpush1.msra.mxu0 %v390
    %1005 = vmatprep.subr.mxu0 %v393
    %1006 = vmatpush1.msra.mxu0 %v392
    %1007 = vmatprep.subr.mxu0 %v395
    %1008 = vmatpush1.msra.mxu0 %v394
    %1009 = vmatprep.subr.mxu0 %v397
    %1010 = vmatpush1.msra.mxu0 %v396
    %1011 = vmatprep.subr.mxu0 %v399
    %1012 = vmatpush1.msra.mxu0 %v398
    %1013 = vmatprep.subr.mxu0 %v401
    %1014 = vmatpush1.msra.mxu0 %v400
    %1015 = vmatprep.subr.mxu0 0.0
    %1016 = vmatpush1.msra.mxu0 0.0
    %1017 = vmatprep.subr.mxu0 0.0
    %1018 = vmatpush1.msra.mxu0 0.0
    %1019 = vmatprep.subr.mxu0 0.0
    %1020 = vmatpush1.msra.mxu0 0.0
    %1021 = vmatprep.subr.mxu0 0.0
    %1022 = vmatpush1.msra.mxu0 0.0
    %1023 = vmatprep.subr.mxu0 0.0
    %1024 = vmatpush1.msra.mxu0 0.0
    %1025 = vmatprep.subr.mxu0 0.0
    %1026 = vmatpush1.msra.mxu0 0.0
    %1027 = vmatprep.subr.mxu0 0.0
    %1028 = vmatpush1.msra.mxu0 0.0
    %1029 = vmatprep.subr.mxu0 0.0
    %1030 = vmatpush1.msra.mxu0 0.0
    %1031 = vmatprep.subr.mxu0 0.0
    %1032 = vmatpush1.msra.mxu0 0.0
    %1033 = vmatprep.subr.mxu0 0.0
    %1034 = vmatpush1.msra.mxu0 0.0
    %1035 = vmatprep.subr.mxu0 0.0
    %1036 = vmatpush1.msra.mxu0 0.0
    %1037 = vmatprep.subr.mxu0 0.0
    %1038 = vmatpush1.msra.mxu0 0.0
    %1039 = vmatprep.subr.mxu0 0.0
    %1040 = vmatpush1.msra.mxu0 0.0
    %1041 = vmatprep.subr.mxu0 0.0
    %1042 = vmatpush1.msra.mxu0 0.0
    %1043 = vmatprep.subr.mxu0 0.0
    %1044 = vmatpush1.msra.mxu0 0.0
    %1045 = vmatprep.subr.mxu0 0.0
    %1046 = vmatpush1.msra.mxu0 0.0
    %1047 = vmatprep.subr.mxu0 0.0
    %1048 = vmatpush1.msra.mxu0 0.0
    %1049 = vmatprep.subr.mxu0 0.0
    %1050 = vmatpush1.msra.mxu0 0.0
    %1051 = vmatprep.subr.mxu0 0.0
    %1052 = vmatpush1.msra.mxu0 0.0
    %1053 = vmatprep.subr.mxu0 0.0
    %1054 = vmatpush1.msra.mxu0 0.0
    %1055 = vmatprep.subr.mxu0 0.0
    %1056 = vmatpush1.msra.mxu0 0.0
    %1057 = vmatprep.subr.mxu0 0.0
    %1058 = vmatpush1.msra.mxu0 0.0
    %1059 = vmatprep.subr.mxu0 0.0
    %1060 = vmatpush1.msra.mxu0 0.0
    %1061 = vmatprep.subr.mxu0 0.0
    %1062 = vmatpush1.msra.mxu0 0.0
    %1063 = vmatprep.mubr.f32.mxu0 0.0
    %1064 = vmatmul.mubr.f32.gmra.mrb[0].mxu0 %v997
    %v1065 = vpop.f32.mrb[0].mxu0
    %v1066 = vadd.f32 0.0, %v1065
    %v1067 = vpop.f32.mrb[0].mxu0
    %v1068 = vadd.f32 0.0, %v1067
    %1069 = vdwg.mxu0
    %1070 = vmatprep.subr.mxu0 %v354
    %1071 = vmatpush1.msra.mxu0 %v353
    %1072 = vmatprep.subr.mxu0 %v356
    %1073 = vmatpush1.msra.mxu0 %v355
    %1074 = vmatprep.subr.mxu0 %v358
    %1075 = vmatpush1.msra.mxu0 %v357
    %1076 = vmatprep.subr.mxu0 %v360
    %1077 = vmatpush1.msra.mxu0 %v359
    %1078 = vmatprep.subr.mxu0 %v362
    %1079 = vmatpush1.msra.mxu0 %v361
    %1080 = vmatprep.subr.mxu0 %v364
    %1081 = vmatpush1.msra.mxu0 %v363
    %1082 = vmatprep.subr.mxu0 %v366
    %1083 = vmatpush1.msra.mxu0 %v365
    %1084 = vmatprep.subr.mxu0 %v368
    %1085 = vmatpush1.msra.mxu0 %v367
    %1086 = vmatprep.subr.mxu0 0.0
    %1087 = vmatpush1.msra.mxu0 0.0
    %1088 = vmatprep.subr.mxu0 0.0
    %1089 = vmatpush1.msra.mxu0 0.0
    %1090 = vmatprep.subr.mxu0 0.0
    %1091 = vmatpush1.msra.mxu0 0.0
    %1092 = vmatprep.subr.mxu0 0.0
    %1093 = vmatpush1.msra.mxu0 0.0
    %1094 = vmatprep.subr.mxu0 0.0
    %1095 = vmatpush1.msra.mxu0 0.0
    %1096 = vmatprep.subr.mxu0 0.0
    %1097 = vmatpush1.msra.mxu0 0.0
    %1098 = vmatprep.subr.mxu0 0.0
    %1099 = vmatpush1.msra.mxu0 0.0
    %1100 = vmatprep.subr.mxu0 0.0
    %1101 = vmatpush1.msra.mxu0 0.0
    %1102 = vmatprep.subr.mxu0 0.0
    %1103 = vmatpush1.msra.mxu0 0.0
    %1104 = vmatprep.subr.mxu0 0.0
    %1105 = vmatpush1.msra.mxu0 0.0
    %1106 = vmatprep.subr.mxu0 0.0
    %1107 = vmatpush1.msra.mxu0 0.0
    %1108 = vmatprep.subr.mxu0 0.0
    %1109 = vmatpush1.msra.mxu0 0.0
    %1110 = vmatprep.subr.mxu0 0.0
    %1111 = vmatpush1.msra.mxu0 0.0
    %1112 = vmatprep.subr.mxu0 0.0
    %1113 = vmatpush1.msra.mxu0 0.0
    %1114 = vmatprep.subr.mxu0 0.0
    %1115 = vmatpush1.msra.mxu0 0.0
    %1116 = vmatprep.subr.mxu0 0.0
    %1117 = vmatpush1.msra.mxu0 0.0
    %1118 = vmatprep.subr.mxu0 0.0
    %1119 = vmatpush1.msra.mxu0 0.0
    %1120 = vmatprep.subr.mxu0 0.0
    %1121 = vmatpush1.msra.mxu0 0.0
    %1122 = vmatprep.subr.mxu0 0.0
    %1123 = vmatpush1.msra.mxu0 0.0
    %1124 = vmatprep.subr.mxu0 0.0
    %1125 = vmatpush1.msra.mxu0 0.0
    %1126 = vmatprep.subr.mxu0 0.0
    %1127 = vmatpush1.msra.mxu0 0.0
    %1128 = vmatprep.subr.mxu0 0.0
    %1129 = vmatpush1.msra.mxu0 0.0
    %1130 = vmatprep.subr.mxu0 0.0
    %1131 = vmatpush1.msra.mxu0 0.0
    %1132 = vmatprep.subr.mxu0 0.0
    %1133 = vmatpush1.msra.mxu0 0.0
    %1134 = vmatprep.mubr.f32.mxu0 0.0
    %1135 = vmatmul.mubr.f32.gmra.mrb[0].mxu0 %v997
    %v1136 = vpop.f32.mrb[0].mxu0
    %v1137 = vadd.f32 0.0, %v1136
    %v1138 = vpop.f32.mrb[0].mxu0
    %v1139 = vadd.f32 0.0, %v1138
    %1140 = vdwg.mxu0
    %v1141 = vadd.f32 %v345, %v1137
    %v1142 = vxor.u32 %v1141, 2147483648
    %v1143 = vmul.f32 %v1142, 1.442695
    %v1144 = vpow.pop %v1143
    %v1145 = vadd.f32 %v1144, 1.0
    %v1146 = vrcp.pop %v1145
    %v1147 = vmul.f32 1.0, %v1146
    %v1148 = vadd.f32 %v1139, %v369
    %v1149 = vmul.f32 %v1147, %v1148
    %v1150 = vadd.f32 %v346, %v1149
    %v1151 = vtanh.pop %v1150
    %v1152 = vsub.f32 1.0, %v1147
    %1154 = vrot.lane.b32.xlu0 %v1151, 64
    %v1155 = vpop.permute.xlu0 %1154
    %v1157 = vmul.f32 %v1152, %v1155
    %v1158 = vmul.f32 %v1147, %v993
    %v1159 = vadd.f32 %v1157, %v1158
    %1161 = vrot.lane.b32.xlu0 %v1159, 64
    %v1162 = vpop.permute.xlu0 %1161
    %v1163 = vsel %vm402, %v1162, 0
    %1165 = vmatprep.subr.mxu0 %v387
    %1166 = vmatpush1.msra.mxu0 %v386
    %1167 = vmatprep.subr.mxu0 %v389
    %1168 = vmatpush1.msra.mxu0 %v388
    %1169 = vmatprep.subr.mxu0 %v391
    %1170 = vmatpush1.msra.mxu0 %v390
    %1171 = vmatprep.subr.mxu0 %v393
    %1172 = vmatpush1.msra.mxu0 %v392
    %1173 = vmatprep.subr.mxu0 %v395
    %1174 = vmatpush1.msra.mxu0 %v394
    %1175 = vmatprep.subr.mxu0 %v397
    %1176 = vmatpush1.msra.mxu0 %v396
    %1177 = vmatprep.subr.mxu0 %v399
    %1178 = vmatpush1.msra.mxu0 %v398
    %1179 = vmatprep.subr.mxu0 %v401
    %1180 = vmatpush1.msra.mxu0 %v400
    %1181 = vmatprep.subr.mxu0 0.0
    %1182 = vmatpush1.msra.mxu0 0.0
    %1183 = vmatprep.subr.mxu0 0.0
    %1184 = vmatpush1.msra.mxu0 0.0
    %1185 = vmatprep.subr.mxu0 0.0
    %1186 = vmatpush1.msra.mxu0 0.0
    %1187 = vmatprep.subr.mxu0 0.0
    %1188 = vmatpush1.msra.mxu0 0.0
    %1189 = vmatprep.subr.mxu0 0.0
    %1190 = vmatpush1.msra.mxu0 0.0
    %1191 = vmatprep.subr.mxu0 0.0
    %1192 = vmatpush1.msra.mxu0 0.0
    %1193 = vmatprep.subr.mxu0 0.0
    %1194 = vmatpush1.msra.mxu0 0.0
    %1195 = vmatprep.subr.mxu0 0.0
    %1196 = vmatpush1.msra.mxu0 0.0
    %1197 = vmatprep.subr.mxu0 0.0
    %1198 = vmatpush1.msra.mxu0 0.0
    %1199 = vmatprep.subr.mxu0 0.0
    %1200 = vmatpush1.msra.mxu0 0.0
    %1201 = vmatprep.subr.mxu0 0.0
    %1202 = vmatpush1.msra.mxu0 0.0
    %1203 = vmatprep.subr.mxu0 0.0
    %1204 = vmatpush1.msra.mxu0 0.0
    %1205 = vmatprep.subr.mxu0 0.0
    %1206 = vmatpush1.msra.mxu0 0.0
    %1207 = vmatprep.subr.mxu0 0.0
    %1208 = vmatpush1.msra.mxu0 0.0
    %1209 = vmatprep.subr.mxu0 0.0
    %1210 = vmatpush1.msra.mxu0 0.0
    %1211 = vmatprep.subr.mxu0 0.0
    %1212 = vmatpush1.msra.mxu0 0.0
    %1213 = vmatprep.subr.mxu0 0.0
    %1214 = vmatpush1.msra.mxu0 0.0
    %1215 = vmatprep.subr.mxu0 0.0
    %1216 = vmatpush1.msra.mxu0 0.0
    %1217 = vmatprep.subr.mxu0 0.0
    %1218 = vmatpush1.msra.mxu0 0.0
    %1219 = vmatprep.subr.mxu0 0.0
    %1220 = vmatpush1.msra.mxu0 0.0
    %1221 = vmatprep.subr.mxu0 0.0
    %1222 = vmatpush1.msra.mxu0 0.0
    %1223 = vmatprep.subr.mxu0 0.0
    %1224 = vmatpush1.msra.mxu0 0.0
    %1225 = vmatprep.subr.mxu0 0.0
    %1226 = vmatpush1.msra.mxu0 0.0
    %1227 = vmatprep.subr.mxu0 0.0
    %1228 = vmatpush1.msra.mxu0 0.0
    %1229 = vmatprep.mubr.f32.mxu0 0.0
    %1230 = vmatmul.mubr.f32.gmra.mrb[0].mxu0 %v1163
    %v1231 = vpop.f32.mrb[0].mxu0
    %v1232 = vadd.f32 0.0, %v1231
    %v1233 = vpop.f32.mrb[0].mxu0
    %v1234 = vadd.f32 0.0, %v1233
    %1235 = vdwg.mxu0
    %1236 = vmatprep.subr.mxu0 %v354
    %1237 = vmatpush1.msra.mxu0 %v353
    %1238 = vmatprep.subr.mxu0 %v356
    %1239 = vmatpush1.msra.mxu0 %v355
    %1240 = vmatprep.subr.mxu0 %v358
    %1241 = vmatpush1.msra.mxu0 %v357
    %1242 = vmatprep.subr.mxu0 %v360
    %1243 = vmatpush1.msra.mxu0 %v359
    %1244 = vmatprep.subr.mxu0 %v362
    %1245 = vmatpush1.msra.mxu0 %v361
    %1246 = vmatprep.subr.mxu0 %v364
    %1247 = vmatpush1.msra.mxu0 %v363
    %1248 = vmatprep.subr.mxu0 %v366
    %1249 = vmatpush1.msra.mxu0 %v365
    %1250 = vmatprep.subr.mxu0 %v368
    %1251 = vmatpush1.msra.mxu0 %v367
    %1252 = vmatprep.subr.mxu0 0.0
    %1253 = vmatpush1.msra.mxu0 0.0
    %1254 = vmatprep.subr.mxu0 0.0
    %1255 = vmatpush1.msra.mxu0 0.0
    %1256 = vmatprep.subr.mxu0 0.0
    %1257 = vmatpush1.msra.mxu0 0.0
    %1258 = vmatprep.subr.mxu0 0.0
    %1259 = vmatpush1.msra.mxu0 0.0
    %1260 = vmatprep.subr.mxu0 0.0
    %1261 = vmatpush1.msra.mxu0 0.0
    %1262 = vmatprep.subr.mxu0 0.0
    %1263 = vmatpush1.msra.mxu0 0.0
    %1264 = vmatprep.subr.mxu0 0.0
    %1265 = vmatpush1.msra.mxu0 0.0
    %1266 = vmatprep.subr.mxu0 0.0
    %1267 = vmatpush1.msra.mxu0 0.0
    %1268 = vmatprep.subr.mxu0 0.0
    %1269 = vmatpush1.msra.mxu0 0.0
    %1270 = vmatprep.subr.mxu0 0.0
    %1271 = vmatpush1.msra.mxu0 0.0
    %1272 = vmatprep.subr.mxu0 0.0
    %1273 = vmatpush1.msra.mxu0 0.0
    %1274 = vmatprep.subr.mxu0 0.0
    %1275 = vmatpush1.msra.mxu0 0.0
    %1276 = vmatprep.subr.mxu0 0.0
    %1277 = vmatpush1.msra.mxu0 0.0
    %1278 = vmatprep.subr.mxu0 0.0
    %1279 = vmatpush1.msra.mxu0 0.0
    %1280 = vmatprep.subr.mxu0 0.0
    %1281 = vmatpush1.msra.mxu0 0.0
    %1282 = vmatprep.subr.mxu0 0.0
    %1283 = vmatpush1.msra.mxu0 0.0
    %1284 = vmatprep.subr.mxu0 0.0
    %1285 = vmatpush1.msra.mxu0 0.0
    %1286 = vmatprep.subr.mxu0 0.0
    %1287 = vmatpush1.msra.mxu0 0.0
    %1288 = vmatprep.subr.mxu0 0.0
    %1289 = vmatpush1.msra.mxu0 0.0
    %1290 = vmatprep.subr.mxu0 0.0
    %1291 = vmatpush1.msra.mxu0 0.0
    %1292 = vmatprep.subr.mxu0 0.0
    %1293 = vmatpush1.msra.mxu0 0.0
    %1294 = vmatprep.subr.mxu0 0.0
    %1295 = vmatpush1.msra.mxu0 0.0
    %1296 = vmatprep.subr.mxu0 0.0
    %1297 = vmatpush1.msra.mxu0 0.0
    %1298 = vmatprep.subr.mxu0 0.0
    %1299 = vmatpush1.msra.mxu0 0.0
    %1300 = vmatprep.mubr.f32.mxu0 0.0
    %1301 = vmatmul.mubr.f32.gmra.mrb[0].mxu0 %v1163
    %v1302 = vpop.f32.mrb[0].mxu0
    %v1303 = vadd.f32 0.0, %v1302
    %v1304 = vpop.f32.mrb[0].mxu0
    %v1305 = vadd.f32 0.0, %v1304
    %1306 = vdwg.mxu0
    %v1307 = vadd.f32 %v347, %v1303
    %v1308 = vxor.u32 %v1307, 2147483648
    %v1309 = vmul.f32 %v1308, 1.442695
    %v1310 = vpow.pop %v1309
    %v1311 = vadd.f32 %v1310, 1.0
    %v1312 = vrcp.pop %v1311
    %v1313 = vmul.f32 1.0, %v1312
    %v1314 = vadd.f32 %v1305, %v369
    %v1315 = vmul.f32 %v1313, %v1314
    %v1316 = vadd.f32 %v348, %v1315
    %v1317 = vtanh.pop %v1316
    %v1318 = vsub.f32 1.0, %v1313
    %1320 = vrot.lane.b32.xlu0 %v1317, 64
    %v1321 = vpop.permute.xlu0 %1320
    %v1323 = vmul.f32 %v1318, %v1321
    %v1324 = vmul.f32 %v1313, %v1159
    %v1325 = vadd.f32 %v1323, %v1324
    %1327 = vrot.lane.b32.xlu0 %v1325, 64
    %v1328 = vpop.permute.xlu0 %1327
    %v1329 = vsel %vm402, %v1328, 0
    %1331 = vmatprep.subr.mxu0 %v387
    %1332 = vmatpush1.msra.mxu0 %v386
    %1333 = vmatprep.subr.mxu0 %v389
    %1334 = vmatpush1.msra.mxu0 %v388
    %1335 = vmatprep.subr.mxu0 %v391
    %1336 = vmatpush1.msra.mxu0 %v390
    %1337 = vmatprep.subr.mxu0 %v393
    %1338 = vmatpush1.msra.mxu0 %v392
    %1339 = vmatprep.subr.mxu0 %v395
    %1340 = vmatpush1.msra.mxu0 %v394
    %1341 = vmatprep.subr.mxu0 %v397
    %1342 = vmatpush1.msra.mxu0 %v396
    %1343 = vmatprep.subr.mxu0 %v399
    %1344 = vmatpush1.msra.mxu0 %v398
    %1345 = vmatprep.subr.mxu0 %v401
    %1346 = vmatpush1.msra.mxu0 %v400
    %1347 = vmatprep.subr.mxu0 0.0
    %1348 = vmatpush1.msra.mxu0 0.0
    %1349 = vmatprep.subr.mxu0 0.0
    %1350 = vmatpush1.msra.mxu0 0.0
    %1351 = vmatprep.subr.mxu0 0.0
    %1352 = vmatpush1.msra.mxu0 0.0
    %1353 = vmatprep.subr.mxu0 0.0
    %1354 = vmatpush1.msra.mxu0 0.0
    %1355 = vmatprep.subr.mxu0 0.0
    %1356 = vmatpush1.msra.mxu0 0.0
    %1357 = vmatprep.subr.mxu0 0.0
    %1358 = vmatpush1.msra.mxu0 0.0
    %1359 = vmatprep.subr.mxu0 0.0
    %1360 = vmatpush1.msra.mxu0 0.0
    %1361 = vmatprep.subr.mxu0 0.0
    %1362 = vmatpush1.msra.mxu0 0.0
    %1363 = vmatprep.subr.mxu0 0.0
    %1364 = vmatpush1.msra.mxu0 0.0
    %1365 = vmatprep.subr.mxu0 0.0
    %1366 = vmatpush1.msra.mxu0 0.0
    %1367 = vmatprep.subr.mxu0 0.0
    %1368 = vmatpush1.msra.mxu0 0.0
    %1369 = vmatprep.subr.mxu0 0.0
    %1370 = vmatpush1.msra.mxu0 0.0
    %1371 = vmatprep.subr.mxu0 0.0
    %1372 = vmatpush1.msra.mxu0 0.0
    %1373 = vmatprep.subr.mxu0 0.0
    %1374 = vmatpush1.msra.mxu0 0.0
    %1375 = vmatprep.subr.mxu0 0.0
    %1376 = vmatpush1.msra.mxu0 0.0
    %1377 = vmatprep.subr.mxu0 0.0
    %1378 = vmatpush1.msra.mxu0 0.0
    %1379 = vmatprep.subr.mxu0 0.0
    %1380 = vmatpush1.msra.mxu0 0.0
    %1381 = vmatprep.subr.mxu0 0.0
    %1382 = vmatpush1.msra.mxu0 0.0
    %1383 = vmatprep.subr.mxu0 0.0
    %1384 = vmatpush1.msra.mxu0 0.0
    %1385 = vmatprep.subr.mxu0 0.0
    %1386 = vmatpush1.msra.mxu0 0.0
    %1387 = vmatprep.subr.mxu0 0.0
    %1388 = vmatpush1.msra.mxu0 0.0
    %1389 = vmatprep.subr.mxu0 0.0
    %1390 = vmatpush1.msra.mxu0 0.0
    %1391 = vmatprep.subr.mxu0 0.0
    %1392 = vmatpush1.msra.mxu0 0.0
    %1393 = vmatprep.subr.mxu0 0.0
    %1394 = vmatpush1.msra.mxu0 0.0
    %1395 = vmatprep.mubr.f32.mxu0 0.0
    %1396 = vmatmul.mubr.f32.gmra.mrb[0].mxu0 %v1329
    %v1397 = vpop.f32.mrb[0].mxu0
    %v1398 = vadd.f32 0.0, %v1397
    %v1399 = vpop.f32.mrb[0].mxu0
    %v1400 = vadd.f32 0.0, %v1399
    %1401 = vdwg.mxu0
    %1402 = vmatprep.subr.mxu0 %v354
    %1403 = vmatpush1.msra.mxu0 %v353
    %1404 = vmatprep.subr.mxu0 %v356
    %1405 = vmatpush1.msra.mxu0 %v355
    %1406 = vmatprep.subr.mxu0 %v358
    %1407 = vmatpush1.msra.mxu0 %v357
    %1408 = vmatprep.subr.mxu0 %v360
    %1409 = vmatpush1.msra.mxu0 %v359
    %1410 = vmatprep.subr.mxu0 %v362
    %1411 = vmatpush1.msra.mxu0 %v361
    %1412 = vmatprep.subr.mxu0 %v364
    %1413 = vmatpush1.msra.mxu0 %v363
    %1414 = vmatprep.subr.mxu0 %v366
    %1415 = vmatpush1.msra.mxu0 %v365
    %1416 = vmatprep.subr.mxu0 %v368
    %1417 = vmatpush1.msra.mxu0 %v367
    %1418 = vmatprep.subr.mxu0 0.0
    %1419 = vmatpush1.msra.mxu0 0.0
    %1420 = vmatprep.subr.mxu0 0.0
    %1421 = vmatpush1.msra.mxu0 0.0
    %1422 = vmatprep.subr.mxu0 0.0
    %1423 = vmatpush1.msra.mxu0 0.0
    %1424 = vmatprep.subr.mxu0 0.0
    %1425 = vmatpush1.msra.mxu0 0.0
    %1426 = vmatprep.subr.mxu0 0.0
    %1427 = vmatpush1.msra.mxu0 0.0
    %1428 = vmatprep.subr.mxu0 0.0
    %1429 = vmatpush1.msra.mxu0 0.0
    %1430 = vmatprep.subr.mxu0 0.0
    %1431 = vmatpush1.msra.mxu0 0.0
    %1432 = vmatprep.subr.mxu0 0.0
    %1433 = vmatpush1.msra.mxu0 0.0
    %1434 = vmatprep.subr.mxu0 0.0
    %1435 = vmatpush1.msra.mxu0 0.0
    %1436 = vmatprep.subr.mxu0 0.0
    %1437 = vmatpush1.msra.mxu0 0.0
    %1438 = vmatprep.subr.mxu0 0.0
    %1439 = vmatpush1.msra.mxu0 0.0
    %1440 = vmatprep.subr.mxu0 0.0
    %1441 = vmatpush1.msra.mxu0 0.0
    %1442 = vmatprep.subr.mxu0 0.0
    %1443 = vmatpush1.msra.mxu0 0.0
    %1444 = vmatprep.subr.mxu0 0.0
    %1445 = vmatpush1.msra.mxu0 0.0
    %1446 = vmatprep.subr.mxu0 0.0
    %1447 = vmatpush1.msra.mxu0 0.0
    %1448 = vmatprep.subr.mxu0 0.0
    %1449 = vmatpush1.msra.mxu0 0.0
    %1450 = vmatprep.subr.mxu0 0.0
    %1451 = vmatpush1.msra.mxu0 0.0
    %1452 = vmatprep.subr.mxu0 0.0
    %1453 = vmatpush1.msra.mxu0 0.0
    %1454 = vmatprep.subr.mxu0 0.0
    %1455 = vmatpush1.msra.mxu0 0.0
    %1456 = vmatprep.subr.mxu0 0.0
    %1457 = vmatpush1.msra.mxu0 0.0
    %1458 = vmatprep.subr.mxu0 0.0
    %1459 = vmatpush1.msra.mxu0 0.0
    %1460 = vmatprep.subr.mxu0 0.0
    %1461 = vmatpush1.msra.mxu0 0.0
    %1462 = vmatprep.subr.mxu0 0.0
    %1463 = vmatpush1.msra.mxu0 0.0
    %1464 = vmatprep.subr.mxu0 0.0
    %1465 = vmatpush1.msra.mxu0 0.0
    %1466 = vmatprep.mubr.f32.mxu0 0.0
    %1467 = vmatmul.mubr.f32.gmra.mrb[0].mxu0 %v1329
    %v1468 = vpop.f32.mrb[0].mxu0
    %v1469 = vadd.f32 0.0, %v1468
    %v1470 = vpop.f32.mrb[0].mxu0
    %v1471 = vadd.f32 0.0, %v1470
    %1472 = vdwg.mxu0
    %v1473 = vadd.f32 %v349, %v1469
    %v1474 = vxor.u32 %v1473, 2147483648
    %v1475 = vmul.f32 %v1474, 1.442695
    %v1476 = vpow.pop %v1475
    %v1477 = vadd.f32 %v1476, 1.0
    %v1478 = vrcp.pop %v1477
    %v1479 = vmul.f32 1.0, %v1478
    %v1480 = vadd.f32 %v1471, %v369
    %v1481 = vmul.f32 %v1479, %v1480
    %v1482 = vadd.f32 %v350, %v1481
    %v1483 = vtanh.pop %v1482
    %v1484 = vsub.f32 1.0, %v1479
    %1486 = vrot.lane.b32.xlu0 %v1483, 64
    %v1487 = vpop.permute.xlu0 %1486
    %v1489 = vmul.f32 %v1484, %v1487
    %v1490 = vmul.f32 %v1479, %v1325
    %v1491 = vadd.f32 %v1489, %v1490
    %1493 = vrot.lane.b32.xlu0 %v1491, 64
    %v1494 = vpop.permute.xlu0 %1493
    %v1495 = vsel %vm402, %v1494, 0
    %1497 = vmatprep.subr.mxu0 %v387
    %1498 = vmatpush1.msra.mxu0 %v386
    %1499 = vmatprep.subr.mxu0 %v389
    %1500 = vmatpush1.msra.mxu0 %v388
    %1501 = vmatprep.subr.mxu0 %v391
    %1502 = vmatpush1.msra.mxu0 %v390
    %1503 = vmatprep.subr.mxu0 %v393
    %1504 = vmatpush1.msra.mxu0 %v392
    %1505 = vmatprep.subr.mxu0 %v395
    %1506 = vmatpush1.msra.mxu0 %v394
    %1507 = vmatprep.subr.mxu0 %v397
    %1508 = vmatpush1.msra.mxu0 %v396
    %1509 = vmatprep.subr.mxu0 %v399
    %1510 = vmatpush1.msra.mxu0 %v398
    %1511 = vmatprep.subr.mxu0 %v401
    %1512 = vmatpush1.msra.mxu0 %v400
    %1513 = vmatprep.subr.mxu0 0.0
    %1514 = vmatpush1.msra.mxu0 0.0
    %1515 = vmatprep.subr.mxu0 0.0
    %1516 = vmatpush1.msra.mxu0 0.0
    %1517 = vmatprep.subr.mxu0 0.0
    %1518 = vmatpush1.msra.mxu0 0.0
    %1519 = vmatprep.subr.mxu0 0.0
    %1520 = vmatpush1.msra.mxu0 0.0
    %1521 = vmatprep.subr.mxu0 0.0
    %1522 = vmatpush1.msra.mxu0 0.0
    %1523 = vmatprep.subr.mxu0 0.0
    %1524 = vmatpush1.msra.mxu0 0.0
    %1525 = vmatprep.subr.mxu0 0.0
    %1526 = vmatpush1.msra.mxu0 0.0
    %1527 = vmatprep.subr.mxu0 0.0
    %1528 = vmatpush1.msra.mxu0 0.0
    %1529 = vmatprep.subr.mxu0 0.0
    %1530 = vmatpush1.msra.mxu0 0.0
    %1531 = vmatprep.subr.mxu0 0.0
    %1532 = vmatpush1.msra.mxu0 0.0
    %1533 = vmatprep.subr.mxu0 0.0
    %1534 = vmatpush1.msra.mxu0 0.0
    %1535 = vmatprep.subr.mxu0 0.0
    %1536 = vmatpush1.msra.mxu0 0.0
    %1537 = vmatprep.subr.mxu0 0.0
    %1538 = vmatpush1.msra.mxu0 0.0
    %1539 = vmatprep.subr.mxu0 0.0
    %1540 = vmatpush1.msra.mxu0 0.0
    %1541 = vmatprep.subr.mxu0 0.0
    %1542 = vmatpush1.msra.mxu0 0.0
    %1543 = vmatprep.subr.mxu0 0.0
    %1544 = vmatpush1.msra.mxu0 0.0
    %1545 = vmatprep.subr.mxu0 0.0
    %1546 = vmatpush1.msra.mxu0 0.0
    %1547 = vmatprep.subr.mxu0 0.0
    %1548 = vmatpush1.msra.mxu0 0.0
    %1549 = vmatprep.subr.mxu0 0.0
    %1550 = vmatpush1.msra.mxu0 0.0
    %1551 = vmatprep.subr.mxu0 0.0
    %1552 = vmatpush1.msra.mxu0 0.0
    %1553 = vmatprep.subr.mxu0 0.0
    %1554 = vmatpush1.msra.mxu0 0.0
    %1555 = vmatprep.subr.mxu0 0.0
    %1556 = vmatpush1.msra.mxu0 0.0
    %1557 = vmatprep.subr.mxu0 0.0
    %1558 = vmatpush1.msra.mxu0 0.0
    %1559 = vmatprep.subr.mxu0 0.0
    %1560 = vmatpush1.msra.mxu0 0.0
    %1561 = vmatprep.mubr.f32.mxu0 0.0
    %1562 = vmatmul.mubr.f32.gmra.mrb[0].mxu0 %v1495
    %v1563 = vpop.f32.mrb[0].mxu0
    %v1564 = vadd.f32 0.0, %v1563
    %v1565 = vpop.f32.mrb[0].mxu0
    %v1566 = vadd.f32 0.0, %v1565
    %1567 = vdwg.mxu0
    %1568 = vmatprep.subr.mxu0 %v354
    %1569 = vmatpush1.msra.mxu0 %v353
    %1570 = vmatprep.subr.mxu0 %v356
    %1571 = vmatpush1.msra.mxu0 %v355
    %1572 = vmatprep.subr.mxu0 %v358
    %1573 = vmatpush1.msra.mxu0 %v357
    %1574 = vmatprep.subr.mxu0 %v360
    %1575 = vmatpush1.msra.mxu0 %v359
    %1576 = vmatprep.subr.mxu0 %v362
    %1577 = vmatpush1.msra.mxu0 %v361
    %1578 = vmatprep.subr.mxu0 %v364
    %1579 = vmatpush1.msra.mxu0 %v363
    %1580 = vmatprep.subr.mxu0 %v366
    %1581 = vmatpush1.msra.mxu0 %v365
    %1582 = vmatprep.subr.mxu0 %v368
    %1583 = vmatpush1.msra.mxu0 %v367
    %1584 = vmatprep.subr.mxu0 0.0
    %1585 = vmatpush1.msra.mxu0 0.0
    %1586 = vmatprep.subr.mxu0 0.0
    %1587 = vmatpush1.msra.mxu0 0.0
    %1588 = vmatprep.subr.mxu0 0.0
    %1589 = vmatpush1.msra.mxu0 0.0
    %1590 = vmatprep.subr.mxu0 0.0
    %1591 = vmatpush1.msra.mxu0 0.0
    %1592 = vmatprep.subr.mxu0 0.0
    %1593 = vmatpush1.msra.mxu0 0.0
    %1594 = vmatprep.subr.mxu0 0.0
    %1595 = vmatpush1.msra.mxu0 0.0
    %1596 = vmatprep.subr.mxu0 0.0
    %1597 = vmatpush1.msra.mxu0 0.0
    %1598 = vmatprep.subr.mxu0 0.0
    %1599 = vmatpush1.msra.mxu0 0.0
    %1600 = vmatprep.subr.mxu0 0.0
    %1601 = vmatpush1.msra.mxu0 0.0
    %1602 = vmatprep.subr.mxu0 0.0
    %1603 = vmatpush1.msra.mxu0 0.0
    %1604 = vmatprep.subr.mxu0 0.0
    %1605 = vmatpush1.msra.mxu0 0.0
    %1606 = vmatprep.subr.mxu0 0.0
    %1607 = vmatpush1.msra.mxu0 0.0
    %1608 = vmatprep.subr.mxu0 0.0
    %1609 = vmatpush1.msra.mxu0 0.0
    %1610 = vmatprep.subr.mxu0 0.0
    %1611 = vmatpush1.msra.mxu0 0.0
    %1612 = vmatprep.subr.mxu0 0.0
    %1613 = vmatpush1.msra.mxu0 0.0
    %1614 = vmatprep.subr.mxu0 0.0
    %1615 = vmatpush1.msra.mxu0 0.0
    %1616 = vmatprep.subr.mxu0 0.0
    %1617 = vmatpush1.msra.mxu0 0.0
    %1618 = vmatprep.subr.mxu0 0.0
    %1619 = vmatpush1.msra.mxu0 0.0
    %1620 = vmatprep.subr.mxu0 0.0
    %1621 = vmatpush1.msra.mxu0 0.0
    %1622 = vmatprep.subr.mxu0 0.0
    %1623 = vmatpush1.msra.mxu0 0.0
    %1624 = vmatprep.subr.mxu0 0.0
    %1625 = vmatpush1.msra.mxu0 0.0
    %1626 = vmatprep.subr.mxu0 0.0
    %1627 = vmatpush1.msra.mxu0 0.0
    %1628 = vmatprep.subr.mxu0 0.0
    %1629 = vmatpush1.msra.mxu0 0.0
    %1630 = vmatprep.subr.mxu0 0.0
    %1631 = vmatpush1.msra.mxu0 0.0
    %1632 = vmatprep.mubr.f32.mxu0 0.0
    %1633 = vmatmul.mubr.f32.gmra.mrb[0].mxu0 %v1495
    %v1634 = vpop.f32.mrb[0].mxu0
    %v1635 = vadd.f32 0.0, %v1634
    %v1636 = vpop.f32.mrb[0].mxu0
    %v1637 = vadd.f32 0.0, %v1636
    %1638 = vdwg.mxu0
    %v1639 = vadd.f32 %v351, %v1635
    %v1640 = vxor.u32 %v1639, 2147483648
    %v1641 = vmul.f32 %v1640, 1.442695
    %v1642 = vpow.pop %v1641
    %v1643 = vadd.f32 %v1642, 1.0
    %v1644 = vrcp.pop %v1643
    %v1645 = vmul.f32 1.0, %v1644
    %v1646 = vadd.f32 %v1637, %v369
    %v1647 = vmul.f32 %v1645, %v1646
    %v1648 = vadd.f32 %v352, %v1647
    %v1649 = vtanh.pop %v1648
    %v1650 = vsub.f32 1.0, %v1645
    %1652 = vrot.lane.b32.xlu0 %v1649, 64
    %v1653 = vpop.permute.xlu0 %1652
    %v1655 = vmul.f32 %v1650, %v1653
    %v1656 = vmul.f32 %v1645, %v1491
    %v1657 = vadd.f32 %v1655, %v1656
    %1659 = vrot.lane.b32.xlu0 %v1657, 64
    %v1660 = vpop.permute.xlu0 %1659
    %v1661 = vsel %vm402, %v1660, 0
    %1663 = vmatprep.subr.mxu0 %v387
    %1664 = vmatpush1.msra.mxu0 %v386
    %1665 = vmatprep.subr.mxu0 %v389
    %1666 = vmatpush1.msra.mxu0 %v388
    %1667 = vmatprep.subr.mxu0 %v391
    %1668 = vmatpush1.msra.mxu0 %v390
    %1669 = vmatprep.subr.mxu0 %v393
    %1670 = vmatpush1.msra.mxu0 %v392
    %1671 = vmatprep.subr.mxu0 %v395
    %1672 = vmatpush1.msra.mxu0 %v394
    %1673 = vmatprep.subr.mxu0 %v397
    %1674 = vmatpush1.msra.mxu0 %v396
    %1675 = vmatprep.subr.mxu0 %v399
    %1676 = vmatpush1.msra.mxu0 %v398
    %1677 = vmatprep.subr.mxu0 %v401
    %1678 = vmatpush1.msra.mxu0 %v400
    %1679 = vmatprep.subr.mxu0 0.0
    %1680 = vmatpush1.msra.mxu0 0.0
    %1681 = vmatprep.subr.mxu0 0.0
    %1682 = vmatpush1.msra.mxu0 0.0
    %1683 = vmatprep.subr.mxu0 0.0
    %1684 = vmatpush1.msra.mxu0 0.0
    %1685 = vmatprep.subr.mxu0 0.0
    %1686 = vmatpush1.msra.mxu0 0.0
    %1687 = vmatprep.subr.mxu0 0.0
    %1688 = vmatpush1.msra.mxu0 0.0
    %1689 = vmatprep.subr.mxu0 0.0
    %1690 = vmatpush1.msra.mxu0 0.0
    %1691 = vmatprep.subr.mxu0 0.0
    %1692 = vmatpush1.msra.mxu0 0.0
    %1693 = vmatprep.subr.mxu0 0.0
    %1694 = vmatpush1.msra.mxu0 0.0
    %1695 = vmatprep.subr.mxu0 0.0
    %1696 = vmatpush1.msra.mxu0 0.0
    %1697 = vmatprep.subr.mxu0 0.0
    %1698 = vmatpush1.msra.mxu0 0.0
    %1699 = vmatprep.subr.mxu0 0.0
    %1700 = vmatpush1.msra.mxu0 0.0
    %1701 = vmatprep.subr.mxu0 0.0
    %1702 = vmatpush1.msra.mxu0 0.0
    %1703 = vmatprep.subr.mxu0 0.0
    %1704 = vmatpush1.msra.mxu0 0.0
    %1705 = vmatprep.subr.mxu0 0.0
    %1706 = vmatpush1.msra.mxu0 0.0
    %1707 = vmatprep.subr.mxu0 0.0
    %1708 = vmatpush1.msra.mxu0 0.0
    %1709 = vmatprep.subr.mxu0 0.0
    %1710 = vmatpush1.msra.mxu0 0.0
    %1711 = vmatprep.subr.mxu0 0.0
    %1712 = vmatpush1.msra.mxu0 0.0
    %1713 = vmatprep.subr.mxu0 0.0
    %1714 = vmatpush1.msra.mxu0 0.0
    %1715 = vmatprep.subr.mxu0 0.0
    %1716 = vmatpush1.msra.mxu0 0.0
    %1717 = vmatprep.subr.mxu0 0.0
    %1718 = vmatpush1.msra.mxu0 0.0
    %1719 = vmatprep.subr.mxu0 0.0
    %1720 = vmatpush1.msra.mxu0 0.0
    %1721 = vmatprep.subr.mxu0 0.0
    %1722 = vmatpush1.msra.mxu0 0.0
    %1723 = vmatprep.subr.mxu0 0.0
    %1724 = vmatpush1.msra.mxu0 0.0
    %1725 = vmatprep.subr.mxu0 0.0
    %1726 = vmatpush1.msra.mxu0 0.0
    %1727 = vmatprep.mubr.f32.mxu0 0.0
    %1728 = vmatmul.mubr.f32.gmra.mrb[0].mxu0 %v1661
    %v1729 = vpop.f32.mrb[0].mxu0
    %v1730 = vadd.f32 0.0, %v1729
    %v1731 = vpop.f32.mrb[0].mxu0
    %v1732 = vadd.f32 0.0, %v1731
    %1733 = vdwg.mxu0
    %s1734 = scalar_lea.vmem %s1, 960
    %v1735 = vld [vmem:[%s1734] ss:$8 sm:$0x3]
    %1736 = vmatprep.subr.mxu0 %v371
    %1737 = vmatpush1.msra.mxu0 %v370
    %1738 = vmatprep.subr.mxu0 %v373
    %1739 = vmatpush1.msra.mxu0 %v372
    %1740 = vmatprep.subr.mxu0 %v375
    %1741 = vmatpush1.msra.mxu0 %v374
    %1742 = vmatprep.subr.mxu0 %v377
    %1743 = vmatpush1.msra.mxu0 %v376
    %1744 = vmatprep.subr.mxu0 %v379
    %1745 = vmatpush1.msra.mxu0 %v378
    %1746 = vmatprep.subr.mxu0 %v381
    %1747 = vmatpush1.msra.mxu0 %v380
    %1748 = vmatprep.subr.mxu0 %v383
    %1749 = vmatpush1.msra.mxu0 %v382
    %1750 = vmatprep.subr.mxu0 %v385
    %1751 = vmatpush1.msra.mxu0 %v384
    %1752 = vmatprep.subr.mxu0 0.0
    %1753 = vmatpush1.msra.mxu0 0.0
    %1754 = vmatprep.subr.mxu0 0.0
    %1755 = vmatpush1.msra.mxu0 0.0
    %1756 = vmatprep.subr.mxu0 0.0
    %1757 = vmatpush1.msra.mxu0 0.0
    %1758 = vmatprep.subr.mxu0 0.0
    %1759 = vmatpush1.msra.mxu0 0.0
    %1760 = vmatprep.subr.mxu0 0.0
    %1761 = vmatpush1.msra.mxu0 0.0
    %1762 = vmatprep.subr.mxu0 0.0
    %1763 = vmatpush1.msra.mxu0 0.0
    %1764 = vmatprep.subr.mxu0 0.0
    %1765 = vmatpush1.msra.mxu0 0.0
    %1766 = vmatprep.subr.mxu0 0.0
    %1767 = vmatpush1.msra.mxu0 0.0
    %1768 = vmatprep.subr.mxu0 0.0
    %1769 = vmatpush1.msra.mxu0 0.0
    %1770 = vmatprep.subr.mxu0 0.0
    %1771 = vmatpush1.msra.mxu0 0.0
    %1772 = vmatprep.subr.mxu0 0.0
    %1773 = vmatpush1.msra.mxu0 0.0
    %1774 = vmatprep.subr.mxu0 0.0
    %1775 = vmatpush1.msra.mxu0 0.0
    %1776 = vmatprep.subr.mxu0 0.0
    %1777 = vmatpush1.msra.mxu0 0.0
    %1778 = vmatprep.subr.mxu0 0.0
    %1779 = vmatpush1.msra.mxu0 0.0
    %1780 = vmatprep.subr.mxu0 0.0
    %1781 = vmatpush1.msra.mxu0 0.0
    %1782 = vmatprep.subr.mxu0 0.0
    %1783 = vmatpush1.msra.mxu0 0.0
    %1784 = vmatprep.subr.mxu0 0.0
    %1785 = vmatpush1.msra.mxu0 0.0
    %1786 = vmatprep.subr.mxu0 0.0
    %1787 = vmatpush1.msra.mxu0 0.0
    %1788 = vmatprep.subr.mxu0 0.0
    %1789 = vmatpush1.msra.mxu0 0.0
    %1790 = vmatprep.subr.mxu0 0.0
    %1791 = vmatpush1.msra.mxu0 0.0
    %1792 = vmatprep.subr.mxu0 0.0
    %1793 = vmatpush1.msra.mxu0 0.0
    %1794 = vmatprep.subr.mxu0 0.0
    %1795 = vmatpush1.msra.mxu0 0.0
    %1796 = vmatprep.subr.mxu0 0.0
    %1797 = vmatpush1.msra.mxu0 0.0
    %1798 = vmatprep.subr.mxu0 0.0
    %1799 = vmatpush1.msra.mxu0 0.0
    %1800 = vmatprep.mubr.f32.mxu0 0.0
    %1801 = vmatmul.mubr.f32.gmra.mrb[0].mxu0 %v499
    %v1802 = vpop.f32.mrb[0].mxu0
    %v1803 = vadd.f32 %v1730, %v1802
    %v1804 = vpop.f32.mrb[0].mxu0
    %v1805 = vadd.f32 %v1732, %v1804
    %1806 = vdwg.mxu0
    %v1808 = vlaneseq
    %v1809 = vshrl.u32 %v1808, 7
    %v1810 = vsub.s32 0, %v1809
    %v1811 = vrot.slane %v1735, %v1810
    %v1812 = vlaneseq
    %v1813 = vshrl.u32 %v1812, 7
    %v1814 = vsub.s32 1, %v1813
    %v1815 = vrot.slane %v1735, %v1814
    %v1818 = vadd.f32 %v1803, %v1811
    %v1819 = vadd.f32 %v1805, %v1815
    %1820 = vmatprep.subr.mxu0 %v371
    %1821 = vmatpush1.msra.mxu0 %v370
    %1822 = vmatprep.subr.mxu0 %v373
    %1823 = vmatpush1.msra.mxu0 %v372
    %1824 = vmatprep.subr.mxu0 %v375
    %1825 = vmatpush1.msra.mxu0 %v374
    %1826 = vmatprep.subr.mxu0 %v377
    %1827 = vmatpush1.msra.mxu0 %v376
    %1828 = vmatprep.subr.mxu0 %v379
    %1829 = vmatpush1.msra.mxu0 %v378
    %1830 = vmatprep.subr.mxu0 %v381
    %1831 = vmatpush1.msra.mxu0 %v380
    %1832 = vmatprep.subr.mxu0 %v383
    %1833 = vmatpush1.msra.mxu0 %v382
    %1834 = vmatprep.subr.mxu0 %v385
    %1835 = vmatpush1.msra.mxu0 %v384
    %1836 = vmatprep.subr.mxu0 0.0
    %1837 = vmatpush1.msra.mxu0 0.0
    %1838 = vmatprep.subr.mxu0 0.0
    %1839 = vmatpush1.msra.mxu0 0.0
    %1840 = vmatprep.subr.mxu0 0.0
    %1841 = vmatpush1.msra.mxu0 0.0
    %1842 = vmatprep.subr.mxu0 0.0
    %1843 = vmatpush1.msra.mxu0 0.0
    %1844 = vmatprep.subr.mxu0 0.0
    %1845 = vmatpush1.msra.mxu0 0.0
    %1846 = vmatprep.subr.mxu0 0.0
    %1847 = vmatpush1.msra.mxu0 0.0
    %1848 = vmatprep.subr.mxu0 0.0
    %1849 = vmatpush1.msra.mxu0 0.0
    %1850 = vmatprep.subr.mxu0 0.0
    %1851 = vmatpush1.msra.mxu0 0.0
    %1852 = vmatprep.subr.mxu0 0.0
    %1853 = vmatpush1.msra.mxu0 0.0
    %1854 = vmatprep.subr.mxu0 0.0
    %1855 = vmatpush1.msra.mxu0 0.0
    %1856 = vmatprep.subr.mxu0 0.0
    %1857 = vmatpush1.msra.mxu0 0.0
    %1858 = vmatprep.subr.mxu0 0.0
    %1859 = vmatpush1.msra.mxu0 0.0
    %1860 = vmatprep.subr.mxu0 0.0
    %1861 = vmatpush1.msra.mxu0 0.0
    %1862 = vmatprep.subr.mxu0 0.0
    %1863 = vmatpush1.msra.mxu0 0.0
    %1864 = vmatprep.subr.mxu0 0.0
    %1865 = vmatpush1.msra.mxu0 0.0
    %1866 = vmatprep.subr.mxu0 0.0
    %1867 = vmatpush1.msra.mxu0 0.0
    %1868 = vmatprep.subr.mxu0 0.0
    %1869 = vmatpush1.msra.mxu0 0.0
    %1870 = vmatprep.subr.mxu0 0.0
    %1871 = vmatpush1.msra.mxu0 0.0
    %1872 = vmatprep.subr.mxu0 0.0
    %1873 = vmatpush1.msra.mxu0 0.0
    %1874 = vmatprep.subr.mxu0 0.0
    %1875 = vmatpush1.msra.mxu0 0.0
    %1876 = vmatprep.subr.mxu0 0.0
    %1877 = vmatpush1.msra.mxu0 0.0
    %1878 = vmatprep.subr.mxu0 0.0
    %1879 = vmatpush1.msra.mxu0 0.0
    %1880 = vmatprep.subr.mxu0 0.0
    %1881 = vmatpush1.msra.mxu0 0.0
    %1882 = vmatprep.subr.mxu0 0.0
    %1883 = vmatpush1.msra.mxu0 0.0
    %1884 = vmatprep.mubr.f32.mxu0 0.0
    %1885 = vmatmul.mubr.f32.gmra.mrb[0].mxu0 %v665
    %v1886 = vpop.f32.mrb[0].mxu0
    %v1887 = vadd.f32 %v1564, %v1886
    %v1888 = vpop.f32.mrb[0].mxu0
    %v1889 = vadd.f32 %v1566, %v1888
    %1890 = vdwg.mxu0
    %v1891 = vadd.f32 %v1887, %v1811
    %v1892 = vadd.f32 %v1889, %v1815
    %1893 = vmatprep.subr.mxu0 %v371
    %1894 = vmatpush1.msra.mxu0 %v370
    %1895 = vmatprep.subr.mxu0 %v373
    %1896 = vmatpush1.msra.mxu0 %v372
    %1897 = vmatprep.subr.mxu0 %v375
    %1898 = vmatpush1.msra.mxu0 %v374
    %1899 = vmatprep.subr.mxu0 %v377
    %1900 = vmatpush1.msra.mxu0 %v376
    %1901 = vmatprep.subr.mxu0 %v379
    %1902 = vmatpush1.msra.mxu0 %v378
    %1903 = vmatprep.subr.mxu0 %v381
    %1904 = vmatpush1.msra.mxu0 %v380
    %1905 = vmatprep.subr.mxu0 %v383
    %1906 = vmatpush1.msra.mxu0 %v382
    %1907 = vmatprep.subr.mxu0 %v385
    %1908 = vmatpush1.msra.mxu0 %v384
    %1909 = vmatprep.subr.mxu0 0.0
    %1910 = vmatpush1.msra.mxu0 0.0
    %1911 = vmatprep.subr.mxu0 0.0
    %1912 = vmatpush1.msra.mxu0 0.0
    %1913 = vmatprep.subr.mxu0 0.0
    %1914 = vmatpush1.msra.mxu0 0.0
    %1915 = vmatprep.subr.mxu0 0.0
    %1916 = vmatpush1.msra.mxu0 0.0
    %1917 = vmatprep.subr.mxu0 0.0
    %1918 = vmatpush1.msra.mxu0 0.0
    %1919 = vmatprep.subr.mxu0 0.0
    %1920 = vmatpush1.msra.mxu0 0.0
    %1921 = vmatprep.subr.mxu0 0.0
    %1922 = vmatpush1.msra.mxu0 0.0
    %1923 = vmatprep.subr.mxu0 0.0
    %1924 = vmatpush1.msra.mxu0 0.0
    %1925 = vmatprep.subr.mxu0 0.0
    %1926 = vmatpush1.msra.mxu0 0.0
    %1927 = vmatprep.subr.mxu0 0.0
    %1928 = vmatpush1.msra.mxu0 0.0
    %1929 = vmatprep.subr.mxu0 0.0
    %1930 = vmatpush1.msra.mxu0 0.0
    %1931 = vmatprep.subr.mxu0 0.0
    %1932 = vmatpush1.msra.mxu0 0.0
    %1933 = vmatprep.subr.mxu0 0.0
    %1934 = vmatpush1.msra.mxu0 0.0
    %1935 = vmatprep.subr.mxu0 0.0
    %1936 = vmatpush1.msra.mxu0 0.0
    %1937 = vmatprep.subr.mxu0 0.0
    %1938 = vmatpush1.msra.mxu0 0.0
    %1939 = vmatprep.subr.mxu0 0.0
    %1940 = vmatpush1.msra.mxu0 0.0
    %1941 = vmatprep.subr.mxu0 0.0
    %1942 = vmatpush1.msra.mxu0 0.0
    %1943 = vmatprep.subr.mxu0 0.0
    %1944 = vmatpush1.msra.mxu0 0.0
    %1945 = vmatprep.subr.mxu0 0.0
    %1946 = vmatpush1.msra.mxu0 0.0
    %1947 = vmatprep.subr.mxu0 0.0
    %1948 = vmatpush1.msra.mxu0 0.0
    %1949 = vmatprep.subr.mxu0 0.0
    %1950 = vmatpush1.msra.mxu0 0.0
    %1951 = vmatprep.subr.mxu0 0.0
    %1952 = vmatpush1.msra.mxu0 0.0
    %1953 = vmatprep.subr.mxu0 0.0
    %1954 = vmatpush1.msra.mxu0 0.0
    %1955 = vmatprep.subr.mxu0 0.0
    %1956 = vmatpush1.msra.mxu0 0.0
    %1957 = vmatprep.mubr.f32.mxu0 0.0
    %1958 = vmatmul.mubr.f32.gmra.mrb[0].mxu0 %v831
    %v1959 = vpop.f32.mrb[0].mxu0
    %v1960 = vadd.f32 %v1398, %v1959
    %v1961 = vpop.f32.mrb[0].mxu0
    %v1962 = vadd.f32 %v1400, %v1961
    %1963 = vdwg.mxu0
    %v1964 = vadd.f32 %v1960, %v1811
    %v1965 = vadd.f32 %v1962, %v1815
    %1966 = vmatprep.subr.mxu0 %v371
    %1967 = vmatpush1.msra.mxu0 %v370
    %1968 = vmatprep.subr.mxu0 %v373
    %1969 = vmatpush1.msra.mxu0 %v372
    %1970 = vmatprep.subr.mxu0 %v375
    %1971 = vmatpush1.msra.mxu0 %v374
    %1972 = vmatprep.subr.mxu0 %v377
    %1973 = vmatpush1.msra.mxu0 %v376
    %1974 = vmatprep.subr.mxu0 %v379
    %1975 = vmatpush1.msra.mxu0 %v378
    %1976 = vmatprep.subr.mxu0 %v381
    %1977 = vmatpush1.msra.mxu0 %v380
    %1978 = vmatprep.subr.mxu0 %v383
    %1979 = vmatpush1.msra.mxu0 %v382
    %1980 = vmatprep.subr.mxu0 %v385
    %1981 = vmatpush1.msra.mxu0 %v384
    %1982 = vmatprep.subr.mxu0 0.0
    %1983 = vmatpush1.msra.mxu0 0.0
    %1984 = vmatprep.subr.mxu0 0.0
    %1985 = vmatpush1.msra.mxu0 0.0
    %1986 = vmatprep.subr.mxu0 0.0
    %1987 = vmatpush1.msra.mxu0 0.0
    %1988 = vmatprep.subr.mxu0 0.0
    %1989 = vmatpush1.msra.mxu0 0.0
    %1990 = vmatprep.subr.mxu0 0.0
    %1991 = vmatpush1.msra.mxu0 0.0
    %1992 = vmatprep.subr.mxu0 0.0
    %1993 = vmatpush1.msra.mxu0 0.0
    %1994 = vmatprep.subr.mxu0 0.0
    %1995 = vmatpush1.msra.mxu0 0.0
    %1996 = vmatprep.subr.mxu0 0.0
    %1997 = vmatpush1.msra.mxu0 0.0
    %1998 = vmatprep.subr.mxu0 0.0
    %1999 = vmatpush1.msra.mxu0 0.0
    %2000 = vmatprep.subr.mxu0 0.0
    %2001 = vmatpush1.msra.mxu0 0.0
    %2002 = vmatprep.subr.mxu0 0.0
    %2003 = vmatpush1.msra.mxu0 0.0
    %2004 = vmatprep.subr.mxu0 0.0
    %2005 = vmatpush1.msra.mxu0 0.0
    %2006 = vmatprep.subr.mxu0 0.0
    %2007 = vmatpush1.msra.mxu0 0.0
    %2008 = vmatprep.subr.mxu0 0.0
    %2009 = vmatpush1.msra.mxu0 0.0
    %2010 = vmatprep.subr.mxu0 0.0
    %2011 = vmatpush1.msra.mxu0 0.0
    %2012 = vmatprep.subr.mxu0 0.0
    %2013 = vmatpush1.msra.mxu0 0.0
    %2014 = vmatprep.subr.mxu0 0.0
    %2015 = vmatpush1.msra.mxu0 0.0
    %2016 = vmatprep.subr.mxu0 0.0
    %2017 = vmatpush1.msra.mxu0 0.0
    %2018 = vmatprep.subr.mxu0 0.0
    %2019 = vmatpush1.msra.mxu0 0.0
    %2020 = vmatprep.subr.mxu0 0.0
    %2021 = vmatpush1.msra.mxu0 0.0
    %2022 = vmatprep.subr.mxu0 0.0
    %2023 = vmatpush1.msra.mxu0 0.0
    %2024 = vmatprep.subr.mxu0 0.0
    %2025 = vmatpush1.msra.mxu0 0.0
    %2026 = vmatprep.subr.mxu0 0.0
    %2027 = vmatpush1.msra.mxu0 0.0
    %2028 = vmatprep.subr.mxu0 0.0
    %2029 = vmatpush1.msra.mxu0 0.0
    %2030 = vmatprep.mubr.f32.mxu0 0.0
    %2031 = vmatmul.mubr.f32.gmra.mrb[0].mxu0 %v997
    %v2032 = vpop.f32.mrb[0].mxu0
    %v2033 = vadd.f32 %v1232, %v2032
    %v2034 = vpop.f32.mrb[0].mxu0
    %v2035 = vadd.f32 %v1234, %v2034
    %2036 = vdwg.mxu0
    %v2037 = vadd.f32 %v2033, %v1811
    %v2038 = vadd.f32 %v2035, %v1815
    %2039 = vmatprep.subr.mxu0 %v371
    %2040 = vmatpush1.msra.mxu0 %v370
    %2041 = vmatprep.subr.mxu0 %v373
    %2042 = vmatpush1.msra.mxu0 %v372
    %2043 = vmatprep.subr.mxu0 %v375
    %2044 = vmatpush1.msra.mxu0 %v374
    %2045 = vmatprep.subr.mxu0 %v377
    %2046 = vmatpush1.msra.mxu0 %v376
    %2047 = vmatprep.subr.mxu0 %v379
    %2048 = vmatpush1.msra.mxu0 %v378
    %2049 = vmatprep.subr.mxu0 %v381
    %2050 = vmatpush1.msra.mxu0 %v380
    %2051 = vmatprep.subr.mxu0 %v383
    %2052 = vmatpush1.msra.mxu0 %v382
    %2053 = vmatprep.subr.mxu0 %v385
    %2054 = vmatpush1.msra.mxu0 %v384
    %2055 = vmatprep.subr.mxu0 0.0
    %2056 = vmatpush1.msra.mxu0 0.0
    %2057 = vmatprep.subr.mxu0 0.0
    %2058 = vmatpush1.msra.mxu0 0.0
    %2059 = vmatprep.subr.mxu0 0.0
    %2060 = vmatpush1.msra.mxu0 0.0
    %2061 = vmatprep.subr.mxu0 0.0
    %2062 = vmatpush1.msra.mxu0 0.0
    %2063 = vmatprep.subr.mxu0 0.0
    %2064 = vmatpush1.msra.mxu0 0.0
    %2065 = vmatprep.subr.mxu0 0.0
    %2066 = vmatpush1.msra.mxu0 0.0
    %2067 = vmatprep.subr.mxu0 0.0
    %2068 = vmatpush1.msra.mxu0 0.0
    %2069 = vmatprep.subr.mxu0 0.0
    %2070 = vmatpush1.msra.mxu0 0.0
    %2071 = vmatprep.subr.mxu0 0.0
    %2072 = vmatpush1.msra.mxu0 0.0
    %2073 = vmatprep.subr.mxu0 0.0
    %2074 = vmatpush1.msra.mxu0 0.0
    %2075 = vmatprep.subr.mxu0 0.0
    %2076 = vmatpush1.msra.mxu0 0.0
    %2077 = vmatprep.subr.mxu0 0.0
    %2078 = vmatpush1.msra.mxu0 0.0
    %2079 = vmatprep.subr.mxu0 0.0
    %2080 = vmatpush1.msra.mxu0 0.0
    %2081 = vmatprep.subr.mxu0 0.0
    %2082 = vmatpush1.msra.mxu0 0.0
    %2083 = vmatprep.subr.mxu0 0.0
    %2084 = vmatpush1.msra.mxu0 0.0
    %2085 = vmatprep.subr.mxu0 0.0
    %2086 = vmatpush1.msra.mxu0 0.0
    %2087 = vmatprep.subr.mxu0 0.0
    %2088 = vmatpush1.msra.mxu0 0.0
    %2089 = vmatprep.subr.mxu0 0.0
    %2090 = vmatpush1.msra.mxu0 0.0
    %2091 = vmatprep.subr.mxu0 0.0
    %2092 = vmatpush1.msra.mxu0 0.0
    %2093 = vmatprep.subr.mxu0 0.0
    %2094 = vmatpush1.msra.mxu0 0.0
    %2095 = vmatprep.subr.mxu0 0.0
    %2096 = vmatpush1.msra.mxu0 0.0
    %2097 = vmatprep.subr.mxu0 0.0
    %2098 = vmatpush1.msra.mxu0 0.0
    %2099 = vmatprep.subr.mxu0 0.0
    %2100 = vmatpush1.msra.mxu0 0.0
    %2101 = vmatprep.subr.mxu0 0.0
    %2102 = vmatpush1.msra.mxu0 0.0
    %2103 = vmatprep.mubr.f32.mxu0 0.0
    %2104 = vmatmul.mubr.f32.gmra.mrb[0].mxu0 %v1163
    %v2105 = vpop.f32.mrb[0].mxu0
    %v2106 = vadd.f32 %v1066, %v2105
    %v2107 = vpop.f32.mrb[0].mxu0
    %v2108 = vadd.f32 %v1068, %v2107
    %2109 = vdwg.mxu0
    %v2110 = vadd.f32 %v2106, %v1811
    %v2111 = vadd.f32 %v2108, %v1815
    %2112 = vmatprep.subr.mxu0 %v371
    %2113 = vmatpush1.msra.mxu0 %v370
    %2114 = vmatprep.subr.mxu0 %v373
    %2115 = vmatpush1.msra.mxu0 %v372
    %2116 = vmatprep.subr.mxu0 %v375
    %2117 = vmatpush1.msra.mxu0 %v374
    %2118 = vmatprep.subr.mxu0 %v377
    %2119 = vmatpush1.msra.mxu0 %v376
    %2120 = vmatprep.subr.mxu0 %v379
    %2121 = vmatpush1.msra.mxu0 %v378
    %2122 = vmatprep.subr.mxu0 %v381
    %2123 = vmatpush1.msra.mxu0 %v380
    %2124 = vmatprep.subr.mxu0 %v383
    %2125 = vmatpush1.msra.mxu0 %v382
    %2126 = vmatprep.subr.mxu0 %v385
    %2127 = vmatpush1.msra.mxu0 %v384
    %2128 = vmatprep.subr.mxu0 0.0
    %2129 = vmatpush1.msra.mxu0 0.0
    %2130 = vmatprep.subr.mxu0 0.0
    %2131 = vmatpush1.msra.mxu0 0.0
    %2132 = vmatprep.subr.mxu0 0.0
    %2133 = vmatpush1.msra.mxu0 0.0
    %2134 = vmatprep.subr.mxu0 0.0
    %2135 = vmatpush1.msra.mxu0 0.0
    %2136 = vmatprep.subr.mxu0 0.0
    %2137 = vmatpush1.msra.mxu0 0.0
    %2138 = vmatprep.subr.mxu0 0.0
    %2139 = vmatpush1.msra.mxu0 0.0
    %2140 = vmatprep.subr.mxu0 0.0
    %2141 = vmatpush1.msra.mxu0 0.0
    %2142 = vmatprep.subr.mxu0 0.0
    %2143 = vmatpush1.msra.mxu0 0.0
    %2144 = vmatprep.subr.mxu0 0.0
    %2145 = vmatpush1.msra.mxu0 0.0
    %2146 = vmatprep.subr.mxu0 0.0
    %2147 = vmatpush1.msra.mxu0 0.0
    %2148 = vmatprep.subr.mxu0 0.0
    %2149 = vmatpush1.msra.mxu0 0.0
    %2150 = vmatprep.subr.mxu0 0.0
    %2151 = vmatpush1.msra.mxu0 0.0
    %2152 = vmatprep.subr.mxu0 0.0
    %2153 = vmatpush1.msra.mxu0 0.0
    %2154 = vmatprep.subr.mxu0 0.0
    %2155 = vmatpush1.msra.mxu0 0.0
    %2156 = vmatprep.subr.mxu0 0.0
    %2157 = vmatpush1.msra.mxu0 0.0
    %2158 = vmatprep.subr.mxu0 0.0
    %2159 = vmatpush1.msra.mxu0 0.0
    %2160 = vmatprep.subr.mxu0 0.0
    %2161 = vmatpush1.msra.mxu0 0.0
    %2162 = vmatprep.subr.mxu0 0.0
    %2163 = vmatpush1.msra.mxu0 0.0
    %2164 = vmatprep.subr.mxu0 0.0
    %2165 = vmatpush1.msra.mxu0 0.0
    %2166 = vmatprep.subr.mxu0 0.0
    %2167 = vmatpush1.msra.mxu0 0.0
    %2168 = vmatprep.subr.mxu0 0.0
    %2169 = vmatpush1.msra.mxu0 0.0
    %2170 = vmatprep.subr.mxu0 0.0
    %2171 = vmatpush1.msra.mxu0 0.0
    %2172 = vmatprep.subr.mxu0 0.0
    %2173 = vmatpush1.msra.mxu0 0.0
    %2174 = vmatprep.subr.mxu0 0.0
    %2175 = vmatpush1.msra.mxu0 0.0
    %2176 = vmatprep.mubr.f32.mxu0 0.0
    %2177 = vmatmul.mubr.f32.gmra.mrb[0].mxu0 %v1329
    %v2178 = vpop.f32.mrb[0].mxu0
    %v2179 = vadd.f32 %v900, %v2178
    %v2180 = vpop.f32.mrb[0].mxu0
    %v2181 = vadd.f32 %v902, %v2180
    %2182 = vdwg.mxu0
    %v2183 = vadd.f32 %v2179, %v1811
    %v2184 = vadd.f32 %v2181, %v1815
    %2185 = vmatprep.subr.mxu0 %v371
    %2186 = vmatpush1.msra.mxu0 %v370
    %2187 = vmatprep.subr.mxu0 %v373
    %2188 = vmatpush1.msra.mxu0 %v372
    %2189 = vmatprep.subr.mxu0 %v375
    %2190 = vmatpush1.msra.mxu0 %v374
    %2191 = vmatprep.subr.mxu0 %v377
    %2192 = vmatpush1.msra.mxu0 %v376
    %2193 = vmatprep.subr.mxu0 %v379
    %2194 = vmatpush1.msra.mxu0 %v378
    %2195 = vmatprep.subr.mxu0 %v381
    %2196 = vmatpush1.msra.mxu0 %v380
    %2197 = vmatprep.subr.mxu0 %v383
    %2198 = vmatpush1.msra.mxu0 %v382
    %2199 = vmatprep.subr.mxu0 %v385
    %2200 = vmatpush1.msra.mxu0 %v384
    %2201 = vmatprep.subr.mxu0 0.0
    %2202 = vmatpush1.msra.mxu0 0.0
    %2203 = vmatprep.subr.mxu0 0.0
    %2204 = vmatpush1.msra.mxu0 0.0
    %2205 = vmatprep.subr.mxu0 0.0
    %2206 = vmatpush1.msra.mxu0 0.0
    %2207 = vmatprep.subr.mxu0 0.0
    %2208 = vmatpush1.msra.mxu0 0.0
    %2209 = vmatprep.subr.mxu0 0.0
    %2210 = vmatpush1.msra.mxu0 0.0
    %2211 = vmatprep.subr.mxu0 0.0
    %2212 = vmatpush1.msra.mxu0 0.0
    %2213 = vmatprep.subr.mxu0 0.0
    %2214 = vmatpush1.msra.mxu0 0.0
    %2215 = vmatprep.subr.mxu0 0.0
    %2216 = vmatpush1.msra.mxu0 0.0
    %2217 = vmatprep.subr.mxu0 0.0
    %2218 = vmatpush1.msra.mxu0 0.0
    %2219 = vmatprep.subr.mxu0 0.0
    %2220 = vmatpush1.msra.mxu0 0.0
    %2221 = vmatprep.subr.mxu0 0.0
    %2222 = vmatpush1.msra.mxu0 0.0
    %2223 = vmatprep.subr.mxu0 0.0
    %2224 = vmatpush1.msra.mxu0 0.0
    %2225 = vmatprep.subr.mxu0 0.0
    %2226 = vmatpush1.msra.mxu0 0.0
    %2227 = vmatprep.subr.mxu0 0.0
    %2228 = vmatpush1.msra.mxu0 0.0
    %2229 = vmatprep.subr.mxu0 0.0
    %2230 = vmatpush1.msra.mxu0 0.0
    %2231 = vmatprep.subr.mxu0 0.0
    %2232 = vmatpush1.msra.mxu0 0.0
    %2233 = vmatprep.subr.mxu0 0.0
    %2234 = vmatpush1.msra.mxu0 0.0
    %2235 = vmatprep.subr.mxu0 0.0
    %2236 = vmatpush1.msra.mxu0 0.0
    %2237 = vmatprep.subr.mxu0 0.0
    %2238 = vmatpush1.msra.mxu0 0.0
    %2239 = vmatprep.subr.mxu0 0.0
    %2240 = vmatpush1.msra.mxu0 0.0
    %2241 = vmatprep.subr.mxu0 0.0
    %2242 = vmatpush1.msra.mxu0 0.0
    %2243 = vmatprep.subr.mxu0 0.0
    %2244 = vmatpush1.msra.mxu0 0.0
    %2245 = vmatprep.subr.mxu0 0.0
    %2246 = vmatpush1.msra.mxu0 0.0
    %2247 = vmatprep.subr.mxu0 0.0
    %2248 = vmatpush1.msra.mxu0 0.0
    %2249 = vmatprep.mubr.f32.mxu0 0.0
    %2250 = vmatmul.mubr.f32.gmra.mrb[0].mxu0 %v1495
    %v2251 = vpop.f32.mrb[0].mxu0
    %v2252 = vadd.f32 %v734, %v2251
    %v2253 = vpop.f32.mrb[0].mxu0
    %v2254 = vadd.f32 %v736, %v2253
    %2255 = vdwg.mxu0
    %v2256 = vadd.f32 %v2252, %v1811
    %v2257 = vadd.f32 %v2254, %v1815
    %2258 = vmatprep.subr.mxu0 %v371
    %2259 = vmatpush1.msra.mxu0 %v370
    %2260 = vmatprep.subr.mxu0 %v373
    %2261 = vmatpush1.msra.mxu0 %v372
    %2262 = vmatprep.subr.mxu0 %v375
    %2263 = vmatpush1.msra.mxu0 %v374
    %2264 = vmatprep.subr.mxu0 %v377
    %2265 = vmatpush1.msra.mxu0 %v376
    %2266 = vmatprep.subr.mxu0 %v379
    %2267 = vmatpush1.msra.mxu0 %v378
    %2268 = vmatprep.subr.mxu0 %v381
    %2269 = vmatpush1.msra.mxu0 %v380
    %2270 = vmatprep.subr.mxu0 %v383
    %2271 = vmatpush1.msra.mxu0 %v382
    %2272 = vmatprep.subr.mxu0 %v385
    %2273 = vmatpush1.msra.mxu0 %v384
    %2274 = vmatprep.subr.mxu0 0.0
    %2275 = vmatpush1.msra.mxu0 0.0
    %2276 = vmatprep.subr.mxu0 0.0
    %2277 = vmatpush1.msra.mxu0 0.0
    %2278 = vmatprep.subr.mxu0 0.0
    %2279 = vmatpush1.msra.mxu0 0.0
    %2280 = vmatprep.subr.mxu0 0.0
    %2281 = vmatpush1.msra.mxu0 0.0
    %2282 = vmatprep.subr.mxu0 0.0
    %2283 = vmatpush1.msra.mxu0 0.0
    %2284 = vmatprep.subr.mxu0 0.0
    %2285 = vmatpush1.msra.mxu0 0.0
    %2286 = vmatprep.subr.mxu0 0.0
    %2287 = vmatpush1.msra.mxu0 0.0
    %2288 = vmatprep.subr.mxu0 0.0
    %2289 = vmatpush1.msra.mxu0 0.0
    %2290 = vmatprep.subr.mxu0 0.0
    %2291 = vmatpush1.msra.mxu0 0.0
    %2292 = vmatprep.subr.mxu0 0.0
    %2293 = vmatpush1.msra.mxu0 0.0
    %2294 = vmatprep.subr.mxu0 0.0
    %2295 = vmatpush1.msra.mxu0 0.0
    %2296 = vmatprep.subr.mxu0 0.0
    %2297 = vmatpush1.msra.mxu0 0.0
    %2298 = vmatprep.subr.mxu0 0.0
    %2299 = vmatpush1.msra.mxu0 0.0
    %2300 = vmatprep.subr.mxu0 0.0
    %2301 = vmatpush1.msra.mxu0 0.0
    %2302 = vmatprep.subr.mxu0 0.0
    %2303 = vmatpush1.msra.mxu0 0.0
    %2304 = vmatprep.subr.mxu0 0.0
    %2305 = vmatpush1.msra.mxu0 0.0
    %2306 = vmatprep.subr.mxu0 0.0
    %2307 = vmatpush1.msra.mxu0 0.0
    %2308 = vmatprep.subr.mxu0 0.0
    %2309 = vmatpush1.msra.mxu0 0.0
    %2310 = vmatprep.subr.mxu0 0.0
    %2311 = vmatpush1.msra.mxu0 0.0
    %2312 = vmatprep.subr.mxu0 0.0
    %2313 = vmatpush1.msra.mxu0 0.0
    %2314 = vmatprep.subr.mxu0 0.0
    %2315 = vmatpush1.msra.mxu0 0.0
    %2316 = vmatprep.subr.mxu0 0.0
    %2317 = vmatpush1.msra.mxu0 0.0
    %2318 = vmatprep.subr.mxu0 0.0
    %2319 = vmatpush1.msra.mxu0 0.0
    %2320 = vmatprep.subr.mxu0 0.0
    %2321 = vmatpush1.msra.mxu0 0.0
    %2322 = vmatprep.mubr.f32.mxu0 0.0
    %2323 = vmatmul.mubr.f32.gmra.mrb[0].mxu0 %v1661
    %v2324 = vpop.f32.mrb[0].mxu0
    %v2325 = vadd.f32 %v568, %v2324
    %v2326 = vpop.f32.mrb[0].mxu0
    %v2327 = vadd.f32 %v570, %v2326
    %2328 = vdwg.mxu0
    %v2329 = vadd.f32 %v2325, %v1811
    %v2330 = vadd.f32 %v2327, %v1815
    %v2331 = vld [vmem:[%s1 + $0x200] sm:$0xff]
    %v2332 = vld [vmem:[%s1 + $0x208] sm:$0xff]
    %v2333 = vld [vmem:[%s1 + $0x210] sm:$0xff]
    %v2334 = vld [vmem:[%s1 + $0x218] sm:$0xff]
    %v2335 = vld [vmem:[%s1 + $0x220] sm:$0xff]
    %v2336 = vld [vmem:[%s1 + $0x228] sm:$0xff]
    %v2337 = vld [vmem:[%s1 + $0x230] sm:$0xff]
    %v2338 = vld [vmem:[%s1 + $0x238] sm:$0xff]
    %v2339 = vld [vmem:[%s1 + $0x240] sm:$0xff]
    %v2340 = vld [vmem:[%s1 + $0x248] sm:$0xff]
    %v2341 = vld [vmem:[%s1 + $0x250] sm:$0xff]
    %v2342 = vld [vmem:[%s1 + $0x258] sm:$0xff]
    %v2343 = vld [vmem:[%s1 + $0x260] sm:$0xff]
    %v2344 = vld [vmem:[%s1 + $0x268] sm:$0xff]
    %v2345 = vld [vmem:[%s1 + $0x270] sm:$0xff]
    %v2346 = vld [vmem:[%s1 + $0x278] sm:$0xff]
    %v2347 = vld [vmem:[%s1 + $0x3c2] ss:$0 sm:$0xff]
    %2348 = vmatprep.subr.mxu0 %v2332
    %2349 = vmatpush1.msra.mxu0 %v2331
    %2350 = vmatprep.subr.mxu0 %v2334
    %2351 = vmatpush1.msra.mxu0 %v2333
    %2352 = vmatprep.subr.mxu0 %v2336
    %2353 = vmatpush1.msra.mxu0 %v2335
    %2354 = vmatprep.subr.mxu0 %v2338
    %2355 = vmatpush1.msra.mxu0 %v2337
    %2356 = vmatprep.subr.mxu0 %v2340
    %2357 = vmatpush1.msra.mxu0 %v2339
    %2358 = vmatprep.subr.mxu0 %v2342
    %2359 = vmatpush1.msra.mxu0 %v2341
    %2360 = vmatprep.subr.mxu0 %v2344
    %2361 = vmatpush1.msra.mxu0 %v2343
    %2362 = vmatprep.subr.mxu0 %v2346
    %2363 = vmatpush1.msra.mxu0 %v2345
    %2364 = vmatprep.subr.mxu0 0.0
    %2365 = vmatpush1.msra.mxu0 0.0
    %2366 = vmatprep.subr.mxu0 0.0
    %2367 = vmatpush1.msra.mxu0 0.0
    %2368 = vmatprep.subr.mxu0 0.0
    %2369 = vmatpush1.msra.mxu0 0.0
    %2370 = vmatprep.subr.mxu0 0.0
    %2371 = vmatpush1.msra.mxu0 0.0
    %2372 = vmatprep.subr.mxu0 0.0
    %2373 = vmatpush1.msra.mxu0 0.0
    %2374 = vmatprep.subr.mxu0 0.0
    %2375 = vmatpush1.msra.mxu0 0.0
    %2376 = vmatprep.subr.mxu0 0.0
    %2377 = vmatpush1.msra.mxu0 0.0
    %2378 = vmatprep.subr.mxu0 0.0
    %2379 = vmatpush1.msra.mxu0 0.0
    %2380 = vmatprep.subr.mxu0 0.0
    %2381 = vmatpush1.msra.mxu0 0.0
    %2382 = vmatprep.subr.mxu0 0.0
    %2383 = vmatpush1.msra.mxu0 0.0
    %2384 = vmatprep.subr.mxu0 0.0
    %2385 = vmatpush1.msra.mxu0 0.0
    %2386 = vmatprep.subr.mxu0 0.0
    %2387 = vmatpush1.msra.mxu0 0.0
    %2388 = vmatprep.subr.mxu0 0.0
    %2389 = vmatpush1.msra.mxu0 0.0
    %2390 = vmatprep.subr.mxu0 0.0
    %2391 = vmatpush1.msra.mxu0 0.0
    %2392 = vmatprep.subr.mxu0 0.0
    %2393 = vmatpush1.msra.mxu0 0.0
    %2394 = vmatprep.subr.mxu0 0.0
    %2395 = vmatpush1.msra.mxu0 0.0
    %2396 = vmatprep.subr.mxu0 0.0
    %2397 = vmatpush1.msra.mxu0 0.0
    %2398 = vmatprep.subr.mxu0 0.0
    %2399 = vmatpush1.msra.mxu0 0.0
    %2400 = vmatprep.subr.mxu0 0.0
    %2401 = vmatpush1.msra.mxu0 0.0
    %2402 = vmatprep.subr.mxu0 0.0
    %2403 = vmatpush1.msra.mxu0 0.0
    %2404 = vmatprep.subr.mxu0 0.0
    %2405 = vmatpush1.msra.mxu0 0.0
    %2406 = vmatprep.subr.mxu0 0.0
    %2407 = vmatpush1.msra.mxu0 0.0
    %2408 = vmatprep.subr.mxu0 0.0
    %2409 = vmatpush1.msra.mxu0 0.0
    %2410 = vmatprep.subr.mxu0 0.0
    %2411 = vmatpush1.msra.mxu0 0.0
    %2412 = vmatprep.mubr.f32.mxu0 0.0
    %2413 = vmatmul.mubr.f32.gmra.mrb[0].mxu0 %v404
    %v2414 = vpop.f32.mrb[0].mxu0
    %v2415 = vadd.f32 0.0, %v2414
    %v2416 = vpop.f32.mrb[0].mxu0
    %v2417 = vadd.f32 0.0, %v2416
    %2418 = vdwg.mxu0
    %v2419 = vadd.f32 %v1818, %v2415
    %v2420 = vxor.u32 %v2419, 2147483648
    %v2421 = vmul.f32 %v2420, 1.442695
    %v2422 = vpow.pop %v2421
    %v2423 = vadd.f32 %v2422, 1.0
    %v2424 = vrcp.pop %v2423
    %v2425 = vmul.f32 1.0, %v2424
    %v2426 = vadd.f32 %v2417, %v2347
    %v2427 = vmul.f32 %v2425, %v2426
    %v2428 = vadd.f32 %v1819, %v2427
    %v2429 = vtanh.pop %v2428
    %v2430 = vsub.f32 1.0, %v2425
    %2432 = vrot.lane.b32.xlu0 %v2429, 64
    %v2433 = vpop.permute.xlu0 %2432
    %v2435 = vmul.f32 %v2430, %v2433
    %v2436 = vmul.f32 %v2425, 0.0
    %v2437 = vadd.f32 %v2435, %v2436
    %2439 = vrot.lane.b32.xlu0 %v2437, 64
    %v2440 = vpop.permute.xlu0 %2439
    %v2441 = vsel %vm402, %v2440, 0
    %2443 = vmatprep.subr.mxu0 %v2332
    %2444 = vmatpush1.msra.mxu0 %v2331
    %2445 = vmatprep.subr.mxu0 %v2334
    %2446 = vmatpush1.msra.mxu0 %v2333
    %2447 = vmatprep.subr.mxu0 %v2336
    %2448 = vmatpush1.msra.mxu0 %v2335
    %2449 = vmatprep.subr.mxu0 %v2338
    %2450 = vmatpush1.msra.mxu0 %v2337
    %2451 = vmatprep.subr.mxu0 %v2340
    %2452 = vmatpush1.msra.mxu0 %v2339
    %2453 = vmatprep.subr.mxu0 %v2342
    %2454 = vmatpush1.msra.mxu0 %v2341
    %2455 = vmatprep.subr.mxu0 %v2344
    %2456 = vmatpush1.msra.mxu0 %v2343
    %2457 = vmatprep.subr.mxu0 %v2346
    %2458 = vmatpush1.msra.mxu0 %v2345
    %2459 = vmatprep.subr.mxu0 0.0
    %2460 = vmatpush1.msra.mxu0 0.0
    %2461 = vmatprep.subr.mxu0 0.0
    %2462 = vmatpush1.msra.mxu0 0.0
    %2463 = vmatprep.subr.mxu0 0.0
    %2464 = vmatpush1.msra.mxu0 0.0
    %2465 = vmatprep.subr.mxu0 0.0
    %2466 = vmatpush1.msra.mxu0 0.0
    %2467 = vmatprep.subr.mxu0 0.0
    %2468 = vmatpush1.msra.mxu0 0.0
    %2469 = vmatprep.subr.mxu0 0.0
    %2470 = vmatpush1.msra.mxu0 0.0
    %2471 = vmatprep.subr.mxu0 0.0
    %2472 = vmatpush1.msra.mxu0 0.0
    %2473 = vmatprep.subr.mxu0 0.0
    %2474 = vmatpush1.msra.mxu0 0.0
    %2475 = vmatprep.subr.mxu0 0.0
    %2476 = vmatpush1.msra.mxu0 0.0
    %2477 = vmatprep.subr.mxu0 0.0
    %2478 = vmatpush1.msra.mxu0 0.0
    %2479 = vmatprep.subr.mxu0 0.0
    %2480 = vmatpush1.msra.mxu0 0.0
    %2481 = vmatprep.subr.mxu0 0.0
    %2482 = vmatpush1.msra.mxu0 0.0
    %2483 = vmatprep.subr.mxu0 0.0
    %2484 = vmatpush1.msra.mxu0 0.0
    %2485 = vmatprep.subr.mxu0 0.0
    %2486 = vmatpush1.msra.mxu0 0.0
    %2487 = vmatprep.subr.mxu0 0.0
    %2488 = vmatpush1.msra.mxu0 0.0
    %2489 = vmatprep.subr.mxu0 0.0
    %2490 = vmatpush1.msra.mxu0 0.0
    %2491 = vmatprep.subr.mxu0 0.0
    %2492 = vmatpush1.msra.mxu0 0.0
    %2493 = vmatprep.subr.mxu0 0.0
    %2494 = vmatpush1.msra.mxu0 0.0
    %2495 = vmatprep.subr.mxu0 0.0
    %2496 = vmatpush1.msra.mxu0 0.0
    %2497 = vmatprep.subr.mxu0 0.0
    %2498 = vmatpush1.msra.mxu0 0.0
    %2499 = vmatprep.subr.mxu0 0.0
    %2500 = vmatpush1.msra.mxu0 0.0
    %2501 = vmatprep.subr.mxu0 0.0
    %2502 = vmatpush1.msra.mxu0 0.0
    %2503 = vmatprep.subr.mxu0 0.0
    %2504 = vmatpush1.msra.mxu0 0.0
    %2505 = vmatprep.subr.mxu0 0.0
    %2506 = vmatpush1.msra.mxu0 0.0
    %2507 = vmatprep.mubr.f32.mxu0 0.0
    %2508 = vmatmul.mubr.f32.gmra.mrb[0].mxu0 %v2441
    %v2509 = vpop.f32.mrb[0].mxu0
    %v2510 = vadd.f32 0.0, %v2509
    %v2511 = vpop.f32.mrb[0].mxu0
    %v2512 = vadd.f32 0.0, %v2511
    %2513 = vdwg.mxu0
    %v2514 = vadd.f32 %v1891, %v2510
    %v2515 = vxor.u32 %v2514, 2147483648
    %v2516 = vmul.f32 %v2515, 1.442695
    %v2517 = vpow.pop %v2516
    %v2518 = vadd.f32 %v2517, 1.0
    %v2519 = vrcp.pop %v2518
    %v2520 = vmul.f32 1.0, %v2519
    %v2521 = vadd.f32 %v2512, %v2347
    %v2522 = vmul.f32 %v2520, %v2521
    %v2523 = vadd.f32 %v1892, %v2522
    %v2524 = vtanh.pop %v2523
    %v2525 = vsub.f32 1.0, %v2520
    %2527 = vrot.lane.b32.xlu0 %v2524, 64
    %v2528 = vpop.permute.xlu0 %2527
    %v2530 = vmul.f32 %v2525, %v2528
    %v2531 = vmul.f32 %v2520, %v2437
    %v2532 = vadd.f32 %v2530, %v2531
    %2534 = vrot.lane.b32.xlu0 %v2532, 64
    %v2535 = vpop.permute.xlu0 %2534
    %v2536 = vsel %vm402, %v2535, 0
    %2538 = vmatprep.subr.mxu0 %v2332
    %2539 = vmatpush1.msra.mxu0 %v2331
    %2540 = vmatprep.subr.mxu0 %v2334
    %2541 = vmatpush1.msra.mxu0 %v2333
    %2542 = vmatprep.subr.mxu0 %v2336
    %2543 = vmatpush1.msra.mxu0 %v2335
    %2544 = vmatprep.subr.mxu0 %v2338
    %2545 = vmatpush1.msra.mxu0 %v2337
    %2546 = vmatprep.subr.mxu0 %v2340
    %2547 = vmatpush1.msra.mxu0 %v2339
    %2548 = vmatprep.subr.mxu0 %v2342
    %2549 = vmatpush1.msra.mxu0 %v2341
    %2550 = vmatprep.subr.mxu0 %v2344
    %2551 = vmatpush1.msra.mxu0 %v2343
    %2552 = vmatprep.subr.mxu0 %v2346
    %2553 = vmatpush1.msra.mxu0 %v2345
    %2554 = vmatprep.subr.mxu0 0.0
    %2555 = vmatpush1.msra.mxu0 0.0
    %2556 = vmatprep.subr.mxu0 0.0
    %2557 = vmatpush1.msra.mxu0 0.0
    %2558 = vmatprep.subr.mxu0 0.0
    %2559 = vmatpush1.msra.mxu0 0.0
    %2560 = vmatprep.subr.mxu0 0.0
    %2561 = vmatpush1.msra.mxu0 0.0
    %2562 = vmatprep.subr.mxu0 0.0
    %2563 = vmatpush1.msra.mxu0 0.0
    %2564 = vmatprep.subr.mxu0 0.0
    %2565 = vmatpush1.msra.mxu0 0.0
    %2566 = vmatprep.subr.mxu0 0.0
    %2567 = vmatpush1.msra.mxu0 0.0
    %2568 = vmatprep.subr.mxu0 0.0
    %2569 = vmatpush1.msra.mxu0 0.0
    %2570 = vmatprep.subr.mxu0 0.0
    %2571 = vmatpush1.msra.mxu0 0.0
    %2572 = vmatprep.subr.mxu0 0.0
    %2573 = vmatpush1.msra.mxu0 0.0
    %2574 = vmatprep.subr.mxu0 0.0
    %2575 = vmatpush1.msra.mxu0 0.0
    %2576 = vmatprep.subr.mxu0 0.0
    %2577 = vmatpush1.msra.mxu0 0.0
    %2578 = vmatprep.subr.mxu0 0.0
    %2579 = vmatpush1.msra.mxu0 0.0
    %2580 = vmatprep.subr.mxu0 0.0
    %2581 = vmatpush1.msra.mxu0 0.0
    %2582 = vmatprep.subr.mxu0 0.0
    %2583 = vmatpush1.msra.mxu0 0.0
    %2584 = vmatprep.subr.mxu0 0.0
    %2585 = vmatpush1.msra.mxu0 0.0
    %2586 = vmatprep.subr.mxu0 0.0
    %2587 = vmatpush1.msra.mxu0 0.0
    %2588 = vmatprep.subr.mxu0 0.0
    %2589 = vmatpush1.msra.mxu0 0.0
    %2590 = vmatprep.subr.mxu0 0.0
    %2591 = vmatpush1.msra.mxu0 0.0
    %2592 = vmatprep.subr.mxu0 0.0
    %2593 = vmatpush1.msra.mxu0 0.0
    %2594 = vmatprep.subr.mxu0 0.0
    %2595 = vmatpush1.msra.mxu0 0.0
    %2596 = vmatprep.subr.mxu0 0.0
    %2597 = vmatpush1.msra.mxu0 0.0
    %2598 = vmatprep.subr.mxu0 0.0
    %2599 = vmatpush1.msra.mxu0 0.0
    %2600 = vmatprep.subr.mxu0 0.0
    %2601 = vmatpush1.msra.mxu0 0.0
    %2602 = vmatprep.mubr.f32.mxu0 0.0
    %2603 = vmatmul.mubr.f32.gmra.mrb[0].mxu0 %v2536
    %v2604 = vpop.f32.mrb[0].mxu0
    %v2605 = vadd.f32 0.0, %v2604
    %v2606 = vpop.f32.mrb[0].mxu0
    %v2607 = vadd.f32 0.0, %v2606
    %2608 = vdwg.mxu0
    %v2609 = vadd.f32 %v1964, %v2605
    %v2610 = vxor.u32 %v2609, 2147483648
    %v2611 = vmul.f32 %v2610, 1.442695
    %v2612 = vpow.pop %v2611
    %v2613 = vadd.f32 %v2612, 1.0
    %v2614 = vrcp.pop %v2613
    %v2615 = vmul.f32 1.0, %v2614
    %v2616 = vadd.f32 %v2607, %v2347
    %v2617 = vmul.f32 %v2615, %v2616
    %v2618 = vadd.f32 %v1965, %v2617
    %v2619 = vtanh.pop %v2618
    %v2620 = vsub.f32 1.0, %v2615
    %2622 = vrot.lane.b32.xlu0 %v2619, 64
    %v2623 = vpop.permute.xlu0 %2622
    %v2625 = vmul.f32 %v2620, %v2623
    %v2626 = vmul.f32 %v2615, %v2532
    %v2627 = vadd.f32 %v2625, %v2626
    %2629 = vrot.lane.b32.xlu0 %v2627, 64
    %v2630 = vpop.permute.xlu0 %2629
    %v2631 = vsel %vm402, %v2630, 0
    %2633 = vmatprep.subr.mxu0 %v2332
    %2634 = vmatpush1.msra.mxu0 %v2331
    %2635 = vmatprep.subr.mxu0 %v2334
    %2636 = vmatpush1.msra.mxu0 %v2333
    %2637 = vmatprep.subr.mxu0 %v2336
    %2638 = vmatpush1.msra.mxu0 %v2335
    %2639 = vmatprep.subr.mxu0 %v2338
    %2640 = vmatpush1.msra.mxu0 %v2337
    %2641 = vmatprep.subr.mxu0 %v2340
    %2642 = vmatpush1.msra.mxu0 %v2339
    %2643 = vmatprep.subr.mxu0 %v2342
    %2644 = vmatpush1.msra.mxu0 %v2341
    %2645 = vmatprep.subr.mxu0 %v2344
    %2646 = vmatpush1.msra.mxu0 %v2343
    %2647 = vmatprep.subr.mxu0 %v2346
    %2648 = vmatpush1.msra.mxu0 %v2345
    %2649 = vmatprep.subr.mxu0 0.0
    %2650 = vmatpush1.msra.mxu0 0.0
    %2651 = vmatprep.subr.mxu0 0.0
    %2652 = vmatpush1.msra.mxu0 0.0
    %2653 = vmatprep.subr.mxu0 0.0
    %2654 = vmatpush1.msra.mxu0 0.0
    %2655 = vmatprep.subr.mxu0 0.0
    %2656 = vmatpush1.msra.mxu0 0.0
    %2657 = vmatprep.subr.mxu0 0.0
    %2658 = vmatpush1.msra.mxu0 0.0
    %2659 = vmatprep.subr.mxu0 0.0
    %2660 = vmatpush1.msra.mxu0 0.0
    %2661 = vmatprep.subr.mxu0 0.0
    %2662 = vmatpush1.msra.mxu0 0.0
    %2663 = vmatprep.subr.mxu0 0.0
    %2664 = vmatpush1.msra.mxu0 0.0
    %2665 = vmatprep.subr.mxu0 0.0
    %2666 = vmatpush1.msra.mxu0 0.0
    %2667 = vmatprep.subr.mxu0 0.0
    %2668 = vmatpush1.msra.mxu0 0.0
    %2669 = vmatprep.subr.mxu0 0.0
    %2670 = vmatpush1.msra.mxu0 0.0
    %2671 = vmatprep.subr.mxu0 0.0
    %2672 = vmatpush1.msra.mxu0 0.0
    %2673 = vmatprep.subr.mxu0 0.0
    %2674 = vmatpush1.msra.mxu0 0.0
    %2675 = vmatprep.subr.mxu0 0.0
    %2676 = vmatpush1.msra.mxu0 0.0
    %2677 = vmatprep.subr.mxu0 0.0
    %2678 = vmatpush1.msra.mxu0 0.0
    %2679 = vmatprep.subr.mxu0 0.0
    %2680 = vmatpush1.msra.mxu0 0.0
    %2681 = vmatprep.subr.mxu0 0.0
    %2682 = vmatpush1.msra.mxu0 0.0
    %2683 = vmatprep.subr.mxu0 0.0
    %2684 = vmatpush1.msra.mxu0 0.0
    %2685 = vmatprep.subr.mxu0 0.0
    %2686 = vmatpush1.msra.mxu0 0.0
    %2687 = vmatprep.subr.mxu0 0.0
    %2688 = vmatpush1.msra.mxu0 0.0
    %2689 = vmatprep.subr.mxu0 0.0
    %2690 = vmatpush1.msra.mxu0 0.0
    %2691 = vmatprep.subr.mxu0 0.0
    %2692 = vmatpush1.msra.mxu0 0.0
    %2693 = vmatprep.subr.mxu0 0.0
    %2694 = vmatpush1.msra.mxu0 0.0
    %2695 = vmatprep.subr.mxu0 0.0
    %2696 = vmatpush1.msra.mxu0 0.0
    %2697 = vmatprep.mubr.f32.mxu0 0.0
    %2698 = vmatmul.mubr.f32.gmra.mrb[0].mxu0 %v2631
    %v2699 = vpop.f32.mrb[0].mxu0
    %v2700 = vadd.f32 0.0, %v2699
    %v2701 = vpop.f32.mrb[0].mxu0
    %v2702 = vadd.f32 0.0, %v2701
    %2703 = vdwg.mxu0
    %v2704 = vadd.f32 %v2037, %v2700
    %v2705 = vxor.u32 %v2704, 2147483648
    %v2706 = vmul.f32 %v2705, 1.442695
    %v2707 = vpow.pop %v2706
    %v2708 = vadd.f32 %v2707, 1.0
    %v2709 = vrcp.pop %v2708
    %v2710 = vmul.f32 1.0, %v2709
    %v2711 = vadd.f32 %v2702, %v2347
    %v2712 = vmul.f32 %v2710, %v2711
    %v2713 = vadd.f32 %v2038, %v2712
    %v2714 = vtanh.pop %v2713
    %v2715 = vsub.f32 1.0, %v2710
    %2717 = vrot.lane.b32.xlu0 %v2714, 64
    %v2718 = vpop.permute.xlu0 %2717
    %v2720 = vmul.f32 %v2715, %v2718
    %v2721 = vmul.f32 %v2710, %v2627
    %v2722 = vadd.f32 %v2720, %v2721
    %2724 = vrot.lane.b32.xlu0 %v2722, 64
    %v2725 = vpop.permute.xlu0 %2724
    %v2726 = vsel %vm402, %v2725, 0
    %2728 = vmatprep.subr.mxu0 %v2332
    %2729 = vmatpush1.msra.mxu0 %v2331
    %2730 = vmatprep.subr.mxu0 %v2334
    %2731 = vmatpush1.msra.mxu0 %v2333
    %2732 = vmatprep.subr.mxu0 %v2336
    %2733 = vmatpush1.msra.mxu0 %v2335
    %2734 = vmatprep.subr.mxu0 %v2338
    %2735 = vmatpush1.msra.mxu0 %v2337
    %2736 = vmatprep.subr.mxu0 %v2340
    %2737 = vmatpush1.msra.mxu0 %v2339
    %2738 = vmatprep.subr.mxu0 %v2342
    %2739 = vmatpush1.msra.mxu0 %v2341
    %2740 = vmatprep.subr.mxu0 %v2344
    %2741 = vmatpush1.msra.mxu0 %v2343
    %2742 = vmatprep.subr.mxu0 %v2346
    %2743 = vmatpush1.msra.mxu0 %v2345
    %2744 = vmatprep.subr.mxu0 0.0
    %2745 = vmatpush1.msra.mxu0 0.0
    %2746 = vmatprep.subr.mxu0 0.0
    %2747 = vmatpush1.msra.mxu0 0.0
    %2748 = vmatprep.subr.mxu0 0.0
    %2749 = vmatpush1.msra.mxu0 0.0
    %2750 = vmatprep.subr.mxu0 0.0
    %2751 = vmatpush1.msra.mxu0 0.0
    %2752 = vmatprep.subr.mxu0 0.0
    %2753 = vmatpush1.msra.mxu0 0.0
    %2754 = vmatprep.subr.mxu0 0.0
    %2755 = vmatpush1.msra.mxu0 0.0
    %2756 = vmatprep.subr.mxu0 0.0
    %2757 = vmatpush1.msra.mxu0 0.0
    %2758 = vmatprep.subr.mxu0 0.0
    %2759 = vmatpush1.msra.mxu0 0.0
    %2760 = vmatprep.subr.mxu0 0.0
    %2761 = vmatpush1.msra.mxu0 0.0
    %2762 = vmatprep.subr.mxu0 0.0
    %2763 = vmatpush1.msra.mxu0 0.0
    %2764 = vmatprep.subr.mxu0 0.0
    %2765 = vmatpush1.msra.mxu0 0.0
    %2766 = vmatprep.subr.mxu0 0.0
    %2767 = vmatpush1.msra.mxu0 0.0
    %2768 = vmatprep.subr.mxu0 0.0
    %2769 = vmatpush1.msra.mxu0 0.0
    %2770 = vmatprep.subr.mxu0 0.0
    %2771 = vmatpush1.msra.mxu0 0.0
    %2772 = vmatprep.subr.mxu0 0.0
    %2773 = vmatpush1.msra.mxu0 0.0
    %2774 = vmatprep.subr.mxu0 0.0
    %2775 = vmatpush1.msra.mxu0 0.0
    %2776 = vmatprep.subr.mxu0 0.0
    %2777 = vmatpush1.msra.mxu0 0.0
    %2778 = vmatprep.subr.mxu0 0.0
    %2779 = vmatpush1.msra.mxu0 0.0
    %2780 = vmatprep.subr.mxu0 0.0
    %2781 = vmatpush1.msra.mxu0 0.0
    %2782 = vmatprep.subr.mxu0 0.0
    %2783 = vmatpush1.msra.mxu0 0.0
    %2784 = vmatprep.subr.mxu0 0.0
    %2785 = vmatpush1.msra.mxu0 0.0
    %2786 = vmatprep.subr.mxu0 0.0
    %2787 = vmatpush1.msra.mxu0 0.0
    %2788 = vmatprep.subr.mxu0 0.0
    %2789 = vmatpush1.msra.mxu0 0.0
    %2790 = vmatprep.subr.mxu0 0.0
    %2791 = vmatpush1.msra.mxu0 0.0
    %2792 = vmatprep.mubr.f32.mxu0 0.0
    %2793 = vmatmul.mubr.f32.gmra.mrb[0].mxu0 %v2726
    %v2794 = vpop.f32.mrb[0].mxu0
    %v2795 = vadd.f32 0.0, %v2794
    %v2796 = vpop.f32.mrb[0].mxu0
    %v2797 = vadd.f32 0.0, %v2796
    %2798 = vdwg.mxu0
    %v2799 = vadd.f32 %v2110, %v2795
    %v2800 = vxor.u32 %v2799, 2147483648
    %v2801 = vmul.f32 %v2800, 1.442695
    %v2802 = vpow.pop %v2801
    %v2803 = vadd.f32 %v2802, 1.0
    %v2804 = vrcp.pop %v2803
    %v2805 = vmul.f32 1.0, %v2804
    %v2806 = vadd.f32 %v2797, %v2347
    %v2807 = vmul.f32 %v2805, %v2806
    %v2808 = vadd.f32 %v2111, %v2807
    %v2809 = vtanh.pop %v2808
    %v2810 = vsub.f32 1.0, %v2805
    %2812 = vrot.lane.b32.xlu0 %v2809, 64
    %v2813 = vpop.permute.xlu0 %2812
    %v2815 = vmul.f32 %v2810, %v2813
    %v2816 = vmul.f32 %v2805, %v2722
    %v2817 = vadd.f32 %v2815, %v2816
    %2819 = vrot.lane.b32.xlu0 %v2817, 64
    %v2820 = vpop.permute.xlu0 %2819
    %v2821 = vsel %vm402, %v2820, 0
    %2823 = vmatprep.subr.mxu0 %v2332
    %2824 = vmatpush1.msra.mxu0 %v2331
    %2825 = vmatprep.subr.mxu0 %v2334
    %2826 = vmatpush1.msra.mxu0 %v2333
    %2827 = vmatprep.subr.mxu0 %v2336
    %2828 = vmatpush1.msra.mxu0 %v2335
    %2829 = vmatprep.subr.mxu0 %v2338
    %2830 = vmatpush1.msra.mxu0 %v2337
    %2831 = vmatprep.subr.mxu0 %v2340
    %2832 = vmatpush1.msra.mxu0 %v2339
    %2833 = vmatprep.subr.mxu0 %v2342
    %2834 = vmatpush1.msra.mxu0 %v2341
    %2835 = vmatprep.subr.mxu0 %v2344
    %2836 = vmatpush1.msra.mxu0 %v2343
    %2837 = vmatprep.subr.mxu0 %v2346
    %2838 = vmatpush1.msra.mxu0 %v2345
    %2839 = vmatprep.subr.mxu0 0.0
    %2840 = vmatpush1.msra.mxu0 0.0
    %2841 = vmatprep.subr.mxu0 0.0
    %2842 = vmatpush1.msra.mxu0 0.0
    %2843 = vmatprep.subr.mxu0 0.0
    %2844 = vmatpush1.msra.mxu0 0.0
    %2845 = vmatprep.subr.mxu0 0.0
    %2846 = vmatpush1.msra.mxu0 0.0
    %2847 = vmatprep.subr.mxu0 0.0
    %2848 = vmatpush1.msra.mxu0 0.0
    %2849 = vmatprep.subr.mxu0 0.0
    %2850 = vmatpush1.msra.mxu0 0.0
    %2851 = vmatprep.subr.mxu0 0.0
    %2852 = vmatpush1.msra.mxu0 0.0
    %2853 = vmatprep.subr.mxu0 0.0
    %2854 = vmatpush1.msra.mxu0 0.0
    %2855 = vmatprep.subr.mxu0 0.0
    %2856 = vmatpush1.msra.mxu0 0.0
    %2857 = vmatprep.subr.mxu0 0.0
    %2858 = vmatpush1.msra.mxu0 0.0
    %2859 = vmatprep.subr.mxu0 0.0
    %2860 = vmatpush1.msra.mxu0 0.0
    %2861 = vmatprep.subr.mxu0 0.0
    %2862 = vmatpush1.msra.mxu0 0.0
    %2863 = vmatprep.subr.mxu0 0.0
    %2864 = vmatpush1.msra.mxu0 0.0
    %2865 = vmatprep.subr.mxu0 0.0
    %2866 = vmatpush1.msra.mxu0 0.0
    %2867 = vmatprep.subr.mxu0 0.0
    %2868 = vmatpush1.msra.mxu0 0.0
    %2869 = vmatprep.subr.mxu0 0.0
    %2870 = vmatpush1.msra.mxu0 0.0
    %2871 = vmatprep.subr.mxu0 0.0
    %2872 = vmatpush1.msra.mxu0 0.0
    %2873 = vmatprep.subr.mxu0 0.0
    %2874 = vmatpush1.msra.mxu0 0.0
    %2875 = vmatprep.subr.mxu0 0.0
    %2876 = vmatpush1.msra.mxu0 0.0
    %2877 = vmatprep.subr.mxu0 0.0
    %2878 = vmatpush1.msra.mxu0 0.0
    %2879 = vmatprep.subr.mxu0 0.0
    %2880 = vmatpush1.msra.mxu0 0.0
    %2881 = vmatprep.subr.mxu0 0.0
    %2882 = vmatpush1.msra.mxu0 0.0
    %2883 = vmatprep.subr.mxu0 0.0
    %2884 = vmatpush1.msra.mxu0 0.0
    %2885 = vmatprep.subr.mxu0 0.0
    %2886 = vmatpush1.msra.mxu0 0.0
    %2887 = vmatprep.mubr.f32.mxu0 0.0
    %2888 = vmatmul.mubr.f32.gmra.mrb[0].mxu0 %v2821
    %v2889 = vpop.f32.mrb[0].mxu0
    %v2890 = vadd.f32 0.0, %v2889
    %v2891 = vpop.f32.mrb[0].mxu0
    %v2892 = vadd.f32 0.0, %v2891
    %2893 = vdwg.mxu0
    %v2894 = vadd.f32 %v2183, %v2890
    %v2895 = vxor.u32 %v2894, 2147483648
    %v2896 = vmul.f32 %v2895, 1.442695
    %v2897 = vpow.pop %v2896
    %v2898 = vadd.f32 %v2897, 1.0
    %v2899 = vrcp.pop %v2898
    %v2900 = vmul.f32 1.0, %v2899
    %v2901 = vadd.f32 %v2892, %v2347
    %v2902 = vmul.f32 %v2900, %v2901
    %v2903 = vadd.f32 %v2184, %v2902
    %v2904 = vtanh.pop %v2903
    %v2905 = vsub.f32 1.0, %v2900
    %2907 = vrot.lane.b32.xlu0 %v2904, 64
    %v2908 = vpop.permute.xlu0 %2907
    %v2910 = vmul.f32 %v2905, %v2908
    %v2911 = vmul.f32 %v2900, %v2817
    %v2912 = vadd.f32 %v2910, %v2911
    %2914 = vrot.lane.b32.xlu0 %v2912, 64
    %v2915 = vpop.permute.xlu0 %2914
    %v2916 = vsel %vm402, %v2915, 0
    %2918 = vmatprep.subr.mxu0 %v2332
    %2919 = vmatpush1.msra.mxu0 %v2331
    %2920 = vmatprep.subr.mxu0 %v2334
    %2921 = vmatpush1.msra.mxu0 %v2333
    %2922 = vmatprep.subr.mxu0 %v2336
    %2923 = vmatpush1.msra.mxu0 %v2335
    %2924 = vmatprep.subr.mxu0 %v2338
    %2925 = vmatpush1.msra.mxu0 %v2337
    %2926 = vmatprep.subr.mxu0 %v2340
    %2927 = vmatpush1.msra.mxu0 %v2339
    %2928 = vmatprep.subr.mxu0 %v2342
    %2929 = vmatpush1.msra.mxu0 %v2341
    %2930 = vmatprep.subr.mxu0 %v2344
    %2931 = vmatpush1.msra.mxu0 %v2343
    %2932 = vmatprep.subr.mxu0 %v2346
    %2933 = vmatpush1.msra.mxu0 %v2345
    %2934 = vmatprep.subr.mxu0 0.0
    %2935 = vmatpush1.msra.mxu0 0.0
    %2936 = vmatprep.subr.mxu0 0.0
    %2937 = vmatpush1.msra.mxu0 0.0
    %2938 = vmatprep.subr.mxu0 0.0
    %2939 = vmatpush1.msra.mxu0 0.0
    %2940 = vmatprep.subr.mxu0 0.0
    %2941 = vmatpush1.msra.mxu0 0.0
    %2942 = vmatprep.subr.mxu0 0.0
    %2943 = vmatpush1.msra.mxu0 0.0
    %2944 = vmatprep.subr.mxu0 0.0
    %2945 = vmatpush1.msra.mxu0 0.0
    %2946 = vmatprep.subr.mxu0 0.0
    %2947 = vmatpush1.msra.mxu0 0.0
    %2948 = vmatprep.subr.mxu0 0.0
    %2949 = vmatpush1.msra.mxu0 0.0
    %2950 = vmatprep.subr.mxu0 0.0
    %2951 = vmatpush1.msra.mxu0 0.0
    %2952 = vmatprep.subr.mxu0 0.0
    %2953 = vmatpush1.msra.mxu0 0.0
    %2954 = vmatprep.subr.mxu0 0.0
    %2955 = vmatpush1.msra.mxu0 0.0
    %2956 = vmatprep.subr.mxu0 0.0
    %2957 = vmatpush1.msra.mxu0 0.0
    %2958 = vmatprep.subr.mxu0 0.0
    %2959 = vmatpush1.msra.mxu0 0.0
    %2960 = vmatprep.subr.mxu0 0.0
    %2961 = vmatpush1.msra.mxu0 0.0
    %2962 = vmatprep.subr.mxu0 0.0
    %2963 = vmatpush1.msra.mxu0 0.0
    %2964 = vmatprep.subr.mxu0 0.0
    %2965 = vmatpush1.msra.mxu0 0.0
    %2966 = vmatprep.subr.mxu0 0.0
    %2967 = vmatpush1.msra.mxu0 0.0
    %2968 = vmatprep.subr.mxu0 0.0
    %2969 = vmatpush1.msra.mxu0 0.0
    %2970 = vmatprep.subr.mxu0 0.0
    %2971 = vmatpush1.msra.mxu0 0.0
    %2972 = vmatprep.subr.mxu0 0.0
    %2973 = vmatpush1.msra.mxu0 0.0
    %2974 = vmatprep.subr.mxu0 0.0
    %2975 = vmatpush1.msra.mxu0 0.0
    %2976 = vmatprep.subr.mxu0 0.0
    %2977 = vmatpush1.msra.mxu0 0.0
    %2978 = vmatprep.subr.mxu0 0.0
    %2979 = vmatpush1.msra.mxu0 0.0
    %2980 = vmatprep.subr.mxu0 0.0
    %2981 = vmatpush1.msra.mxu0 0.0
    %2982 = vmatprep.mubr.f32.mxu0 0.0
    %2983 = vmatmul.mubr.f32.gmra.mrb[0].mxu0 %v2916
    %v2984 = vpop.f32.mrb[0].mxu0
    %v2985 = vadd.f32 0.0, %v2984
    %v2986 = vpop.f32.mrb[0].mxu0
    %v2987 = vadd.f32 0.0, %v2986
    %2988 = vdwg.mxu0
    %v2989 = vadd.f32 %v2256, %v2985
    %v2990 = vxor.u32 %v2989, 2147483648
    %v2991 = vmul.f32 %v2990, 1.442695
    %v2992 = vpow.pop %v2991
    %v2993 = vadd.f32 %v2992, 1.0
    %v2994 = vrcp.pop %v2993
    %v2995 = vmul.f32 1.0, %v2994
    %v2996 = vadd.f32 %v2987, %v2347
    %v2997 = vmul.f32 %v2995, %v2996
    %v2998 = vadd.f32 %v2257, %v2997
    %v2999 = vtanh.pop %v2998
    %v3000 = vsub.f32 1.0, %v2995
    %3002 = vrot.lane.b32.xlu0 %v2999, 64
    %v3003 = vpop.permute.xlu0 %3002
    %v3005 = vmul.f32 %v3000, %v3003
    %v3006 = vmul.f32 %v2995, %v2912
    %v3007 = vadd.f32 %v3005, %v3006
    %3009 = vrot.lane.b32.xlu0 %v3007, 64
    %v3010 = vpop.permute.xlu0 %3009
    %v3011 = vsel %vm402, %v3010, 0
    %3013 = vmatprep.subr.mxu0 %v2332
    %3014 = vmatpush1.msra.mxu0 %v2331
    %3015 = vmatprep.subr.mxu0 %v2334
    %3016 = vmatpush1.msra.mxu0 %v2333
    %3017 = vmatprep.subr.mxu0 %v2336
    %3018 = vmatpush1.msra.mxu0 %v2335
    %3019 = vmatprep.subr.mxu0 %v2338
    %3020 = vmatpush1.msra.mxu0 %v2337
    %3021 = vmatprep.subr.mxu0 %v2340
    %3022 = vmatpush1.msra.mxu0 %v2339
    %3023 = vmatprep.subr.mxu0 %v2342
    %3024 = vmatpush1.msra.mxu0 %v2341
    %3025 = vmatprep.subr.mxu0 %v2344
    %3026 = vmatpush1.msra.mxu0 %v2343
    %3027 = vmatprep.subr.mxu0 %v2346
    %3028 = vmatpush1.msra.mxu0 %v2345
    %3029 = vmatprep.subr.mxu0 0.0
    %3030 = vmatpush1.msra.mxu0 0.0
    %3031 = vmatprep.subr.mxu0 0.0
    %3032 = vmatpush1.msra.mxu0 0.0
    %3033 = vmatprep.subr.mxu0 0.0
    %3034 = vmatpush1.msra.mxu0 0.0
    %3035 = vmatprep.subr.mxu0 0.0
    %3036 = vmatpush1.msra.mxu0 0.0
    %3037 = vmatprep.subr.mxu0 0.0
    %3038 = vmatpush1.msra.mxu0 0.0
    %3039 = vmatprep.subr.mxu0 0.0
    %3040 = vmatpush1.msra.mxu0 0.0
    %3041 = vmatprep.subr.mxu0 0.0
    %3042 = vmatpush1.msra.mxu0 0.0
    %3043 = vmatprep.subr.mxu0 0.0
    %3044 = vmatpush1.msra.mxu0 0.0
    %3045 = vmatprep.subr.mxu0 0.0
    %3046 = vmatpush1.msra.mxu0 0.0
    %3047 = vmatprep.subr.mxu0 0.0
    %3048 = vmatpush1.msra.mxu0 0.0
    %3049 = vmatprep.subr.mxu0 0.0
    %3050 = vmatpush1.msra.mxu0 0.0
    %3051 = vmatprep.subr.mxu0 0.0
    %3052 = vmatpush1.msra.mxu0 0.0
    %3053 = vmatprep.subr.mxu0 0.0
    %3054 = vmatpush1.msra.mxu0 0.0
    %3055 = vmatprep.subr.mxu0 0.0
    %3056 = vmatpush1.msra.mxu0 0.0
    %3057 = vmatprep.subr.mxu0 0.0
    %3058 = vmatpush1.msra.mxu0 0.0
    %3059 = vmatprep.subr.mxu0 0.0
    %3060 = vmatpush1.msra.mxu0 0.0
    %3061 = vmatprep.subr.mxu0 0.0
    %3062 = vmatpush1.msra.mxu0 0.0
    %3063 = vmatprep.subr.mxu0 0.0
    %3064 = vmatpush1.msra.mxu0 0.0
    %3065 = vmatprep.subr.mxu0 0.0
    %3066 = vmatpush1.msra.mxu0 0.0
    %3067 = vmatprep.subr.mxu0 0.0
    %3068 = vmatpush1.msra.mxu0 0.0
    %3069 = vmatprep.subr.mxu0 0.0
    %3070 = vmatpush1.msra.mxu0 0.0
    %3071 = vmatprep.subr.mxu0 0.0
    %3072 = vmatpush1.msra.mxu0 0.0
    %3073 = vmatprep.subr.mxu0 0.0
    %3074 = vmatpush1.msra.mxu0 0.0
    %3075 = vmatprep.subr.mxu0 0.0
    %3076 = vmatpush1.msra.mxu0 0.0
    %3077 = vmatprep.mubr.f32.mxu0 0.0
    %3078 = vmatmul.mubr.f32.gmra.mrb[0].mxu0 %v3011
    %v3079 = vpop.f32.mrb[0].mxu0
    %v3080 = vadd.f32 0.0, %v3079
    %v3081 = vpop.f32.mrb[0].mxu0
    %v3082 = vadd.f32 0.0, %v3081
    %3083 = vdwg.mxu0
    %v3084 = vadd.f32 %v2329, %v3080
    %v3085 = vxor.u32 %v3084, 2147483648
    %v3086 = vmul.f32 %v3085, 1.442695
    %v3087 = vpow.pop %v3086
    %v3088 = vadd.f32 %v3087, 1.0
    %v3089 = vrcp.pop %v3088
    %v3090 = vmul.f32 1.0, %v3089
    %v3091 = vadd.f32 %v3082, %v2347
    %v3092 = vmul.f32 %v3090, %v3091
    %v3093 = vadd.f32 %v2330, %v3092
    %v3094 = vtanh.pop %v3093
    %v3095 = vsub.f32 1.0, %v3090
    %3097 = vrot.lane.b32.xlu0 %v3094, 64
    %v3098 = vpop.permute.xlu0 %3097
    %v3100 = vmul.f32 %v3095, %v3098
    %v3101 = vmul.f32 %v3090, %v3007
    %v3102 = vadd.f32 %v3100, %v3101
    %v3104 = vsel %vm402, %v1660, %v3102
    %v3105 = vld [vmem:[%s1 + $0x280] sm:$0xff]
    %v3106 = vld [vmem:[%s1 + $0x290] sm:$0xff]
    %v3107 = vld [vmem:[%s1 + $0x2a0] sm:$0xff]
    %v3108 = vld [vmem:[%s1 + $0x2b0] sm:$0xff]
    %v3109 = vld [vmem:[%s1 + $0x2c0] sm:$0xff]
    %v3110 = vld [vmem:[%s1 + $0x2d0] sm:$0xff]
    %v3111 = vld [vmem:[%s1 + $0x2e0] sm:$0xff]
    %v3112 = vld [vmem:[%s1 + $0x2f0] sm:$0xff]
    %v3113 = vld [vmem:[%s1 + $0x300] sm:$0xff]
    %v3114 = vld [vmem:[%s1 + $0x310] sm:$0xff]
    %v3115 = vld [vmem:[%s1 + $0x320] sm:$0xff]
    %v3116 = vld [vmem:[%s1 + $0x330] sm:$0xff]
    %v3117 = vld [vmem:[%s1 + $0x340] sm:$0xff]
    %v3118 = vld [vmem:[%s1 + $0x350] sm:$0xff]
    %v3119 = vld [vmem:[%s1 + $0x360] sm:$0xff]
    %v3120 = vld [vmem:[%s1 + $0x370] sm:$0xff]
    %v3121 = vld [vmem:[%s1 + $0x3c3] ss:$0 sm:$0xff]
    %3122 = vmatprep.subr.mxu0 0.0
    %3123 = vmatpush1.msra.mxu0 %v3105
    %3124 = vmatprep.subr.mxu0 0.0
    %3125 = vmatpush1.msra.mxu0 %v3106
    %3126 = vmatprep.subr.mxu0 0.0
    %3127 = vmatpush1.msra.mxu0 %v3107
    %3128 = vmatprep.subr.mxu0 0.0
    %3129 = vmatpush1.msra.mxu0 %v3108
    %3130 = vmatprep.subr.mxu0 0.0
    %3131 = vmatpush1.msra.mxu0 %v3109
    %3132 = vmatprep.subr.mxu0 0.0
    %3133 = vmatpush1.msra.mxu0 %v3110
    %3134 = vmatprep.subr.mxu0 0.0
    %3135 = vmatpush1.msra.mxu0 %v3111
    %3136 = vmatprep.subr.mxu0 0.0
    %3137 = vmatpush1.msra.mxu0 %v3112
    %3138 = vmatprep.subr.mxu0 0.0
    %3139 = vmatpush1.msra.mxu0 %v3113
    %3140 = vmatprep.subr.mxu0 0.0
    %3141 = vmatpush1.msra.mxu0 %v3114
    %3142 = vmatprep.subr.mxu0 0.0
    %3143 = vmatpush1.msra.mxu0 %v3115
    %3144 = vmatprep.subr.mxu0 0.0
    %3145 = vmatpush1.msra.mxu0 %v3116
    %3146 = vmatprep.subr.mxu0 0.0
    %3147 = vmatpush1.msra.mxu0 %v3117
    %3148 = vmatprep.subr.mxu0 0.0
    %3149 = vmatpush1.msra.mxu0 %v3118
    %3150 = vmatprep.subr.mxu0 0.0
    %3151 = vmatpush1.msra.mxu0 %v3119
    %3152 = vmatprep.subr.mxu0 0.0
    %3153 = vmatpush1.msra.mxu0 %v3120
    %3154 = vmatprep.subr.mxu0 0.0
    %3155 = vmatpush1.msra.mxu0 0.0
    %3156 = vmatprep.subr.mxu0 0.0
    %3157 = vmatpush1.msra.mxu0 0.0
    %3158 = vmatprep.subr.mxu0 0.0
    %3159 = vmatpush1.msra.mxu0 0.0
    %3160 = vmatprep.subr.mxu0 0.0
    %3161 = vmatpush1.msra.mxu0 0.0
    %3162 = vmatprep.subr.mxu0 0.0
    %3163 = vmatpush1.msra.mxu0 0.0
    %3164 = vmatprep.subr.mxu0 0.0
    %3165 = vmatpush1.msra.mxu0 0.0
    %3166 = vmatprep.subr.mxu0 0.0
    %3167 = vmatpush1.msra.mxu0 0.0
    %3168 = vmatprep.subr.mxu0 0.0
    %3169 = vmatpush1.msra.mxu0 0.0
    %3170 = vmatprep.subr.mxu0 0.0
    %3171 = vmatpush1.msra.mxu0 0.0
    %3172 = vmatprep.subr.mxu0 0.0
    %3173 = vmatpush1.msra.mxu0 0.0
    %3174 = vmatprep.subr.mxu0 0.0
    %3175 = vmatpush1.msra.mxu0 0.0
    %3176 = vmatprep.subr.mxu0 0.0
    %3177 = vmatpush1.msra.mxu0 0.0
    %3178 = vmatprep.subr.mxu0 0.0
    %3179 = vmatpush1.msra.mxu0 0.0
    %3180 = vmatprep.subr.mxu0 0.0
    %3181 = vmatpush1.msra.mxu0 0.0
    %3182 = vmatprep.subr.mxu0 0.0
    %3183 = vmatpush1.msra.mxu0 0.0
    %3184 = vmatprep.subr.mxu0 0.0
    %3185 = vmatpush1.msra.mxu0 0.0
    %3186 = vmatprep.mubr.f32.mxu0 0.0
    %3187 = vmatmul.mubr.f32.gmra.mrb[0].mxu0 %v3104
    %v3188 = vpop.f32.mrb[0].mxu0
    %v3189 = vadd.f32 %v3121, %v3188
    %v3190 = vpop.f32.mrb[0].mxu0
    %3191 = vdwg.mxu0
    %v3192 = vtanh.pop %v3189
    %v3193 = vld [vmem:[%s1 + $0x380] sm:$0xff]
    %v3194 = vld [vmem:[%s1 + $0x390] sm:$0xff]
    %v3195 = vld [vmem:[%s1 + $0x3a0] sm:$0xff]
    %v3196 = vld [vmem:[%s1 + $0x3b0] sm:$0xff]
    %v3197 = vld [vmem:[%s1 + $0x3c4] ss:$0 sm:$0xff]
    %v3199 = vsel %vm78, %v3192, 0
    %3201 = vmatprep.subr.mxu0 0.0
    %3202 = vmatpush1.msra.mxu0 %v3193
    %3203 = vmatprep.subr.mxu0 0.0
    %3204 = vmatpush1.msra.mxu0 %v3194
    %3205 = vmatprep.subr.mxu0 0.0
    %3206 = vmatpush1.msra.mxu0 %v3195
    %3207 = vmatprep.subr.mxu0 0.0
    %3208 = vmatpush1.msra.mxu0 %v3196
    %3209 = vmatprep.subr.mxu0 0.0
    %3210 = vmatpush1.msra.mxu0 0.0
    %3211 = vmatprep.subr.mxu0 0.0
    %3212 = vmatpush1.msra.mxu0 0.0
    %3213 = vmatprep.subr.mxu0 0.0
    %3214 = vmatpush1.msra.mxu0 0.0
    %3215 = vmatprep.subr.mxu0 0.0
    %3216 = vmatpush1.msra.mxu0 0.0
    %3217 = vmatprep.subr.mxu0 0.0
    %3218 = vmatpush1.msra.mxu0 0.0
    %3219 = vmatprep.subr.mxu0 0.0
    %3220 = vmatpush1.msra.mxu0 0.0
    %3221 = vmatprep.subr.mxu0 0.0
    %3222 = vmatpush1.msra.mxu0 0.0
    %3223 = vmatprep.subr.mxu0 0.0
    %3224 = vmatpush1.msra.mxu0 0.0
    %3225 = vmatprep.subr.mxu0 0.0
    %3226 = vmatpush1.msra.mxu0 0.0
    %3227 = vmatprep.subr.mxu0 0.0
    %3228 = vmatpush1.msra.mxu0 0.0
    %3229 = vmatprep.subr.mxu0 0.0
    %3230 = vmatpush1.msra.mxu0 0.0
    %3231 = vmatprep.subr.mxu0 0.0
    %3232 = vmatpush1.msra.mxu0 0.0
    %3233 = vmatprep.subr.mxu0 0.0
    %3234 = vmatpush1.msra.mxu0 0.0
    %3235 = vmatprep.subr.mxu0 0.0
    %3236 = vmatpush1.msra.mxu0 0.0
    %3237 = vmatprep.subr.mxu0 0.0
    %3238 = vmatpush1.msra.mxu0 0.0
    %3239 = vmatprep.subr.mxu0 0.0
    %3240 = vmatpush1.msra.mxu0 0.0
    %3241 = vmatprep.subr.mxu0 0.0
    %3242 = vmatpush1.msra.mxu0 0.0
    %3243 = vmatprep.subr.mxu0 0.0
    %3244 = vmatpush1.msra.mxu0 0.0
    %3245 = vmatprep.subr.mxu0 0.0
    %3246 = vmatpush1.msra.mxu0 0.0
    %3247 = vmatprep.subr.mxu0 0.0
    %3248 = vmatpush1.msra.mxu0 0.0
    %3249 = vmatprep.subr.mxu0 0.0
    %3250 = vmatpush1.msra.mxu0 0.0
    %3251 = vmatprep.subr.mxu0 0.0
    %3252 = vmatpush1.msra.mxu0 0.0
    %3253 = vmatprep.subr.mxu0 0.0
    %3254 = vmatpush1.msra.mxu0 0.0
    %3255 = vmatprep.subr.mxu0 0.0
    %3256 = vmatpush1.msra.mxu0 0.0
    %3257 = vmatprep.subr.mxu0 0.0
    %3258 = vmatpush1.msra.mxu0 0.0
    %3259 = vmatprep.subr.mxu0 0.0
    %3260 = vmatpush1.msra.mxu0 0.0
    %3261 = vmatprep.subr.mxu0 0.0
    %3262 = vmatpush1.msra.mxu0 0.0
    %3263 = vmatprep.subr.mxu0 0.0
    %3264 = vmatpush1.msra.mxu0 0.0
    %3265 = vmatprep.mubr.f32.mxu0 0.0
    %3266 = vmatmul.mubr.f32.gmra.mrb[0].mxu0 %v3199
    %v3267 = vpop.f32.mrb[0].mxu0
    %v3268 = vadd.f32 %v3197, %v3267
    %v3269 = vpop.f32.mrb[0].mxu0
    %3270 = vdwg.mxu0
    %3272 = vrot.lane.b32.xlu0 %v3268, 1
    %v3273 = vpop.permute.xlu0 %3272
    %v3275 = vsub.f32 %v3268, %v3273
    %v3276 = vxor.u32 %v3275, 2147483648
    %v3277 = vmul.f32 %v3276, 1.442695
    %v3278 = vpow.pop %v3277
    %v3279 = vadd.f32 %v3278, 1.0
    %v3280 = vrcp.pop %v3279
    %v3281 = vmul.f32 1.0, %v3280
    %vm3282 = vcmp.eq.s32.totalorder %v21, 0
    %v3283 = vsub.f32 1.0, %v3281
    %3285 = vset.pattern.permute.xlu0 1
    %3286 = vperm.xlu0 %3285, %v3283
    %v3287 = vpop.permute.xlu0 %3286
    %3290 = vset.pattern.permute.xlu0 1
    %3291 = vperm.xlu0 %3290, %v3281
    %v3292 = vpop.permute.xlu0 %3291
    %v3294 = vsel %vm3282, %v3287, %v3292
    %vm3295 = vcmask 9216
    %3296 = vst.msk [vmem:[#allocation2] sm:$0x3] %vm3295, %v3294
    // Predicated region
    $region10: #{discriminator_forward.1} parent=1 // pred_check
      _
    $region11: #{discriminator_forward.1} parent=1 // pred_check_branch
      %3298 = sbr.rel (0) target = $region13
    $region12: #{discriminator_forward.1} parent=1 // pred_region
      %s3300 = ssub.s32 32, 32
      %3301 = vsyncadd [#allocation3], %s3300
      %s3303 = sshll.u32 [#allocation2], 4
      %s3304 = int_to_ptr.vmem [resolvable:$true] %s3303
      %3306 = dma.vmem_to_hbm [thread:$0]  %s3304, 32, %s2, [#allocation3]
    $region13: #{discriminator_forward.1} parent=1 // pred_fallthru
      _
    // Predicated region
    $region14: #{discriminator_forward.1} parent=1 // pred_check
      _
    $region15: #{discriminator_forward.1} parent=1 // pred_check_branch
      %3308 = sbr.rel (0) target = $region17
    $region16: #{discriminator_forward.1} parent=1 // pred_region
      %3309 = dma.done [#allocation3], 32
    $region17: #{discriminator_forward.1} parent=1 // pred_fallthru
      _
    %3310 = vsyncpa [#allocation3], 1

</llo_original>
